<compile_context>
chip_gen: v7x
topology: tpu7x:2x2x1
jax: 0.10.0
libtpu: 0.0.40
codegen_flags: <defaults>
</compile_context>

<pallas_src>
import functools

import jax
import jax.numpy as jnp
from jax.experimental import pallas as pl
from jax.experimental.pallas import tpu as pltpu


_VMEM_BUDGET = 32 * 1024 * 1024   # single budget: block_n cap AND vmem_limit_bytes
_STRIDE0_CACHE = {}               # (C_in, C_out, H, W) -> bool (stride-0 loads usable)


def _num_tensorcores():
    """Best-effort TensorCores-per-chip: 2 on v7x/v4/v5p (megacore), else 1."""
    try:
        kind = (jax.devices()[0].device_kind or "").lower()
    except Exception:
        return 1
    if any(tag in kind for tag in ("v7", "7x", "v4", "v5p")):
        return 2
    return 1


def _zero_conv2d_kernel(w_ref, b_ref, x_ref, o_ref, pad_ref, wtab_ref, *,
                        C_in, C_out, H, W, nb, use_stride0):
    """One grid step = a block of `nb` images.

    w_ref    : VMEM (C_out, K)           weights pre-scaled by exp(3*scale),
                                         column k = (dy*3+dx)*C_in + ci.
    b_ref    : VMEM (C_out, 1)           bias pre-scaled by exp(3*scale).
    x_ref    : VMEM (nb, C_in, H*W)      raw (unpadded) images, rows flattened.
    o_ref    : VMEM (nb, C_out, H*W)     dense output, rows flattened.
    pad_ref  : VMEM (C_in+C_out, Wp)     scratch: 1.0-padded flattened planes,
                                         Wp=(H+3)*(W+2); spare rows only exist so
                                         stride-0 width-C_out reads stay in bounds.
    wtab_ref : VMEM (K, C_out, H*(W+2))  scratch: per-tap weight columns
                                         pre-broadcast to full lane width.
    """
    W2 = W + 2
    HW2 = H * W2
    K = 9 * C_in

    # ---- once per grid step (amortised over the nb images of the block) ----
    # Constant 1.0 pad value: border / spare rows are never overwritten, so one
    # fill serves every image in the block.
    pad_ref[...] = jnp.ones(pad_ref.shape, jnp.float32)
    # Hoisted broadcasts (JAX does not CSE broadcast_in_dim, so doing these in
    # the image loop would redo them per image). The table lives in VMEM, not in
    # vregs (36 pinned (C_out,1) columns would eat >half the vreg file); it is
    # filled unconditionally -- NOT under pl.when(program_id==0) -- so it is
    # valid on every TensorCore when the batch grid is sharded across cores.
    wmat = w_ref[...]                                       # (C_out, K), one tile
    for k in range(K):
        wtab_ref[k] = jnp.broadcast_to(wmat[:, k:k + 1], (C_out, HW2))
    bias_b = jnp.broadcast_to(b_ref[...], (C_out, HW2))

    def one_image(bi):
        # Build the 1.0-padded, flattened plane: original row h lands at flat
        # offset (h+1)*W2 + 1 (padding folded in-kernel; the wrapper never
        # materialises a padded copy of x in HBM).
        xrow = x_ref[bi]                                    # (C_in, H*W)
        for h in range(H):
            dst = (h + 1) * W2 + 1
            pad_ref[0:C_in, dst:dst + W] = xrow[:, h * W:(h + 1) * W]

        # 3x3 conv in the "wide" coordinate system: each tap is ONE contiguous
        # lane slice of length H*(W+2) of the padded plane.
        # NOTE: at C_in=4 / C_out=8 the VPU outer-product path is right for
        # v5e/v6e/v7x; switch to an im2col MXU matmul only at >=~16 channels.
        acc = bias_b
        tap = 0
        for dy in range(3):
            for dx in range(3):
                off = dy * W2 + dx
                if use_stride0:
                    # Shift + row->C_out sublane broadcast fused into the load
                    # (sublane stride 0): vld has slack, XLU stays off the path.
                    for ci in range(C_in):
                        row_b = pad_ref[pl.ds(ci, C_out, stride=0),
                                        pl.ds(off, HW2)]            # (C_out, HW2)
                        acc = acc + wtab_ref[tap * C_in + ci] * row_b
                else:
                    # Fallback: one shifted slab per tap shared by all C_in
                    # (9 lane shifts per image instead of 36); sublane broadcast
                    # happens in the multiply.
                    slab = pad_ref[0:C_in, off:off + HW2]           # (C_in, HW2)
                    for ci in range(C_in):
                        acc = acc + wtab_ref[tap * C_in + ci] * slab[ci:ci + 1, :]
                tap += 1

        # Compact the wide ((W+2)-strided) rows to dense W and store a
        # lane-dense (C_out, H*W) slab: no wrapper-side crop pass over HBM.
        for h in range(H):
            o_ref[bi, :, h * W:(h + 1) * W] = (
                acc[:, h * W2:h * W2 + W].astype(o_ref.dtype))

    if nb <= 8:
        for bi in range(nb):                 # small blocks: static unroll
            one_image(bi)
    else:
        @pl.loop(0, nb)                      # large blocks: bounded live ranges
        def _(bi):
            one_image(bi)


@functools.partial(jax.jit, static_argnames=("H", "W", "block_n", "use_stride0"))
def _zero_conv2d_pallas(x_flat, w_mat, b_col, *, H, W, block_n, use_stride0):
    N, C_in, HW = x_flat.shape
    C_out, K = w_mat.shape
    W2 = W + 2
    HW2 = H * W2
    Wp = (H + 3) * W2          # one spare all-ones row keeps the widest tap slice in bounds
    f32 = jnp.float32

    kernel = functools.partial(_zero_conv2d_kernel, C_in=C_in, C_out=C_out,
                               H=H, W=W, nb=block_n, use_stride0=use_stride0)
    out_flat = pl.pallas_call(
        kernel,
        out_shape=jax.ShapeDtypeStruct((N, C_out, HW), f32),
        grid=(N // block_n,),
        in_specs=[
            pl.BlockSpec((C_out, K), lambda n: (0, 0)),               # weights (1 tile)
            pl.BlockSpec((C_out, 1), lambda n: (0, 0)),               # bias
            pl.BlockSpec((block_n, C_in, HW), lambda n: (n, 0, 0)),   # raw images
        ],
        out_specs=pl.BlockSpec((block_n, C_out, HW), lambda n: (n, 0, 0)),
        scratch_shapes=[
            pltpu.VMEM((C_in + C_out, Wp), f32),    # padded-plane scratch
            pltpu.VMEM((K, C_out, HW2), f32),       # hoisted weight-broadcast table
        ],
        compiler_params=pltpu.CompilerParams(
            dimension_semantics=("parallel",),
            vmem_limit_bytes=_VMEM_BUDGET),
    )(w_mat, b_col, x_flat)
    return out_flat.reshape(N, C_out, H, W)          # free reshape (no crop pass)


def _resolve_stride0(C_in, C_out, H, W):
    """One-time probe: the stride-0 sublane-broadcast load path must both lower
    and agree numerically with the safe shared-slab path; otherwise fall back."""
    key = (C_in, C_out, H, W)
    if key in _STRIDE0_CACHE:
        return _STRIDE0_CACHE[key]
    kx, kw = jax.random.split(jax.random.PRNGKey(42))
    xp = jax.random.normal(kx, (1, C_in, H * W), dtype=jnp.float32)
    wp = jax.random.normal(kw, (C_out, 9 * C_in), dtype=jnp.float32)
    bp = jnp.linspace(-1.0, 1.0, C_out, dtype=jnp.float32).reshape(C_out, 1)
    try:
        fast = jax.block_until_ready(_zero_conv2d_pallas(
            xp, wp, bp, H=H, W=W, block_n=1, use_stride0=True))
        safe = _zero_conv2d_pallas(
            xp, wp, bp, H=H, W=W, block_n=1, use_stride0=False)
        ok = bool(jnp.max(jnp.abs(fast - safe)) <= 1e-4)
    except Exception:
        ok = False
    _STRIDE0_CACHE[key] = ok
    return ok


def zero_conv2d_forward(x, weight, bias, scale, *, block_n=None):
    """x: (N, C_in, H, W); weight: (C_out, C_in, 3, 3); bias: (C_out,);
    scale: (1, C_out, 1, 1). Returns (N, C_out, H, W) float32."""
    N, C_in, H, W = x.shape
    C_out = weight.shape[0]
    K = 9 * C_in
    HW, HW2 = H * W, H * (W + 2)
    Wp = (H + 3) * (W + 2)
    f32 = jnp.float32

    # Fold exp(3*scale) into the conv weight and bias (exact: the per-output-
    # channel scale commutes with the convolution). Lane-dense 2-D weight
    # operand (C_out, K): column k = (dy*3+dx)*C_in + ci.
    m = jnp.exp(scale.reshape(C_out).astype(f32) * 3.0)
    w_mat = (weight.astype(f32) * m[:, None, None, None]
             ).transpose(0, 2, 3, 1).reshape(C_out, K)
    b_col = (bias.astype(f32) * m).reshape(C_out, 1)

    # Free relayout only (padding is built in-kernel; output needs no crop).
    x_flat = x.astype(f32).reshape(N, C_in, HW)

    # Block size: one grid step per TensorCore (1 on v5e/v6e, an even >=2 on
    # multi-TC chips), capped by ONE VMEM budget that also sets
    # vmem_limit_bytes.  Double-buffered in+out blocks ~= 24 KB / image here.
    per_image_bytes = 2 * 4 * (C_in * HW + C_out * HW)
    step_const_bytes = 4 * (K * C_out * HW2 + (C_in + C_out) * Wp) + (1 << 20)
    if block_n is None:
        cap = max(1, (_VMEM_BUDGET - step_const_bytes) // per_image_bytes)
        block_n = min(pl.cdiv(N, _num_tensorcores()), cap)
    block_n = max(1, min(int(block_n), N))
    while N % block_n:
        block_n -= 1

    use_stride0 = _resolve_stride0(C_in, C_out, H, W)
    return _zero_conv2d_pallas(x_flat, w_mat, b_col, H=H, W=W,
                               block_n=block_n, use_stride0=use_stride0)


def zero_conv2d_reference(x, weight, bias, scale):
    """Pure-JAX reference matching the PyTorch module."""
    x_pad = jnp.pad(x, ((0, 0), (0, 0), (1, 1), (1, 1)), constant_values=1.0)
    out = jax.lax.conv_general_dilated(
        x_pad, weight, window_strides=(1, 1), padding="VALID",
        dimension_numbers=("NCHW", "OIHW", "NCHW"),
        precision=jax.lax.Precision.HIGHEST)
    out = out + bias.reshape(1, -1, 1, 1)
    return out * jnp.exp(scale * 3.0)


if __name__ == "__main__":
    N, C_in, C_out, H, W = 2, 4, 8, 16, 16
    key = jax.random.PRNGKey(0)
    kx, kw, kb, ks = jax.random.split(key, 4)

    x = jax.random.normal(kx, (N, C_in, H, W), dtype=jnp.float32)

    # Parameters exactly as the module's __init__ creates them (zero-initialized).
    weight0 = jnp.zeros((C_out, C_in, 3, 3), dtype=jnp.float32)
    bias0 = jnp.zeros((C_out,), dtype=jnp.float32)
    scale0 = jnp.zeros((1, C_out, 1, 1), dtype=jnp.float32)

    out0 = jax.block_until_ready(zero_conv2d_forward(x, weight0, bias0, scale0))
    ref0 = zero_conv2d_reference(x, weight0, bias0, scale0)
    assert out0.shape == (N, C_out, H, W)
    assert float(jnp.max(jnp.abs(out0 - ref0))) < 1e-5

    # Nonzero deterministic params so the pad/conv/scale paths are exercised
    # (the module's zero init makes the output identically 0).
    weight1 = 0.1 * jax.random.normal(kw, (C_out, C_in, 3, 3), dtype=jnp.float32)
    bias1 = 0.1 * jax.random.normal(kb, (C_out,), dtype=jnp.float32)
    scale1 = 0.1 * jax.random.normal(ks, (1, C_out, 1, 1), dtype=jnp.float32)

    out1 = jax.block_until_ready(zero_conv2d_forward(x, weight1, bias1, scale1))
    ref1 = zero_conv2d_reference(x, weight1, bias1, scale1)
    assert float(jnp.max(jnp.abs(out1 - ref1))) < 1e-4

    print("KERNEL_OK")
</pallas_src>

<mosaic_0001>
module attributes {stable_mosaic.version = 11 : i64} {
  func.func @_zero_conv2d_kernel(%arg0: i32, %arg1: memref<8x36xf32, #tpu.memory_space<vmem>>, %arg2: memref<8x1xf32, #tpu.memory_space<vmem>>, %arg3: memref<1x4x256xf32, #tpu.memory_space<vmem>>, %arg4: memref<1x8x256xf32, #tpu.memory_space<vmem>>, %arg5: memref<12x342xf32, #tpu.memory_space<vmem>>, %arg6: memref<36x8x288xf32, #tpu.memory_space<vmem>>) attributes {dimension_semantics = [#tpu.dimension_semantics<parallel>], iteration_bounds = array<i64: 1>, scalar_prefetch = 0 : i64, scratch_operands = 2 : i64, tpu.core_type = #tpu.core_type<tc>, window_params = [{pipeline_mode = #tpu.pipeline_mode<synchronous>, transform_indices = @transform_0, window_bounds = array<i64: 8, 36>}, {pipeline_mode = #tpu.pipeline_mode<synchronous>, transform_indices = @transform_1, window_bounds = array<i64: 8, 1>}, {transform_indices = @transform_2, window_bounds = array<i64: 1, 4, 256>}, {transform_indices = @transform_3, window_bounds = array<i64: 1, 8, 256>}]} {
    %cst = arith.constant 1.000000e+00 : f32
    %0 = vector.broadcast %cst : f32 to vector<12x342xf32>
    %c0 = arith.constant 0 : index
    %c0_0 = arith.constant 0 : index
    %1 = vector.load %arg5[%c0, %c0_0] : memref<12x342xf32, #tpu.memory_space<vmem>>, vector<12x342xf32>
    tpu.vector_store %arg5[%c0, %c0_0], %0 {strides = array<i32>} : memref<12x342xf32, #tpu.memory_space<vmem>>, vector<12x342xf32>,
    %c0_1 = arith.constant 0 : index
    %c0_2 = arith.constant 0 : index
    %2 = vector.load %arg1[%c0_1, %c0_2] : memref<8x36xf32, #tpu.memory_space<vmem>>, vector<8x36xf32>
    %3 = vector.extract_strided_slice %2 {offsets = [0, 0], sizes = [8, 1], strides = [1, 1]} : vector<8x36xf32> to vector<8x1xf32>
    %4 = vector.shape_cast %3 : vector<8x1xf32> to vector<8x1xf32>
    %5 = vector.broadcast %4 : vector<8x1xf32> to vector<8x288xf32>
    %c0_3 = arith.constant 0 : index
    %c0_4 = arith.constant 0 : index
    %c0_5 = arith.constant 0 : index
    %6 = vector.load %arg6[%c0_3, %c0_4, %c0_5] : memref<36x8x288xf32, #tpu.memory_space<vmem>>, vector<1x8x288xf32>
    %7 = vector.shape_cast %6 : vector<1x8x288xf32> to vector<8x288xf32>
    %8 = vector.shape_cast %5 : vector<8x288xf32> to vector<1x8x288xf32>
    tpu.vector_store %arg6[%c0_3, %c0_4, %c0_5], %8 {strides = array<i32>} : memref<36x8x288xf32, #tpu.memory_space<vmem>>, vector<1x8x288xf32>,
    %9 = vector.extract_strided_slice %2 {offsets = [0, 1], sizes = [8, 1], strides = [1, 1]} : vector<8x36xf32> to vector<8x1xf32>
    %10 = vector.shape_cast %9 : vector<8x1xf32> to vector<8x1xf32>
    %11 = vector.broadcast %10 : vector<8x1xf32> to vector<8x288xf32>
    %c1 = arith.constant 1 : index
    %c0_6 = arith.constant 0 : index
    %c0_7 = arith.constant 0 : index
    %12 = vector.load %arg6[%c1, %c0_6, %c0_7] : memref<36x8x288xf32, #tpu.memory_space<vmem>>, vector<1x8x288xf32>
    %13 = vector.shape_cast %12 : vector<1x8x288xf32> to vector<8x288xf32>
    %14 = vector.shape_cast %11 : vector<8x288xf32> to vector<1x8x288xf32>
    tpu.vector_store %arg6[%c1, %c0_6, %c0_7], %14 {strides = array<i32>} : memref<36x8x288xf32, #tpu.memory_space<vmem>>, vector<1x8x288xf32>,
    %15 = vector.extract_strided_slice %2 {offsets = [0, 2], sizes = [8, 1], strides = [1, 1]} : vector<8x36xf32> to vector<8x1xf32>
    %16 = vector.shape_cast %15 : vector<8x1xf32> to vector<8x1xf32>
    %17 = vector.broadcast %16 : vector<8x1xf32> to vector<8x288xf32>
    %c2 = arith.constant 2 : index
    %c0_8 = arith.constant 0 : index
    %c0_9 = arith.constant 0 : index
    %18 = vector.load %arg6[%c2, %c0_8, %c0_9] : memref<36x8x288xf32, #tpu.memory_space<vmem>>, vector<1x8x288xf32>
    %19 = vector.shape_cast %18 : vector<1x8x288xf32> to vector<8x288xf32>
    %20 = vector.shape_cast %17 : vector<8x288xf32> to vector<1x8x288xf32>
    tpu.vector_store %arg6[%c2, %c0_8, %c0_9], %20 {strides = array<i32>} : memref<36x8x288xf32, #tpu.memory_space<vmem>>, vector<1x8x288xf32>,
    %21 = vector.extract_strided_slice %2 {offsets = [0, 3], sizes = [8, 1], strides = [1, 1]} : vector<8x36xf32> to vector<8x1xf32>
    %22 = vector.shape_cast %21 : vector<8x1xf32> to vector<8x1xf32>
    %23 = vector.broadcast %22 : vector<8x1xf32> to vector<8x288xf32>
    %c3 = arith.constant 3 : index
    %c0_10 = arith.constant 0 : index
    %c0_11 = arith.constant 0 : index
    %24 = vector.load %arg6[%c3, %c0_10, %c0_11] : memref<36x8x288xf32, #tpu.memory_space<vmem>>, vector<1x8x288xf32>
    %25 = vector.shape_cast %24 : vector<1x8x288xf32> to vector<8x288xf32>
    %26 = vector.shape_cast %23 : vector<8x288xf32> to vector<1x8x288xf32>
    tpu.vector_store %arg6[%c3, %c0_10, %c0_11], %26 {strides = array<i32>} : memref<36x8x288xf32, #tpu.memory_space<vmem>>, vector<1x8x288xf32>,
    %27 = vector.extract_strided_slice %2 {offsets = [0, 4], sizes = [8, 1], strides = [1, 1]} : vector<8x36xf32> to vector<8x1xf32>
    %28 = vector.shape_cast %27 : vector<8x1xf32> to vector<8x1xf32>
    %29 = vector.broadcast %28 : vector<8x1xf32> to vector<8x288xf32>
    %c4 = arith.constant 4 : index
    %c0_12 = arith.constant 0 : index
    %c0_13 = arith.constant 0 : index
    %30 = vector.load %arg6[%c4, %c0_12, %c0_13] : memref<36x8x288xf32, #tpu.memory_space<vmem>>, vector<1x8x288xf32>
    %31 = vector.shape_cast %30 : vector<1x8x288xf32> to vector<8x288xf32>
    %32 = vector.shape_cast %29 : vector<8x288xf32> to vector<1x8x288xf32>
    tpu.vector_store %arg6[%c4, %c0_12, %c0_13], %32 {strides = array<i32>} : memref<36x8x288xf32, #tpu.memory_space<vmem>>, vector<1x8x288xf32>,
    %33 = vector.extract_strided_slice %2 {offsets = [0, 5], sizes = [8, 1], strides = [1, 1]} : vector<8x36xf32> to vector<8x1xf32>
    %34 = vector.shape_cast %33 : vector<8x1xf32> to vector<8x1xf32>
    %35 = vector.broadcast %34 : vector<8x1xf32> to vector<8x288xf32>
    %c5 = arith.constant 5 : index
    %c0_14 = arith.constant 0 : index
    %c0_15 = arith.constant 0 : index
    %36 = vector.load %arg6[%c5, %c0_14, %c0_15] : memref<36x8x288xf32, #tpu.memory_space<vmem>>, vector<1x8x288xf32>
    %37 = vector.shape_cast %36 : vector<1x8x288xf32> to vector<8x288xf32>
    %38 = vector.shape_cast %35 : vector<8x288xf32> to vector<1x8x288xf32>
    tpu.vector_store %arg6[%c5, %c0_14, %c0_15], %38 {strides = array<i32>} : memref<36x8x288xf32, #tpu.memory_space<vmem>>, vector<1x8x288xf32>,
    %39 = vector.extract_strided_slice %2 {offsets = [0, 6], sizes = [8, 1], strides = [1, 1]} : vector<8x36xf32> to vector<8x1xf32>
    %40 = vector.shape_cast %39 : vector<8x1xf32> to vector<8x1xf32>
    %41 = vector.broadcast %40 : vector<8x1xf32> to vector<8x288xf32>
    %c6 = arith.constant 6 : index
    %c0_16 = arith.constant 0 : index
    %c0_17 = arith.constant 0 : index
    %42 = vector.load %arg6[%c6, %c0_16, %c0_17] : memref<36x8x288xf32, #tpu.memory_space<vmem>>, vector<1x8x288xf32>
    %43 = vector.shape_cast %42 : vector<1x8x288xf32> to vector<8x288xf32>
    %44 = vector.shape_cast %41 : vector<8x288xf32> to vector<1x8x288xf32>
    tpu.vector_store %arg6[%c6, %c0_16, %c0_17], %44 {strides = array<i32>} : memref<36x8x288xf32, #tpu.memory_space<vmem>>, vector<1x8x288xf32>,
    %45 = vector.extract_strided_slice %2 {offsets = [0, 7], sizes = [8, 1], strides = [1, 1]} : vector<8x36xf32> to vector<8x1xf32>
    %46 = vector.shape_cast %45 : vector<8x1xf32> to vector<8x1xf32>
    %47 = vector.broadcast %46 : vector<8x1xf32> to vector<8x288xf32>
    %c7 = arith.constant 7 : index
    %c0_18 = arith.constant 0 : index
    %c0_19 = arith.constant 0 : index
    %48 = vector.load %arg6[%c7, %c0_18, %c0_19] : memref<36x8x288xf32, #tpu.memory_space<vmem>>, vector<1x8x288xf32>
    %49 = vector.shape_cast %48 : vector<1x8x288xf32> to vector<8x288xf32>
    %50 = vector.shape_cast %47 : vector<8x288xf32> to vector<1x8x288xf32>
    tpu.vector_store %arg6[%c7, %c0_18, %c0_19], %50 {strides = array<i32>} : memref<36x8x288xf32, #tpu.memory_space<vmem>>, vector<1x8x288xf32>,
    %51 = vector.extract_strided_slice %2 {offsets = [0, 8], sizes = [8, 1], strides = [1, 1]} : vector<8x36xf32> to vector<8x1xf32>
    %52 = vector.shape_cast %51 : vector<8x1xf32> to vector<8x1xf32>
    %53 = vector.broadcast %52 : vector<8x1xf32> to vector<8x288xf32>
    %c8 = arith.constant 8 : index
    %c0_20 = arith.constant 0 : index
    %c0_21 = arith.constant 0 : index
    %54 = vector.load %arg6[%c8, %c0_20, %c0_21] : memref<36x8x288xf32, #tpu.memory_space<vmem>>, vector<1x8x288xf32>
    %55 = vector.shape_cast %54 : vector<1x8x288xf32> to vector<8x288xf32>
    %56 = vector.shape_cast %53 : vector<8x288xf32> to vector<1x8x288xf32>
    tpu.vector_store %arg6[%c8, %c0_20, %c0_21], %56 {strides = array<i32>} : memref<36x8x288xf32, #tpu.memory_space<vmem>>, vector<1x8x288xf32>,
    %57 = vector.extract_strided_slice %2 {offsets = [0, 9], sizes = [8, 1], strides = [1, 1]} : vector<8x36xf32> to vector<8x1xf32>
    %58 = vector.shape_cast %57 : vector<8x1xf32> to vector<8x1xf32>
    %59 = vector.broadcast %58 : vector<8x1xf32> to vector<8x288xf32>
    %c9 = arith.constant 9 : index
    %c0_22 = arith.constant 0 : index
    %c0_23 = arith.constant 0 : index
    %60 = vector.load %arg6[%c9, %c0_22, %c0_23] : memref<36x8x288xf32, #tpu.memory_space<vmem>>, vector<1x8x288xf32>
    %61 = vector.shape_cast %60 : vector<1x8x288xf32> to vector<8x288xf32>
    %62 = vector.shape_cast %59 : vector<8x288xf32> to vector<1x8x288xf32>
    tpu.vector_store %arg6[%c9, %c0_22, %c0_23], %62 {strides = array<i32>} : memref<36x8x288xf32, #tpu.memory_space<vmem>>, vector<1x8x288xf32>,
    %63 = vector.extract_strided_slice %2 {offsets = [0, 10], sizes = [8, 1], strides = [1, 1]} : vector<8x36xf32> to vector<8x1xf32>
    %64 = vector.shape_cast %63 : vector<8x1xf32> to vector<8x1xf32>
    %65 = vector.broadcast %64 : vector<8x1xf32> to vector<8x288xf32>
    %c10 = arith.constant 10 : index
    %c0_24 = arith.constant 0 : index
    %c0_25 = arith.constant 0 : index
    %66 = vector.load %arg6[%c10, %c0_24, %c0_25] : memref<36x8x288xf32, #tpu.memory_space<vmem>>, vector<1x8x288xf32>
    %67 = vector.shape_cast %66 : vector<1x8x288xf32> to vector<8x288xf32>
    %68 = vector.shape_cast %65 : vector<8x288xf32> to vector<1x8x288xf32>
    tpu.vector_store %arg6[%c10, %c0_24, %c0_25], %68 {strides = array<i32>} : memref<36x8x288xf32, #tpu.memory_space<vmem>>, vector<1x8x288xf32>,
    %69 = vector.extract_strided_slice %2 {offsets = [0, 11], sizes = [8, 1], strides = [1, 1]} : vector<8x36xf32> to vector<8x1xf32>
    %70 = vector.shape_cast %69 : vector<8x1xf32> to vector<8x1xf32>
    %71 = vector.broadcast %70 : vector<8x1xf32> to vector<8x288xf32>
    %c11 = arith.constant 11 : index
    %c0_26 = arith.constant 0 : index
    %c0_27 = arith.constant 0 : index
    %72 = vector.load %arg6[%c11, %c0_26, %c0_27] : memref<36x8x288xf32, #tpu.memory_space<vmem>>, vector<1x8x288xf32>
    %73 = vector.shape_cast %72 : vector<1x8x288xf32> to vector<8x288xf32>
    %74 = vector.shape_cast %71 : vector<8x288xf32> to vector<1x8x288xf32>
    tpu.vector_store %arg6[%c11, %c0_26, %c0_27], %74 {strides = array<i32>} : memref<36x8x288xf32, #tpu.memory_space<vmem>>, vector<1x8x288xf32>,
    %75 = vector.extract_strided_slice %2 {offsets = [0, 12], sizes = [8, 1], strides = [1, 1]} : vector<8x36xf32> to vector<8x1xf32>
    %76 = vector.shape_cast %75 : vector<8x1xf32> to vector<8x1xf32>
    %77 = vector.broadcast %76 : vector<8x1xf32> to vector<8x288xf32>
    %c12 = arith.constant 12 : index
    %c0_28 = arith.constant 0 : index
    %c0_29 = arith.constant 0 : index
    %78 = vector.load %arg6[%c12, %c0_28, %c0_29] : memref<36x8x288xf32, #tpu.memory_space<vmem>>, vector<1x8x288xf32>
    %79 = vector.shape_cast %78 : vector<1x8x288xf32> to vector<8x288xf32>
    %80 = vector.shape_cast %77 : vector<8x288xf32> to vector<1x8x288xf32>
    tpu.vector_store %arg6[%c12, %c0_28, %c0_29], %80 {strides = array<i32>} : memref<36x8x288xf32, #tpu.memory_space<vmem>>, vector<1x8x288xf32>,
    %81 = vector.extract_strided_slice %2 {offsets = [0, 13], sizes = [8, 1], strides = [1, 1]} : vector<8x36xf32> to vector<8x1xf32>
    %82 = vector.shape_cast %81 : vector<8x1xf32> to vector<8x1xf32>
    %83 = vector.broadcast %82 : vector<8x1xf32> to vector<8x288xf32>
    %c13 = arith.constant 13 : index
    %c0_30 = arith.constant 0 : index
    %c0_31 = arith.constant 0 : index
    %84 = vector.load %arg6[%c13, %c0_30, %c0_31] : memref<36x8x288xf32, #tpu.memory_space<vmem>>, vector<1x8x288xf32>
    %85 = vector.shape_cast %84 : vector<1x8x288xf32> to vector<8x288xf32>
    %86 = vector.shape_cast %83 : vector<8x288xf32> to vector<1x8x288xf32>
    tpu.vector_store %arg6[%c13, %c0_30, %c0_31], %86 {strides = array<i32>} : memref<36x8x288xf32, #tpu.memory_space<vmem>>, vector<1x8x288xf32>,
    %87 = vector.extract_strided_slice %2 {offsets = [0, 14], sizes = [8, 1], strides = [1, 1]} : vector<8x36xf32> to vector<8x1xf32>
    %88 = vector.shape_cast %87 : vector<8x1xf32> to vector<8x1xf32>
    %89 = vector.broadcast %88 : vector<8x1xf32> to vector<8x288xf32>
    %c14 = arith.constant 14 : index
    %c0_32 = arith.constant 0 : index
    %c0_33 = arith.constant 0 : index
    %90 = vector.load %arg6[%c14, %c0_32, %c0_33] : memref<36x8x288xf32, #tpu.memory_space<vmem>>, vector<1x8x288xf32>
    %91 = vector.shape_cast %90 : vector<1x8x288xf32> to vector<8x288xf32>
    %92 = vector.shape_cast %89 : vector<8x288xf32> to vector<1x8x288xf32>
    tpu.vector_store %arg6[%c14, %c0_32, %c0_33], %92 {strides = array<i32>} : memref<36x8x288xf32, #tpu.memory_space<vmem>>, vector<1x8x288xf32>,
    %93 = vector.extract_strided_slice %2 {offsets = [0, 15], sizes = [8, 1], strides = [1, 1]} : vector<8x36xf32> to vector<8x1xf32>
    %94 = vector.shape_cast %93 : vector<8x1xf32> to vector<8x1xf32>
    %95 = vector.broadcast %94 : vector<8x1xf32> to vector<8x288xf32>
    %c15 = arith.constant 15 : index
    %c0_34 = arith.constant 0 : index
    %c0_35 = arith.constant 0 : index
    %96 = vector.load %arg6[%c15, %c0_34, %c0_35] : memref<36x8x288xf32, #tpu.memory_space<vmem>>, vector<1x8x288xf32>
    %97 = vector.shape_cast %96 : vector<1x8x288xf32> to vector<8x288xf32>
    %98 = vector.shape_cast %95 : vector<8x288xf32> to vector<1x8x288xf32>
    tpu.vector_store %arg6[%c15, %c0_34, %c0_35], %98 {strides = array<i32>} : memref<36x8x288xf32, #tpu.memory_space<vmem>>, vector<1x8x288xf32>,
    %99 = vector.extract_strided_slice %2 {offsets = [0, 16], sizes = [8, 1], strides = [1, 1]} : vector<8x36xf32> to vector<8x1xf32>
    %100 = vector.shape_cast %99 : vector<8x1xf32> to vector<8x1xf32>
    %101 = vector.broadcast %100 : vector<8x1xf32> to vector<8x288xf32>
    %c16 = arith.constant 16 : index
    %c0_36 = arith.constant 0 : index
    %c0_37 = arith.constant 0 : index
    %102 = vector.load %arg6[%c16, %c0_36, %c0_37] : memref<36x8x288xf32, #tpu.memory_space<vmem>>, vector<1x8x288xf32>
    %103 = vector.shape_cast %102 : vector<1x8x288xf32> to vector<8x288xf32>
    %104 = vector.shape_cast %101 : vector<8x288xf32> to vector<1x8x288xf32>
    tpu.vector_store %arg6[%c16, %c0_36, %c0_37], %104 {strides = array<i32>} : memref<36x8x288xf32, #tpu.memory_space<vmem>>, vector<1x8x288xf32>,
    %105 = vector.extract_strided_slice %2 {offsets = [0, 17], sizes = [8, 1], strides = [1, 1]} : vector<8x36xf32> to vector<8x1xf32>
    %106 = vector.shape_cast %105 : vector<8x1xf32> to vector<8x1xf32>
    %107 = vector.broadcast %106 : vector<8x1xf32> to vector<8x288xf32>
    %c17 = arith.constant 17 : index
    %c0_38 = arith.constant 0 : index
    %c0_39 = arith.constant 0 : index
    %108 = vector.load %arg6[%c17, %c0_38, %c0_39] : memref<36x8x288xf32, #tpu.memory_space<vmem>>, vector<1x8x288xf32>
    %109 = vector.shape_cast %108 : vector<1x8x288xf32> to vector<8x288xf32>
    %110 = vector.shape_cast %107 : vector<8x288xf32> to vector<1x8x288xf32>
    tpu.vector_store %arg6[%c17, %c0_38, %c0_39], %110 {strides = array<i32>} : memref<36x8x288xf32, #tpu.memory_space<vmem>>, vector<1x8x288xf32>,
    %111 = vector.extract_strided_slice %2 {offsets = [0, 18], sizes = [8, 1], strides = [1, 1]} : vector<8x36xf32> to vector<8x1xf32>
    %112 = vector.shape_cast %111 : vector<8x1xf32> to vector<8x1xf32>
    %113 = vector.broadcast %112 : vector<8x1xf32> to vector<8x288xf32>
    %c18 = arith.constant 18 : index
    %c0_40 = arith.constant 0 : index
    %c0_41 = arith.constant 0 : index
    %114 = vector.load %arg6[%c18, %c0_40, %c0_41] : memref<36x8x288xf32, #tpu.memory_space<vmem>>, vector<1x8x288xf32>
    %115 = vector.shape_cast %114 : vector<1x8x288xf32> to vector<8x288xf32>
    %116 = vector.shape_cast %113 : vector<8x288xf32> to vector<1x8x288xf32>
    tpu.vector_store %arg6[%c18, %c0_40, %c0_41], %116 {strides = array<i32>} : memref<36x8x288xf32, #tpu.memory_space<vmem>>, vector<1x8x288xf32>,
    %117 = vector.extract_strided_slice %2 {offsets = [0, 19], sizes = [8, 1], strides = [1, 1]} : vector<8x36xf32> to vector<8x1xf32>
    %118 = vector.shape_cast %117 : vector<8x1xf32> to vector<8x1xf32>
    %119 = vector.broadcast %118 : vector<8x1xf32> to vector<8x288xf32>
    %c19 = arith.constant 19 : index
    %c0_42 = arith.constant 0 : index
    %c0_43 = arith.constant 0 : index
    %120 = vector.load %arg6[%c19, %c0_42, %c0_43] : memref<36x8x288xf32, #tpu.memory_space<vmem>>, vector<1x8x288xf32>
    %121 = vector.shape_cast %120 : vector<1x8x288xf32> to vector<8x288xf32>
    %122 = vector.shape_cast %119 : vector<8x288xf32> to vector<1x8x288xf32>
    tpu.vector_store %arg6[%c19, %c0_42, %c0_43], %122 {strides = array<i32>} : memref<36x8x288xf32, #tpu.memory_space<vmem>>, vector<1x8x288xf32>,
    %123 = vector.extract_strided_slice %2 {offsets = [0, 20], sizes = [8, 1], strides = [1, 1]} : vector<8x36xf32> to vector<8x1xf32>
    %124 = vector.shape_cast %123 : vector<8x1xf32> to vector<8x1xf32>
    %125 = vector.broadcast %124 : vector<8x1xf32> to vector<8x288xf32>
    %c20 = arith.constant 20 : index
    %c0_44 = arith.constant 0 : index
    %c0_45 = arith.constant 0 : index
    %126 = vector.load %arg6[%c20, %c0_44, %c0_45] : memref<36x8x288xf32, #tpu.memory_space<vmem>>, vector<1x8x288xf32>
    %127 = vector.shape_cast %126 : vector<1x8x288xf32> to vector<8x288xf32>
    %128 = vector.shape_cast %125 : vector<8x288xf32> to vector<1x8x288xf32>
    tpu.vector_store %arg6[%c20, %c0_44, %c0_45], %128 {strides = array<i32>} : memref<36x8x288xf32, #tpu.memory_space<vmem>>, vector<1x8x288xf32>,
    %129 = vector.extract_strided_slice %2 {offsets = [0, 21], sizes = [8, 1], strides = [1, 1]} : vector<8x36xf32> to vector<8x1xf32>
    %130 = vector.shape_cast %129 : vector<8x1xf32> to vector<8x1xf32>
    %131 = vector.broadcast %130 : vector<8x1xf32> to vector<8x288xf32>
    %c21 = arith.constant 21 : index
    %c0_46 = arith.constant 0 : index
    %c0_47 = arith.constant 0 : index
    %132 = vector.load %arg6[%c21, %c0_46, %c0_47] : memref<36x8x288xf32, #tpu.memory_space<vmem>>, vector<1x8x288xf32>
    %133 = vector.shape_cast %132 : vector<1x8x288xf32> to vector<8x288xf32>
    %134 = vector.shape_cast %131 : vector<8x288xf32> to vector<1x8x288xf32>
    tpu.vector_store %arg6[%c21, %c0_46, %c0_47], %134 {strides = array<i32>} : memref<36x8x288xf32, #tpu.memory_space<vmem>>, vector<1x8x288xf32>,
    %135 = vector.extract_strided_slice %2 {offsets = [0, 22], sizes = [8, 1], strides = [1, 1]} : vector<8x36xf32> to vector<8x1xf32>
    %136 = vector.shape_cast %135 : vector<8x1xf32> to vector<8x1xf32>
    %137 = vector.broadcast %136 : vector<8x1xf32> to vector<8x288xf32>
    %c22 = arith.constant 22 : index
    %c0_48 = arith.constant 0 : index
    %c0_49 = arith.constant 0 : index
    %138 = vector.load %arg6[%c22, %c0_48, %c0_49] : memref<36x8x288xf32, #tpu.memory_space<vmem>>, vector<1x8x288xf32>
    %139 = vector.shape_cast %138 : vector<1x8x288xf32> to vector<8x288xf32>
    %140 = vector.shape_cast %137 : vector<8x288xf32> to vector<1x8x288xf32>
    tpu.vector_store %arg6[%c22, %c0_48, %c0_49], %140 {strides = array<i32>} : memref<36x8x288xf32, #tpu.memory_space<vmem>>, vector<1x8x288xf32>,
    %141 = vector.extract_strided_slice %2 {offsets = [0, 23], sizes = [8, 1], strides = [1, 1]} : vector<8x36xf32> to vector<8x1xf32>
    %142 = vector.shape_cast %141 : vector<8x1xf32> to vector<8x1xf32>
    %143 = vector.broadcast %142 : vector<8x1xf32> to vector<8x288xf32>
    %c23 = arith.constant 23 : index
    %c0_50 = arith.constant 0 : index
    %c0_51 = arith.constant 0 : index
    %144 = vector.load %arg6[%c23, %c0_50, %c0_51] : memref<36x8x288xf32, #tpu.memory_space<vmem>>, vector<1x8x288xf32>
    %145 = vector.shape_cast %144 : vector<1x8x288xf32> to vector<8x288xf32>
    %146 = vector.shape_cast %143 : vector<8x288xf32> to vector<1x8x288xf32>
    tpu.vector_store %arg6[%c23, %c0_50, %c0_51], %146 {strides = array<i32>} : memref<36x8x288xf32, #tpu.memory_space<vmem>>, vector<1x8x288xf32>,
    %147 = vector.extract_strided_slice %2 {offsets = [0, 24], sizes = [8, 1], strides = [1, 1]} : vector<8x36xf32> to vector<8x1xf32>
    %148 = vector.shape_cast %147 : vector<8x1xf32> to vector<8x1xf32>
    %149 = vector.broadcast %148 : vector<8x1xf32> to vector<8x288xf32>
    %c24 = arith.constant 24 : index
    %c0_52 = arith.constant 0 : index
    %c0_53 = arith.constant 0 : index
    %150 = vector.load %arg6[%c24, %c0_52, %c0_53] : memref<36x8x288xf32, #tpu.memory_space<vmem>>, vector<1x8x288xf32>
    %151 = vector.shape_cast %150 : vector<1x8x288xf32> to vector<8x288xf32>
    %152 = vector.shape_cast %149 : vector<8x288xf32> to vector<1x8x288xf32>
    tpu.vector_store %arg6[%c24, %c0_52, %c0_53], %152 {strides = array<i32>} : memref<36x8x288xf32, #tpu.memory_space<vmem>>, vector<1x8x288xf32>,
    %153 = vector.extract_strided_slice %2 {offsets = [0, 25], sizes = [8, 1], strides = [1, 1]} : vector<8x36xf32> to vector<8x1xf32>
    %154 = vector.shape_cast %153 : vector<8x1xf32> to vector<8x1xf32>
    %155 = vector.broadcast %154 : vector<8x1xf32> to vector<8x288xf32>
    %c25 = arith.constant 25 : index
    %c0_54 = arith.constant 0 : index
    %c0_55 = arith.constant 0 : index
    %156 = vector.load %arg6[%c25, %c0_54, %c0_55] : memref<36x8x288xf32, #tpu.memory_space<vmem>>, vector<1x8x288xf32>
    %157 = vector.shape_cast %156 : vector<1x8x288xf32> to vector<8x288xf32>
    %158 = vector.shape_cast %155 : vector<8x288xf32> to vector<1x8x288xf32>
    tpu.vector_store %arg6[%c25, %c0_54, %c0_55], %158 {strides = array<i32>} : memref<36x8x288xf32, #tpu.memory_space<vmem>>, vector<1x8x288xf32>,
    %159 = vector.extract_strided_slice %2 {offsets = [0, 26], sizes = [8, 1], strides = [1, 1]} : vector<8x36xf32> to vector<8x1xf32>
    %160 = vector.shape_cast %159 : vector<8x1xf32> to vector<8x1xf32>
    %161 = vector.broadcast %160 : vector<8x1xf32> to vector<8x288xf32>
    %c26 = arith.constant 26 : index
    %c0_56 = arith.constant 0 : index
    %c0_57 = arith.constant 0 : index
    %162 = vector.load %arg6[%c26, %c0_56, %c0_57] : memref<36x8x288xf32, #tpu.memory_space<vmem>>, vector<1x8x288xf32>
    %163 = vector.shape_cast %162 : vector<1x8x288xf32> to vector<8x288xf32>
    %164 = vector.shape_cast %161 : vector<8x288xf32> to vector<1x8x288xf32>
    tpu.vector_store %arg6[%c26, %c0_56, %c0_57], %164 {strides = array<i32>} : memref<36x8x288xf32, #tpu.memory_space<vmem>>, vector<1x8x288xf32>,
    %165 = vector.extract_strided_slice %2 {offsets = [0, 27], sizes = [8, 1], strides = [1, 1]} : vector<8x36xf32> to vector<8x1xf32>
    %166 = vector.shape_cast %165 : vector<8x1xf32> to vector<8x1xf32>
    %167 = vector.broadcast %166 : vector<8x1xf32> to vector<8x288xf32>
    %c27 = arith.constant 27 : index
    %c0_58 = arith.constant 0 : index
    %c0_59 = arith.constant 0 : index
    %168 = vector.load %arg6[%c27, %c0_58, %c0_59] : memref<36x8x288xf32, #tpu.memory_space<vmem>>, vector<1x8x288xf32>
    %169 = vector.shape_cast %168 : vector<1x8x288xf32> to vector<8x288xf32>
    %170 = vector.shape_cast %167 : vector<8x288xf32> to vector<1x8x288xf32>
    tpu.vector_store %arg6[%c27, %c0_58, %c0_59], %170 {strides = array<i32>} : memref<36x8x288xf32, #tpu.memory_space<vmem>>, vector<1x8x288xf32>,
    %171 = vector.extract_strided_slice %2 {offsets = [0, 28], sizes = [8, 1], strides = [1, 1]} : vector<8x36xf32> to vector<8x1xf32>
    %172 = vector.shape_cast %171 : vector<8x1xf32> to vector<8x1xf32>
    %173 = vector.broadcast %172 : vector<8x1xf32> to vector<8x288xf32>
    %c28 = arith.constant 28 : index
    %c0_60 = arith.constant 0 : index
    %c0_61 = arith.constant 0 : index
    %174 = vector.load %arg6[%c28, %c0_60, %c0_61] : memref<36x8x288xf32, #tpu.memory_space<vmem>>, vector<1x8x288xf32>
    %175 = vector.shape_cast %174 : vector<1x8x288xf32> to vector<8x288xf32>
    %176 = vector.shape_cast %173 : vector<8x288xf32> to vector<1x8x288xf32>
    tpu.vector_store %arg6[%c28, %c0_60, %c0_61], %176 {strides = array<i32>} : memref<36x8x288xf32, #tpu.memory_space<vmem>>, vector<1x8x288xf32>,
    %177 = vector.extract_strided_slice %2 {offsets = [0, 29], sizes = [8, 1], strides = [1, 1]} : vector<8x36xf32> to vector<8x1xf32>
    %178 = vector.shape_cast %177 : vector<8x1xf32> to vector<8x1xf32>
    %179 = vector.broadcast %178 : vector<8x1xf32> to vector<8x288xf32>
    %c29 = arith.constant 29 : index
    %c0_62 = arith.constant 0 : index
    %c0_63 = arith.constant 0 : index
    %180 = vector.load %arg6[%c29, %c0_62, %c0_63] : memref<36x8x288xf32, #tpu.memory_space<vmem>>, vector<1x8x288xf32>
    %181 = vector.shape_cast %180 : vector<1x8x288xf32> to vector<8x288xf32>
    %182 = vector.shape_cast %179 : vector<8x288xf32> to vector<1x8x288xf32>
    tpu.vector_store %arg6[%c29, %c0_62, %c0_63], %182 {strides = array<i32>} : memref<36x8x288xf32, #tpu.memory_space<vmem>>, vector<1x8x288xf32>,
    %183 = vector.extract_strided_slice %2 {offsets = [0, 30], sizes = [8, 1], strides = [1, 1]} : vector<8x36xf32> to vector<8x1xf32>
    %184 = vector.shape_cast %183 : vector<8x1xf32> to vector<8x1xf32>
    %185 = vector.broadcast %184 : vector<8x1xf32> to vector<8x288xf32>
    %c30 = arith.constant 30 : index
    %c0_64 = arith.constant 0 : index
    %c0_65 = arith.constant 0 : index
    %186 = vector.load %arg6[%c30, %c0_64, %c0_65] : memref<36x8x288xf32, #tpu.memory_space<vmem>>, vector<1x8x288xf32>
    %187 = vector.shape_cast %186 : vector<1x8x288xf32> to vector<8x288xf32>
    %188 = vector.shape_cast %185 : vector<8x288xf32> to vector<1x8x288xf32>
    tpu.vector_store %arg6[%c30, %c0_64, %c0_65], %188 {strides = array<i32>} : memref<36x8x288xf32, #tpu.memory_space<vmem>>, vector<1x8x288xf32>,
    %189 = vector.extract_strided_slice %2 {offsets = [0, 31], sizes = [8, 1], strides = [1, 1]} : vector<8x36xf32> to vector<8x1xf32>
    %190 = vector.shape_cast %189 : vector<8x1xf32> to vector<8x1xf32>
    %191 = vector.broadcast %190 : vector<8x1xf32> to vector<8x288xf32>
    %c31 = arith.constant 31 : index
    %c0_66 = arith.constant 0 : index
    %c0_67 = arith.constant 0 : index
    %192 = vector.load %arg6[%c31, %c0_66, %c0_67] : memref<36x8x288xf32, #tpu.memory_space<vmem>>, vector<1x8x288xf32>
    %193 = vector.shape_cast %192 : vector<1x8x288xf32> to vector<8x288xf32>
    %194 = vector.shape_cast %191 : vector<8x288xf32> to vector<1x8x288xf32>
    tpu.vector_store %arg6[%c31, %c0_66, %c0_67], %194 {strides = array<i32>} : memref<36x8x288xf32, #tpu.memory_space<vmem>>, vector<1x8x288xf32>,
    %195 = vector.extract_strided_slice %2 {offsets = [0, 32], sizes = [8, 1], strides = [1, 1]} : vector<8x36xf32> to vector<8x1xf32>
    %196 = vector.shape_cast %195 : vector<8x1xf32> to vector<8x1xf32>
    %197 = vector.broadcast %196 : vector<8x1xf32> to vector<8x288xf32>
    %c32 = arith.constant 32 : index
    %c0_68 = arith.constant 0 : index
    %c0_69 = arith.constant 0 : index
    %198 = vector.load %arg6[%c32, %c0_68, %c0_69] : memref<36x8x288xf32, #tpu.memory_space<vmem>>, vector<1x8x288xf32>
    %199 = vector.shape_cast %198 : vector<1x8x288xf32> to vector<8x288xf32>
    %200 = vector.shape_cast %197 : vector<8x288xf32> to vector<1x8x288xf32>
    tpu.vector_store %arg6[%c32, %c0_68, %c0_69], %200 {strides = array<i32>} : memref<36x8x288xf32, #tpu.memory_space<vmem>>, vector<1x8x288xf32>,
    %201 = vector.extract_strided_slice %2 {offsets = [0, 33], sizes = [8, 1], strides = [1, 1]} : vector<8x36xf32> to vector<8x1xf32>
    %202 = vector.shape_cast %201 : vector<8x1xf32> to vector<8x1xf32>
    %203 = vector.broadcast %202 : vector<8x1xf32> to vector<8x288xf32>
    %c33 = arith.constant 33 : index
    %c0_70 = arith.constant 0 : index
    %c0_71 = arith.constant 0 : index
    %204 = vector.load %arg6[%c33, %c0_70, %c0_71] : memref<36x8x288xf32, #tpu.memory_space<vmem>>, vector<1x8x288xf32>
    %205 = vector.shape_cast %204 : vector<1x8x288xf32> to vector<8x288xf32>
    %206 = vector.shape_cast %203 : vector<8x288xf32> to vector<1x8x288xf32>
    tpu.vector_store %arg6[%c33, %c0_70, %c0_71], %206 {strides = array<i32>} : memref<36x8x288xf32, #tpu.memory_space<vmem>>, vector<1x8x288xf32>,
    %207 = vector.extract_strided_slice %2 {offsets = [0, 34], sizes = [8, 1], strides = [1, 1]} : vector<8x36xf32> to vector<8x1xf32>
    %208 = vector.shape_cast %207 : vector<8x1xf32> to vector<8x1xf32>
    %209 = vector.broadcast %208 : vector<8x1xf32> to vector<8x288xf32>
    %c34 = arith.constant 34 : index
    %c0_72 = arith.constant 0 : index
    %c0_73 = arith.constant 0 : index
    %210 = vector.load %arg6[%c34, %c0_72, %c0_73] : memref<36x8x288xf32, #tpu.memory_space<vmem>>, vector<1x8x288xf32>
    %211 = vector.shape_cast %210 : vector<1x8x288xf32> to vector<8x288xf32>
    %212 = vector.shape_cast %209 : vector<8x288xf32> to vector<1x8x288xf32>
    tpu.vector_store %arg6[%c34, %c0_72, %c0_73], %212 {strides = array<i32>} : memref<36x8x288xf32, #tpu.memory_space<vmem>>, vector<1x8x288xf32>,
    %213 = vector.extract_strided_slice %2 {offsets = [0, 35], sizes = [8, 1], strides = [1, 1]} : vector<8x36xf32> to vector<8x1xf32>
    %214 = vector.shape_cast %213 : vector<8x1xf32> to vector<8x1xf32>
    %215 = vector.broadcast %214 : vector<8x1xf32> to vector<8x288xf32>
    %c35 = arith.constant 35 : index
    %c0_74 = arith.constant 0 : index
    %c0_75 = arith.constant 0 : index
    %216 = vector.load %arg6[%c35, %c0_74, %c0_75] : memref<36x8x288xf32, #tpu.memory_space<vmem>>, vector<1x8x288xf32>
    %217 = vector.shape_cast %216 : vector<1x8x288xf32> to vector<8x288xf32>
    %218 = vector.shape_cast %215 : vector<8x288xf32> to vector<1x8x288xf32>
    tpu.vector_store %arg6[%c35, %c0_74, %c0_75], %218 {strides = array<i32>} : memref<36x8x288xf32, #tpu.memory_space<vmem>>, vector<1x8x288xf32>,
    %c0_76 = arith.constant 0 : index
    %c0_77 = arith.constant 0 : index
    %219 = vector.load %arg2[%c0_76, %c0_77] : memref<8x1xf32, #tpu.memory_space<vmem>>, vector<8x1xf32>
    %220 = vector.shape_cast %219 : vector<8x1xf32> to vector<8x1xf32>
    %221 = vector.broadcast %220 : vector<8x1xf32> to vector<8x288xf32>
    %c0_78 = arith.constant 0 : index
    %c0_79 = arith.constant 0 : index
    %c0_80 = arith.constant 0 : index
    %222 = vector.load %arg3[%c0_78, %c0_79, %c0_80] : memref<1x4x256xf32, #tpu.memory_space<vmem>>, vector<1x4x256xf32>
    %223 = vector.shape_cast %222 : vector<1x4x256xf32> to vector<4x256xf32>
    %224 = vector.extract_strided_slice %223 {offsets = [0, 0], sizes = [4, 16], strides = [1, 1]} : vector<4x256xf32> to vector<4x16xf32>
    %c0_81 = arith.constant 0 : index
    %c19_82 = arith.constant 19 : index
    %225 = vector.load %arg5[%c0_81, %c19_82] : memref<12x342xf32, #tpu.memory_space<vmem>>, vector<4x16xf32>
    tpu.vector_store %arg5[%c0_81, %c19_82], %224 {strides = array<i32>} : memref<12x342xf32, #tpu.memory_space<vmem>>, vector<4x16xf32>,
    %226 = vector.extract_strided_slice %223 {offsets = [0, 16], sizes = [4, 16], strides = [1, 1]} : vector<4x256xf32> to vector<4x16xf32>
    %c0_83 = arith.constant 0 : index
    %c37 = arith.constant 37 : index
    %227 = vector.load %arg5[%c0_83, %c37] : memref<12x342xf32, #tpu.memory_space<vmem>>, vector<4x16xf32>
    tpu.vector_store %arg5[%c0_83, %c37], %226 {strides = array<i32>} : memref<12x342xf32, #tpu.memory_space<vmem>>, vector<4x16xf32>,
    %228 = vector.extract_strided_slice %223 {offsets = [0, 32], sizes = [4, 16], strides = [1, 1]} : vector<4x256xf32> to vector<4x16xf32>
    %c0_84 = arith.constant 0 : index
    %c55 = arith.constant 55 : index
    %229 = vector.load %arg5[%c0_84, %c55] : memref<12x342xf32, #tpu.memory_space<vmem>>, vector<4x16xf32>
    tpu.vector_store %arg5[%c0_84, %c55], %228 {strides = array<i32>} : memref<12x342xf32, #tpu.memory_space<vmem>>, vector<4x16xf32>,
    %230 = vector.extract_strided_slice %223 {offsets = [0, 48], sizes = [4, 16], strides = [1, 1]} : vector<4x256xf32> to vector<4x16xf32>
    %c0_85 = arith.constant 0 : index
    %c73 = arith.constant 73 : index
    %231 = vector.load %arg5[%c0_85, %c73] : memref<12x342xf32, #tpu.memory_space<vmem>>, vector<4x16xf32>
    tpu.vector_store %arg5[%c0_85, %c73], %230 {strides = array<i32>} : memref<12x342xf32, #tpu.memory_space<vmem>>, vector<4x16xf32>,
    %232 = vector.extract_strided_slice %223 {offsets = [0, 64], sizes = [4, 16], strides = [1, 1]} : vector<4x256xf32> to vector<4x16xf32>
    %c0_86 = arith.constant 0 : index
    %c91 = arith.constant 91 : index
    %233 = vector.load %arg5[%c0_86, %c91] : memref<12x342xf32, #tpu.memory_space<vmem>>, vector<4x16xf32>
    tpu.vector_store %arg5[%c0_86, %c91], %232 {strides = array<i32>} : memref<12x342xf32, #tpu.memory_space<vmem>>, vector<4x16xf32>,
    %234 = vector.extract_strided_slice %223 {offsets = [0, 80], sizes = [4, 16], strides = [1, 1]} : vector<4x256xf32> to vector<4x16xf32>
    %c0_87 = arith.constant 0 : index
    %c109 = arith.constant 109 : index
    %235 = vector.load %arg5[%c0_87, %c109] : memref<12x342xf32, #tpu.memory_space<vmem>>, vector<4x16xf32>
    tpu.vector_store %arg5[%c0_87, %c109], %234 {strides = array<i32>} : memref<12x342xf32, #tpu.memory_space<vmem>>, vector<4x16xf32>,
    %236 = vector.extract_strided_slice %223 {offsets = [0, 96], sizes = [4, 16], strides = [1, 1]} : vector<4x256xf32> to vector<4x16xf32>
    %c0_88 = arith.constant 0 : index
    %c127 = arith.constant 127 : index
    %237 = vector.load %arg5[%c0_88, %c127] : memref<12x342xf32, #tpu.memory_space<vmem>>, vector<4x16xf32>
    tpu.vector_store %arg5[%c0_88, %c127], %236 {strides = array<i32>} : memref<12x342xf32, #tpu.memory_space<vmem>>, vector<4x16xf32>,
    %238 = vector.extract_strided_slice %223 {offsets = [0, 112], sizes = [4, 16], strides = [1, 1]} : vector<4x256xf32> to vector<4x16xf32>
    %c0_89 = arith.constant 0 : index
    %c145 = arith.constant 145 : index
    %239 = vector.load %arg5[%c0_89, %c145] : memref<12x342xf32, #tpu.memory_space<vmem>>, vector<4x16xf32>
    tpu.vector_store %arg5[%c0_89, %c145], %238 {strides = array<i32>} : memref<12x342xf32, #tpu.memory_space<vmem>>, vector<4x16xf32>,
    %240 = vector.extract_strided_slice %223 {offsets = [0, 128], sizes = [4, 16], strides = [1, 1]} : vector<4x256xf32> to vector<4x16xf32>
    %c0_90 = arith.constant 0 : index
    %c163 = arith.constant 163 : index
    %241 = vector.load %arg5[%c0_90, %c163] : memref<12x342xf32, #tpu.memory_space<vmem>>, vector<4x16xf32>
    tpu.vector_store %arg5[%c0_90, %c163], %240 {strides = array<i32>} : memref<12x342xf32, #tpu.memory_space<vmem>>, vector<4x16xf32>,
    %242 = vector.extract_strided_slice %223 {offsets = [0, 144], sizes = [4, 16], strides = [1, 1]} : vector<4x256xf32> to vector<4x16xf32>
    %c0_91 = arith.constant 0 : index
    %c181 = arith.constant 181 : index
    %243 = vector.load %arg5[%c0_91, %c181] : memref<12x342xf32, #tpu.memory_space<vmem>>, vector<4x16xf32>
    tpu.vector_store %arg5[%c0_91, %c181], %242 {strides = array<i32>} : memref<12x342xf32, #tpu.memory_space<vmem>>, vector<4x16xf32>,
    %244 = vector.extract_strided_slice %223 {offsets = [0, 160], sizes = [4, 16], strides = [1, 1]} : vector<4x256xf32> to vector<4x16xf32>
    %c0_92 = arith.constant 0 : index
    %c199 = arith.constant 199 : index
    %245 = vector.load %arg5[%c0_92, %c199] : memref<12x342xf32, #tpu.memory_space<vmem>>, vector<4x16xf32>
    tpu.vector_store %arg5[%c0_92, %c199], %244 {strides = array<i32>} : memref<12x342xf32, #tpu.memory_space<vmem>>, vector<4x16xf32>,
    %246 = vector.extract_strided_slice %223 {offsets = [0, 176], sizes = [4, 16], strides = [1, 1]} : vector<4x256xf32> to vector<4x16xf32>
    %c0_93 = arith.constant 0 : index
    %c217 = arith.constant 217 : index
    %247 = vector.load %arg5[%c0_93, %c217] : memref<12x342xf32, #tpu.memory_space<vmem>>, vector<4x16xf32>
    tpu.vector_store %arg5[%c0_93, %c217], %246 {strides = array<i32>} : memref<12x342xf32, #tpu.memory_space<vmem>>, vector<4x16xf32>,
    %248 = vector.extract_strided_slice %223 {offsets = [0, 192], sizes = [4, 16], strides = [1, 1]} : vector<4x256xf32> to vector<4x16xf32>
    %c0_94 = arith.constant 0 : index
    %c235 = arith.constant 235 : index
    %249 = vector.load %arg5[%c0_94, %c235] : memref<12x342xf32, #tpu.memory_space<vmem>>, vector<4x16xf32>
    tpu.vector_store %arg5[%c0_94, %c235], %248 {strides = array<i32>} : memref<12x342xf32, #tpu.memory_space<vmem>>, vector<4x16xf32>,
    %250 = vector.extract_strided_slice %223 {offsets = [0, 208], sizes = [4, 16], strides = [1, 1]} : vector<4x256xf32> to vector<4x16xf32>
    %c0_95 = arith.constant 0 : index
    %c253 = arith.constant 253 : index
    %251 = vector.load %arg5[%c0_95, %c253] : memref<12x342xf32, #tpu.memory_space<vmem>>, vector<4x16xf32>
    tpu.vector_store %arg5[%c0_95, %c253], %250 {strides = array<i32>} : memref<12x342xf32, #tpu.memory_space<vmem>>, vector<4x16xf32>,
    %252 = vector.extract_strided_slice %223 {offsets = [0, 224], sizes = [4, 16], strides = [1, 1]} : vector<4x256xf32> to vector<4x16xf32>
    %c0_96 = arith.constant 0 : index
    %c271 = arith.constant 271 : index
    %253 = vector.load %arg5[%c0_96, %c271] : memref<12x342xf32, #tpu.memory_space<vmem>>, vector<4x16xf32>
    tpu.vector_store %arg5[%c0_96, %c271], %252 {strides = array<i32>} : memref<12x342xf32, #tpu.memory_space<vmem>>, vector<4x16xf32>,
    %254 = vector.extract_strided_slice %223 {offsets = [0, 240], sizes = [4, 16], strides = [1, 1]} : vector<4x256xf32> to vector<4x16xf32>
    %c0_97 = arith.constant 0 : index
    %c289 = arith.constant 289 : index
    %255 = vector.load %arg5[%c0_97, %c289] : memref<12x342xf32, #tpu.memory_space<vmem>>, vector<4x16xf32>
    tpu.vector_store %arg5[%c0_97, %c289], %254 {strides = array<i32>} : memref<12x342xf32, #tpu.memory_space<vmem>>, vector<4x16xf32>,
    %c0_98 = arith.constant 0 : index
    %c0_99 = arith.constant 0 : index
    %256 = tpu.strided_load %arg5[%c0_98, %c0_99] {strides = array<i32: 0, 1>} : memref<12x342xf32, #tpu.memory_space<vmem>>, vector<8x288xf32>
    %c0_100 = arith.constant 0 : index
    %c0_101 = arith.constant 0 : index
    %c0_102 = arith.constant 0 : index
    %257 = vector.load %arg6[%c0_100, %c0_101, %c0_102] : memref<36x8x288xf32, #tpu.memory_space<vmem>>, vector<1x8x288xf32>
    %258 = vector.shape_cast %257 : vector<1x8x288xf32> to vector<8x288xf32>
    %259 = arith.mulf %258, %256 : vector<8x288xf32>
    %260 = arith.addf %221, %259 : vector<8x288xf32>
    %c1_103 = arith.constant 1 : index
    %c0_104 = arith.constant 0 : index
    %261 = tpu.strided_load %arg5[%c1_103, %c0_104] {strides = array<i32: 0, 1>} : memref<12x342xf32, #tpu.memory_space<vmem>>, vector<8x288xf32>
    %c1_105 = arith.constant 1 : index
    %c0_106 = arith.constant 0 : index
    %c0_107 = arith.constant 0 : index
    %262 = vector.load %arg6[%c1_105, %c0_106, %c0_107] : memref<36x8x288xf32, #tpu.memory_space<vmem>>, vector<1x8x288xf32>
    %263 = vector.shape_cast %262 : vector<1x8x288xf32> to vector<8x288xf32>
    %264 = arith.mulf %263, %261 : vector<8x288xf32>
    %265 = arith.addf %260, %264 : vector<8x288xf32>
    %c2_108 = arith.constant 2 : index
    %c0_109 = arith.constant 0 : index
    %266 = tpu.strided_load %arg5[%c2_108, %c0_109] {strides = array<i32: 0, 1>} : memref<12x342xf32, #tpu.memory_space<vmem>>, vector<8x288xf32>
    %c2_110 = arith.constant 2 : index
    %c0_111 = arith.constant 0 : index
    %c0_112 = arith.constant 0 : index
    %267 = vector.load %arg6[%c2_110, %c0_111, %c0_112] : memref<36x8x288xf32, #tpu.memory_space<vmem>>, vector<1x8x288xf32>
    %268 = vector.shape_cast %267 : vector<1x8x288xf32> to vector<8x288xf32>
    %269 = arith.mulf %268, %266 : vector<8x288xf32>
    %270 = arith.addf %265, %269 : vector<8x288xf32>
    %c3_113 = arith.constant 3 : index
    %c0_114 = arith.constant 0 : index
    %271 = tpu.strided_load %arg5[%c3_113, %c0_114] {strides = array<i32: 0, 1>} : memref<12x342xf32, #tpu.memory_space<vmem>>, vector<8x288xf32>
    %c3_115 = arith.constant 3 : index
    %c0_116 = arith.constant 0 : index
    %c0_117 = arith.constant 0 : index
    %272 = vector.load %arg6[%c3_115, %c0_116, %c0_117] : memref<36x8x288xf32, #tpu.memory_space<vmem>>, vector<1x8x288xf32>
    %273 = vector.shape_cast %272 : vector<1x8x288xf32> to vector<8x288xf32>
    %274 = arith.mulf %273, %271 : vector<8x288xf32>
    %275 = arith.addf %270, %274 : vector<8x288xf32>
    %c0_118 = arith.constant 0 : index
    %c1_119 = arith.constant 1 : index
    %276 = tpu.strided_load %arg5[%c0_118, %c1_119] {strides = array<i32: 0, 1>} : memref<12x342xf32, #tpu.memory_space<vmem>>, vector<8x288xf32>
    %c4_120 = arith.constant 4 : index
    %c0_121 = arith.constant 0 : index
    %c0_122 = arith.constant 0 : index
    %277 = vector.load %arg6[%c4_120, %c0_121, %c0_122] : memref<36x8x288xf32, #tpu.memory_space<vmem>>, vector<1x8x288xf32>
    %278 = vector.shape_cast %277 : vector<1x8x288xf32> to vector<8x288xf32>
    %279 = arith.mulf %278, %276 : vector<8x288xf32>
    %280 = arith.addf %275, %279 : vector<8x288xf32>
    %c1_123 = arith.constant 1 : index
    %c1_124 = arith.constant 1 : index
    %281 = tpu.strided_load %arg5[%c1_123, %c1_124] {strides = array<i32: 0, 1>} : memref<12x342xf32, #tpu.memory_space<vmem>>, vector<8x288xf32>
    %c5_125 = arith.constant 5 : index
    %c0_126 = arith.constant 0 : index
    %c0_127 = arith.constant 0 : index
    %282 = vector.load %arg6[%c5_125, %c0_126, %c0_127] : memref<36x8x288xf32, #tpu.memory_space<vmem>>, vector<1x8x288xf32>
    %283 = vector.shape_cast %282 : vector<1x8x288xf32> to vector<8x288xf32>
    %284 = arith.mulf %283, %281 : vector<8x288xf32>
    %285 = arith.addf %280, %284 : vector<8x288xf32>
    %c2_128 = arith.constant 2 : index
    %c1_129 = arith.constant 1 : index
    %286 = tpu.strided_load %arg5[%c2_128, %c1_129] {strides = array<i32: 0, 1>} : memref<12x342xf32, #tpu.memory_space<vmem>>, vector<8x288xf32>
    %c6_130 = arith.constant 6 : index
    %c0_131 = arith.constant 0 : index
    %c0_132 = arith.constant 0 : index
    %287 = vector.load %arg6[%c6_130, %c0_131, %c0_132] : memref<36x8x288xf32, #tpu.memory_space<vmem>>, vector<1x8x288xf32>
    %288 = vector.shape_cast %287 : vector<1x8x288xf32> to vector<8x288xf32>
    %289 = arith.mulf %288, %286 : vector<8x288xf32>
    %290 = arith.addf %285, %289 : vector<8x288xf32>
    %c3_133 = arith.constant 3 : index
    %c1_134 = arith.constant 1 : index
    %291 = tpu.strided_load %arg5[%c3_133, %c1_134] {strides = array<i32: 0, 1>} : memref<12x342xf32, #tpu.memory_space<vmem>>, vector<8x288xf32>
    %c7_135 = arith.constant 7 : index
    %c0_136 = arith.constant 0 : index
    %c0_137 = arith.constant 0 : index
    %292 = vector.load %arg6[%c7_135, %c0_136, %c0_137] : memref<36x8x288xf32, #tpu.memory_space<vmem>>, vector<1x8x288xf32>
    %293 = vector.shape_cast %292 : vector<1x8x288xf32> to vector<8x288xf32>
    %294 = arith.mulf %293, %291 : vector<8x288xf32>
    %295 = arith.addf %290, %294 : vector<8x288xf32>
    %c0_138 = arith.constant 0 : index
    %c2_139 = arith.constant 2 : index
    %296 = tpu.strided_load %arg5[%c0_138, %c2_139] {strides = array<i32: 0, 1>} : memref<12x342xf32, #tpu.memory_space<vmem>>, vector<8x288xf32>
    %c8_140 = arith.constant 8 : index
    %c0_141 = arith.constant 0 : index
    %c0_142 = arith.constant 0 : index
    %297 = vector.load %arg6[%c8_140, %c0_141, %c0_142] : memref<36x8x288xf32, #tpu.memory_space<vmem>>, vector<1x8x288xf32>
    %298 = vector.shape_cast %297 : vector<1x8x288xf32> to vector<8x288xf32>
    %299 = arith.mulf %298, %296 : vector<8x288xf32>
    %300 = arith.addf %295, %299 : vector<8x288xf32>
    %c1_143 = arith.constant 1 : index
    %c2_144 = arith.constant 2 : index
    %301 = tpu.strided_load %arg5[%c1_143, %c2_144] {strides = array<i32: 0, 1>} : memref<12x342xf32, #tpu.memory_space<vmem>>, vector<8x288xf32>
    %c9_145 = arith.constant 9 : index
    %c0_146 = arith.constant 0 : index
    %c0_147 = arith.constant 0 : index
    %302 = vector.load %arg6[%c9_145, %c0_146, %c0_147] : memref<36x8x288xf32, #tpu.memory_space<vmem>>, vector<1x8x288xf32>
    %303 = vector.shape_cast %302 : vector<1x8x288xf32> to vector<8x288xf32>
    %304 = arith.mulf %303, %301 : vector<8x288xf32>
    %305 = arith.addf %300, %304 : vector<8x288xf32>
    %c2_148 = arith.constant 2 : index
    %c2_149 = arith.constant 2 : index
    %306 = tpu.strided_load %arg5[%c2_148, %c2_149] {strides = array<i32: 0, 1>} : memref<12x342xf32, #tpu.memory_space<vmem>>, vector<8x288xf32>
    %c10_150 = arith.constant 10 : index
    %c0_151 = arith.constant 0 : index
    %c0_152 = arith.constant 0 : index
    %307 = vector.load %arg6[%c10_150, %c0_151, %c0_152] : memref<36x8x288xf32, #tpu.memory_space<vmem>>, vector<1x8x288xf32>
    %308 = vector.shape_cast %307 : vector<1x8x288xf32> to vector<8x288xf32>
    %309 = arith.mulf %308, %306 : vector<8x288xf32>
    %310 = arith.addf %305, %309 : vector<8x288xf32>
    %c3_153 = arith.constant 3 : index
    %c2_154 = arith.constant 2 : index
    %311 = tpu.strided_load %arg5[%c3_153, %c2_154] {strides = array<i32: 0, 1>} : memref<12x342xf32, #tpu.memory_space<vmem>>, vector<8x288xf32>
    %c11_155 = arith.constant 11 : index
    %c0_156 = arith.constant 0 : index
    %c0_157 = arith.constant 0 : index
    %312 = vector.load %arg6[%c11_155, %c0_156, %c0_157] : memref<36x8x288xf32, #tpu.memory_space<vmem>>, vector<1x8x288xf32>
    %313 = vector.shape_cast %312 : vector<1x8x288xf32> to vector<8x288xf32>
    %314 = arith.mulf %313, %311 : vector<8x288xf32>
    %315 = arith.addf %310, %314 : vector<8x288xf32>
    %c0_158 = arith.constant 0 : index
    %c18_159 = arith.constant 18 : index
    %316 = tpu.strided_load %arg5[%c0_158, %c18_159] {strides = array<i32: 0, 1>} : memref<12x342xf32, #tpu.memory_space<vmem>>, vector<8x288xf32>
    %c12_160 = arith.constant 12 : index
    %c0_161 = arith.constant 0 : index
    %c0_162 = arith.constant 0 : index
    %317 = vector.load %arg6[%c12_160, %c0_161, %c0_162] : memref<36x8x288xf32, #tpu.memory_space<vmem>>, vector<1x8x288xf32>
    %318 = vector.shape_cast %317 : vector<1x8x288xf32> to vector<8x288xf32>
    %319 = arith.mulf %318, %316 : vector<8x288xf32>
    %320 = arith.addf %315, %319 : vector<8x288xf32>
    %c1_163 = arith.constant 1 : index
    %c18_164 = arith.constant 18 : index
    %321 = tpu.strided_load %arg5[%c1_163, %c18_164] {strides = array<i32: 0, 1>} : memref<12x342xf32, #tpu.memory_space<vmem>>, vector<8x288xf32>
    %c13_165 = arith.constant 13 : index
    %c0_166 = arith.constant 0 : index
    %c0_167 = arith.constant 0 : index
    %322 = vector.load %arg6[%c13_165, %c0_166, %c0_167] : memref<36x8x288xf32, #tpu.memory_space<vmem>>, vector<1x8x288xf32>
    %323 = vector.shape_cast %322 : vector<1x8x288xf32> to vector<8x288xf32>
    %324 = arith.mulf %323, %321 : vector<8x288xf32>
    %325 = arith.addf %320, %324 : vector<8x288xf32>
    %c2_168 = arith.constant 2 : index
    %c18_169 = arith.constant 18 : index
    %326 = tpu.strided_load %arg5[%c2_168, %c18_169] {strides = array<i32: 0, 1>} : memref<12x342xf32, #tpu.memory_space<vmem>>, vector<8x288xf32>
    %c14_170 = arith.constant 14 : index
    %c0_171 = arith.constant 0 : index
    %c0_172 = arith.constant 0 : index
    %327 = vector.load %arg6[%c14_170, %c0_171, %c0_172] : memref<36x8x288xf32, #tpu.memory_space<vmem>>, vector<1x8x288xf32>
    %328 = vector.shape_cast %327 : vector<1x8x288xf32> to vector<8x288xf32>
    %329 = arith.mulf %328, %326 : vector<8x288xf32>
    %330 = arith.addf %325, %329 : vector<8x288xf32>
    %c3_173 = arith.constant 3 : index
    %c18_174 = arith.constant 18 : index
    %331 = tpu.strided_load %arg5[%c3_173, %c18_174] {strides = array<i32: 0, 1>} : memref<12x342xf32, #tpu.memory_space<vmem>>, vector<8x288xf32>
    %c15_175 = arith.constant 15 : index
    %c0_176 = arith.constant 0 : index
    %c0_177 = arith.constant 0 : index
    %332 = vector.load %arg6[%c15_175, %c0_176, %c0_177] : memref<36x8x288xf32, #tpu.memory_space<vmem>>, vector<1x8x288xf32>
    %333 = vector.shape_cast %332 : vector<1x8x288xf32> to vector<8x288xf32>
    %334 = arith.mulf %333, %331 : vector<8x288xf32>
    %335 = arith.addf %330, %334 : vector<8x288xf32>
    %c0_178 = arith.constant 0 : index
    %c19_179 = arith.constant 19 : index
    %336 = tpu.strided_load %arg5[%c0_178, %c19_179] {strides = array<i32: 0, 1>} : memref<12x342xf32, #tpu.memory_space<vmem>>, vector<8x288xf32>
    %c16_180 = arith.constant 16 : index
    %c0_181 = arith.constant 0 : index
    %c0_182 = arith.constant 0 : index
    %337 = vector.load %arg6[%c16_180, %c0_181, %c0_182] : memref<36x8x288xf32, #tpu.memory_space<vmem>>, vector<1x8x288xf32>
    %338 = vector.shape_cast %337 : vector<1x8x288xf32> to vector<8x288xf32>
    %339 = arith.mulf %338, %336 : vector<8x288xf32>
    %340 = arith.addf %335, %339 : vector<8x288xf32>
    %c1_183 = arith.constant 1 : index
    %c19_184 = arith.constant 19 : index
    %341 = tpu.strided_load %arg5[%c1_183, %c19_184] {strides = array<i32: 0, 1>} : memref<12x342xf32, #tpu.memory_space<vmem>>, vector<8x288xf32>
    %c17_185 = arith.constant 17 : index
    %c0_186 = arith.constant 0 : index
    %c0_187 = arith.constant 0 : index
    %342 = vector.load %arg6[%c17_185, %c0_186, %c0_187] : memref<36x8x288xf32, #tpu.memory_space<vmem>>, vector<1x8x288xf32>
    %343 = vector.shape_cast %342 : vector<1x8x288xf32> to vector<8x288xf32>
    %344 = arith.mulf %343, %341 : vector<8x288xf32>
    %345 = arith.addf %340, %344 : vector<8x288xf32>
    %c2_188 = arith.constant 2 : index
    %c19_189 = arith.constant 19 : index
    %346 = tpu.strided_load %arg5[%c2_188, %c19_189] {strides = array<i32: 0, 1>} : memref<12x342xf32, #tpu.memory_space<vmem>>, vector<8x288xf32>
    %c18_190 = arith.constant 18 : index
    %c0_191 = arith.constant 0 : index
    %c0_192 = arith.constant 0 : index
    %347 = vector.load %arg6[%c18_190, %c0_191, %c0_192] : memref<36x8x288xf32, #tpu.memory_space<vmem>>, vector<1x8x288xf32>
    %348 = vector.shape_cast %347 : vector<1x8x288xf32> to vector<8x288xf32>
    %349 = arith.mulf %348, %346 : vector<8x288xf32>
    %350 = arith.addf %345, %349 : vector<8x288xf32>
    %c3_193 = arith.constant 3 : index
    %c19_194 = arith.constant 19 : index
    %351 = tpu.strided_load %arg5[%c3_193, %c19_194] {strides = array<i32: 0, 1>} : memref<12x342xf32, #tpu.memory_space<vmem>>, vector<8x288xf32>
    %c19_195 = arith.constant 19 : index
    %c0_196 = arith.constant 0 : index
    %c0_197 = arith.constant 0 : index
    %352 = vector.load %arg6[%c19_195, %c0_196, %c0_197] : memref<36x8x288xf32, #tpu.memory_space<vmem>>, vector<1x8x288xf32>
    %353 = vector.shape_cast %352 : vector<1x8x288xf32> to vector<8x288xf32>
    %354 = arith.mulf %353, %351 : vector<8x288xf32>
    %355 = arith.addf %350, %354 : vector<8x288xf32>
    %c0_198 = arith.constant 0 : index
    %c20_199 = arith.constant 20 : index
    %356 = tpu.strided_load %arg5[%c0_198, %c20_199] {strides = array<i32: 0, 1>} : memref<12x342xf32, #tpu.memory_space<vmem>>, vector<8x288xf32>
    %c20_200 = arith.constant 20 : index
    %c0_201 = arith.constant 0 : index
    %c0_202 = arith.constant 0 : index
    %357 = vector.load %arg6[%c20_200, %c0_201, %c0_202] : memref<36x8x288xf32, #tpu.memory_space<vmem>>, vector<1x8x288xf32>
    %358 = vector.shape_cast %357 : vector<1x8x288xf32> to vector<8x288xf32>
    %359 = arith.mulf %358, %356 : vector<8x288xf32>
    %360 = arith.addf %355, %359 : vector<8x288xf32>
    %c1_203 = arith.constant 1 : index
    %c20_204 = arith.constant 20 : index
    %361 = tpu.strided_load %arg5[%c1_203, %c20_204] {strides = array<i32: 0, 1>} : memref<12x342xf32, #tpu.memory_space<vmem>>, vector<8x288xf32>
    %c21_205 = arith.constant 21 : index
    %c0_206 = arith.constant 0 : index
    %c0_207 = arith.constant 0 : index
    %362 = vector.load %arg6[%c21_205, %c0_206, %c0_207] : memref<36x8x288xf32, #tpu.memory_space<vmem>>, vector<1x8x288xf32>
    %363 = vector.shape_cast %362 : vector<1x8x288xf32> to vector<8x288xf32>
    %364 = arith.mulf %363, %361 : vector<8x288xf32>
    %365 = arith.addf %360, %364 : vector<8x288xf32>
    %c2_208 = arith.constant 2 : index
    %c20_209 = arith.constant 20 : index
    %366 = tpu.strided_load %arg5[%c2_208, %c20_209] {strides = array<i32: 0, 1>} : memref<12x342xf32, #tpu.memory_space<vmem>>, vector<8x288xf32>
    %c22_210 = arith.constant 22 : index
    %c0_211 = arith.constant 0 : index
    %c0_212 = arith.constant 0 : index
    %367 = vector.load %arg6[%c22_210, %c0_211, %c0_212] : memref<36x8x288xf32, #tpu.memory_space<vmem>>, vector<1x8x288xf32>
    %368 = vector.shape_cast %367 : vector<1x8x288xf32> to vector<8x288xf32>
    %369 = arith.mulf %368, %366 : vector<8x288xf32>
    %370 = arith.addf %365, %369 : vector<8x288xf32>
    %c3_213 = arith.constant 3 : index
    %c20_214 = arith.constant 20 : index
    %371 = tpu.strided_load %arg5[%c3_213, %c20_214] {strides = array<i32: 0, 1>} : memref<12x342xf32, #tpu.memory_space<vmem>>, vector<8x288xf32>
    %c23_215 = arith.constant 23 : index
    %c0_216 = arith.constant 0 : index
    %c0_217 = arith.constant 0 : index
    %372 = vector.load %arg6[%c23_215, %c0_216, %c0_217] : memref<36x8x288xf32, #tpu.memory_space<vmem>>, vector<1x8x288xf32>
    %373 = vector.shape_cast %372 : vector<1x8x288xf32> to vector<8x288xf32>
    %374 = arith.mulf %373, %371 : vector<8x288xf32>
    %375 = arith.addf %370, %374 : vector<8x288xf32>
    %c0_218 = arith.constant 0 : index
    %c36 = arith.constant 36 : index
    %376 = tpu.strided_load %arg5[%c0_218, %c36] {strides = array<i32: 0, 1>} : memref<12x342xf32, #tpu.memory_space<vmem>>, vector<8x288xf32>
    %c24_219 = arith.constant 24 : index
    %c0_220 = arith.constant 0 : index
    %c0_221 = arith.constant 0 : index
    %377 = vector.load %arg6[%c24_219, %c0_220, %c0_221] : memref<36x8x288xf32, #tpu.memory_space<vmem>>, vector<1x8x288xf32>
    %378 = vector.shape_cast %377 : vector<1x8x288xf32> to vector<8x288xf32>
    %379 = arith.mulf %378, %376 : vector<8x288xf32>
    %380 = arith.addf %375, %379 : vector<8x288xf32>
    %c1_222 = arith.constant 1 : index
    %c36_223 = arith.constant 36 : index
    %381 = tpu.strided_load %arg5[%c1_222, %c36_223] {strides = array<i32: 0, 1>} : memref<12x342xf32, #tpu.memory_space<vmem>>, vector<8x288xf32>
    %c25_224 = arith.constant 25 : index
    %c0_225 = arith.constant 0 : index
    %c0_226 = arith.constant 0 : index
    %382 = vector.load %arg6[%c25_224, %c0_225, %c0_226] : memref<36x8x288xf32, #tpu.memory_space<vmem>>, vector<1x8x288xf32>
    %383 = vector.shape_cast %382 : vector<1x8x288xf32> to vector<8x288xf32>
    %384 = arith.mulf %383, %381 : vector<8x288xf32>
    %385 = arith.addf %380, %384 : vector<8x288xf32>
    %c2_227 = arith.constant 2 : index
    %c36_228 = arith.constant 36 : index
    %386 = tpu.strided_load %arg5[%c2_227, %c36_228] {strides = array<i32: 0, 1>} : memref<12x342xf32, #tpu.memory_space<vmem>>, vector<8x288xf32>
    %c26_229 = arith.constant 26 : index
    %c0_230 = arith.constant 0 : index
    %c0_231 = arith.constant 0 : index
    %387 = vector.load %arg6[%c26_229, %c0_230, %c0_231] : memref<36x8x288xf32, #tpu.memory_space<vmem>>, vector<1x8x288xf32>
    %388 = vector.shape_cast %387 : vector<1x8x288xf32> to vector<8x288xf32>
    %389 = arith.mulf %388, %386 : vector<8x288xf32>
    %390 = arith.addf %385, %389 : vector<8x288xf32>
    %c3_232 = arith.constant 3 : index
    %c36_233 = arith.constant 36 : index
    %391 = tpu.strided_load %arg5[%c3_232, %c36_233] {strides = array<i32: 0, 1>} : memref<12x342xf32, #tpu.memory_space<vmem>>, vector<8x288xf32>
    %c27_234 = arith.constant 27 : index
    %c0_235 = arith.constant 0 : index
    %c0_236 = arith.constant 0 : index
    %392 = vector.load %arg6[%c27_234, %c0_235, %c0_236] : memref<36x8x288xf32, #tpu.memory_space<vmem>>, vector<1x8x288xf32>
    %393 = vector.shape_cast %392 : vector<1x8x288xf32> to vector<8x288xf32>
    %394 = arith.mulf %393, %391 : vector<8x288xf32>
    %395 = arith.addf %390, %394 : vector<8x288xf32>
    %c0_237 = arith.constant 0 : index
    %c37_238 = arith.constant 37 : index
    %396 = tpu.strided_load %arg5[%c0_237, %c37_238] {strides = array<i32: 0, 1>} : memref<12x342xf32, #tpu.memory_space<vmem>>, vector<8x288xf32>
    %c28_239 = arith.constant 28 : index
    %c0_240 = arith.constant 0 : index
    %c0_241 = arith.constant 0 : index
    %397 = vector.load %arg6[%c28_239, %c0_240, %c0_241] : memref<36x8x288xf32, #tpu.memory_space<vmem>>, vector<1x8x288xf32>
    %398 = vector.shape_cast %397 : vector<1x8x288xf32> to vector<8x288xf32>
    %399 = arith.mulf %398, %396 : vector<8x288xf32>
    %400 = arith.addf %395, %399 : vector<8x288xf32>
    %c1_242 = arith.constant 1 : index
    %c37_243 = arith.constant 37 : index
    %401 = tpu.strided_load %arg5[%c1_242, %c37_243] {strides = array<i32: 0, 1>} : memref<12x342xf32, #tpu.memory_space<vmem>>, vector<8x288xf32>
    %c29_244 = arith.constant 29 : index
    %c0_245 = arith.constant 0 : index
    %c0_246 = arith.constant 0 : index
    %402 = vector.load %arg6[%c29_244, %c0_245, %c0_246] : memref<36x8x288xf32, #tpu.memory_space<vmem>>, vector<1x8x288xf32>
    %403 = vector.shape_cast %402 : vector<1x8x288xf32> to vector<8x288xf32>
    %404 = arith.mulf %403, %401 : vector<8x288xf32>
    %405 = arith.addf %400, %404 : vector<8x288xf32>
    %c2_247 = arith.constant 2 : index
    %c37_248 = arith.constant 37 : index
    %406 = tpu.strided_load %arg5[%c2_247, %c37_248] {strides = array<i32: 0, 1>} : memref<12x342xf32, #tpu.memory_space<vmem>>, vector<8x288xf32>
    %c30_249 = arith.constant 30 : index
    %c0_250 = arith.constant 0 : index
    %c0_251 = arith.constant 0 : index
    %407 = vector.load %arg6[%c30_249, %c0_250, %c0_251] : memref<36x8x288xf32, #tpu.memory_space<vmem>>, vector<1x8x288xf32>
    %408 = vector.shape_cast %407 : vector<1x8x288xf32> to vector<8x288xf32>
    %409 = arith.mulf %408, %406 : vector<8x288xf32>
    %410 = arith.addf %405, %409 : vector<8x288xf32>
    %c3_252 = arith.constant 3 : index
    %c37_253 = arith.constant 37 : index
    %411 = tpu.strided_load %arg5[%c3_252, %c37_253] {strides = array<i32: 0, 1>} : memref<12x342xf32, #tpu.memory_space<vmem>>, vector<8x288xf32>
    %c31_254 = arith.constant 31 : index
    %c0_255 = arith.constant 0 : index
    %c0_256 = arith.constant 0 : index
    %412 = vector.load %arg6[%c31_254, %c0_255, %c0_256] : memref<36x8x288xf32, #tpu.memory_space<vmem>>, vector<1x8x288xf32>
    %413 = vector.shape_cast %412 : vector<1x8x288xf32> to vector<8x288xf32>
    %414 = arith.mulf %413, %411 : vector<8x288xf32>
    %415 = arith.addf %410, %414 : vector<8x288xf32>
    %c0_257 = arith.constant 0 : index
    %c38 = arith.constant 38 : index
    %416 = tpu.strided_load %arg5[%c0_257, %c38] {strides = array<i32: 0, 1>} : memref<12x342xf32, #tpu.memory_space<vmem>>, vector<8x288xf32>
    %c32_258 = arith.constant 32 : index
    %c0_259 = arith.constant 0 : index
    %c0_260 = arith.constant 0 : index
    %417 = vector.load %arg6[%c32_258, %c0_259, %c0_260] : memref<36x8x288xf32, #tpu.memory_space<vmem>>, vector<1x8x288xf32>
    %418 = vector.shape_cast %417 : vector<1x8x288xf32> to vector<8x288xf32>
    %419 = arith.mulf %418, %416 : vector<8x288xf32>
    %420 = arith.addf %415, %419 : vector<8x288xf32>
    %c1_261 = arith.constant 1 : index
    %c38_262 = arith.constant 38 : index
    %421 = tpu.strided_load %arg5[%c1_261, %c38_262] {strides = array<i32: 0, 1>} : memref<12x342xf32, #tpu.memory_space<vmem>>, vector<8x288xf32>
    %c33_263 = arith.constant 33 : index
    %c0_264 = arith.constant 0 : index
    %c0_265 = arith.constant 0 : index
    %422 = vector.load %arg6[%c33_263, %c0_264, %c0_265] : memref<36x8x288xf32, #tpu.memory_space<vmem>>, vector<1x8x288xf32>
    %423 = vector.shape_cast %422 : vector<1x8x288xf32> to vector<8x288xf32>
    %424 = arith.mulf %423, %421 : vector<8x288xf32>
    %425 = arith.addf %420, %424 : vector<8x288xf32>
    %c2_266 = arith.constant 2 : index
    %c38_267 = arith.constant 38 : index
    %426 = tpu.strided_load %arg5[%c2_266, %c38_267] {strides = array<i32: 0, 1>} : memref<12x342xf32, #tpu.memory_space<vmem>>, vector<8x288xf32>
    %c34_268 = arith.constant 34 : index
    %c0_269 = arith.constant 0 : index
    %c0_270 = arith.constant 0 : index
    %427 = vector.load %arg6[%c34_268, %c0_269, %c0_270] : memref<36x8x288xf32, #tpu.memory_space<vmem>>, vector<1x8x288xf32>
    %428 = vector.shape_cast %427 : vector<1x8x288xf32> to vector<8x288xf32>
    %429 = arith.mulf %428, %426 : vector<8x288xf32>
    %430 = arith.addf %425, %429 : vector<8x288xf32>
    %c3_271 = arith.constant 3 : index
    %c38_272 = arith.constant 38 : index
    %431 = tpu.strided_load %arg5[%c3_271, %c38_272] {strides = array<i32: 0, 1>} : memref<12x342xf32, #tpu.memory_space<vmem>>, vector<8x288xf32>
    %c35_273 = arith.constant 35 : index
    %c0_274 = arith.constant 0 : index
    %c0_275 = arith.constant 0 : index
    %432 = vector.load %arg6[%c35_273, %c0_274, %c0_275] : memref<36x8x288xf32, #tpu.memory_space<vmem>>, vector<1x8x288xf32>
    %433 = vector.shape_cast %432 : vector<1x8x288xf32> to vector<8x288xf32>
    %434 = arith.mulf %433, %431 : vector<8x288xf32>
    %435 = arith.addf %430, %434 : vector<8x288xf32>
    %436 = vector.extract_strided_slice %435 {offsets = [0, 0], sizes = [8, 16], strides = [1, 1]} : vector<8x288xf32> to vector<8x16xf32>
    %c0_276 = arith.constant 0 : index
    %c0_277 = arith.constant 0 : index
    %c0_278 = arith.constant 0 : index
    %437 = vector.load %arg4[%c0_276, %c0_277, %c0_278] : memref<1x8x256xf32, #tpu.memory_space<vmem>>, vector<1x8x16xf32>
    %438 = vector.shape_cast %437 : vector<1x8x16xf32> to vector<8x16xf32>
    %439 = vector.shape_cast %436 : vector<8x16xf32> to vector<1x8x16xf32>
    tpu.vector_store %arg4[%c0_276, %c0_277, %c0_278], %439 {strides = array<i32>} : memref<1x8x256xf32, #tpu.memory_space<vmem>>, vector<1x8x16xf32>,
    %440 = vector.extract_strided_slice %435 {offsets = [0, 18], sizes = [8, 16], strides = [1, 1]} : vector<8x288xf32> to vector<8x16xf32>
    %c0_279 = arith.constant 0 : index
    %c0_280 = arith.constant 0 : index
    %c16_281 = arith.constant 16 : index
    %441 = vector.load %arg4[%c0_279, %c0_280, %c16_281] : memref<1x8x256xf32, #tpu.memory_space<vmem>>, vector<1x8x16xf32>
    %442 = vector.shape_cast %441 : vector<1x8x16xf32> to vector<8x16xf32>
    %443 = vector.shape_cast %440 : vector<8x16xf32> to vector<1x8x16xf32>
    tpu.vector_store %arg4[%c0_279, %c0_280, %c16_281], %443 {strides = array<i32>} : memref<1x8x256xf32, #tpu.memory_space<vmem>>, vector<1x8x16xf32>,
    %444 = vector.extract_strided_slice %435 {offsets = [0, 36], sizes = [8, 16], strides = [1, 1]} : vector<8x288xf32> to vector<8x16xf32>
    %c0_282 = arith.constant 0 : index
    %c0_283 = arith.constant 0 : index
    %c32_284 = arith.constant 32 : index
    %445 = vector.load %arg4[%c0_282, %c0_283, %c32_284] : memref<1x8x256xf32, #tpu.memory_space<vmem>>, vector<1x8x16xf32>
    %446 = vector.shape_cast %445 : vector<1x8x16xf32> to vector<8x16xf32>
    %447 = vector.shape_cast %444 : vector<8x16xf32> to vector<1x8x16xf32>
    tpu.vector_store %arg4[%c0_282, %c0_283, %c32_284], %447 {strides = array<i32>} : memref<1x8x256xf32, #tpu.memory_space<vmem>>, vector<1x8x16xf32>,
    %448 = vector.extract_strided_slice %435 {offsets = [0, 54], sizes = [8, 16], strides = [1, 1]} : vector<8x288xf32> to vector<8x16xf32>
    %c0_285 = arith.constant 0 : index
    %c0_286 = arith.constant 0 : index
    %c48 = arith.constant 48 : index
    %449 = vector.load %arg4[%c0_285, %c0_286, %c48] : memref<1x8x256xf32, #tpu.memory_space<vmem>>, vector<1x8x16xf32>
    %450 = vector.shape_cast %449 : vector<1x8x16xf32> to vector<8x16xf32>
    %451 = vector.shape_cast %448 : vector<8x16xf32> to vector<1x8x16xf32>
    tpu.vector_store %arg4[%c0_285, %c0_286, %c48], %451 {strides = array<i32>} : memref<1x8x256xf32, #tpu.memory_space<vmem>>, vector<1x8x16xf32>,
    %452 = vector.extract_strided_slice %435 {offsets = [0, 72], sizes = [8, 16], strides = [1, 1]} : vector<8x288xf32> to vector<8x16xf32>
    %c0_287 = arith.constant 0 : index
    %c0_288 = arith.constant 0 : index
    %c64 = arith.constant 64 : index
    %453 = vector.load %arg4[%c0_287, %c0_288, %c64] : memref<1x8x256xf32, #tpu.memory_space<vmem>>, vector<1x8x16xf32>
    %454 = vector.shape_cast %453 : vector<1x8x16xf32> to vector<8x16xf32>
    %455 = vector.shape_cast %452 : vector<8x16xf32> to vector<1x8x16xf32>
    tpu.vector_store %arg4[%c0_287, %c0_288, %c64], %455 {strides = array<i32>} : memref<1x8x256xf32, #tpu.memory_space<vmem>>, vector<1x8x16xf32>,
    %456 = vector.extract_strided_slice %435 {offsets = [0, 90], sizes = [8, 16], strides = [1, 1]} : vector<8x288xf32> to vector<8x16xf32>
    %c0_289 = arith.constant 0 : index
    %c0_290 = arith.constant 0 : index
    %c80 = arith.constant 80 : index
    %457 = vector.load %arg4[%c0_289, %c0_290, %c80] : memref<1x8x256xf32, #tpu.memory_space<vmem>>, vector<1x8x16xf32>
    %458 = vector.shape_cast %457 : vector<1x8x16xf32> to vector<8x16xf32>
    %459 = vector.shape_cast %456 : vector<8x16xf32> to vector<1x8x16xf32>
    tpu.vector_store %arg4[%c0_289, %c0_290, %c80], %459 {strides = array<i32>} : memref<1x8x256xf32, #tpu.memory_space<vmem>>, vector<1x8x16xf32>,
    %460 = vector.extract_strided_slice %435 {offsets = [0, 108], sizes = [8, 16], strides = [1, 1]} : vector<8x288xf32> to vector<8x16xf32>
    %c0_291 = arith.constant 0 : index
    %c0_292 = arith.constant 0 : index
    %c96 = arith.constant 96 : index
    %461 = vector.load %arg4[%c0_291, %c0_292, %c96] : memref<1x8x256xf32, #tpu.memory_space<vmem>>, vector<1x8x16xf32>
    %462 = vector.shape_cast %461 : vector<1x8x16xf32> to vector<8x16xf32>
    %463 = vector.shape_cast %460 : vector<8x16xf32> to vector<1x8x16xf32>
    tpu.vector_store %arg4[%c0_291, %c0_292, %c96], %463 {strides = array<i32>} : memref<1x8x256xf32, #tpu.memory_space<vmem>>, vector<1x8x16xf32>,
    %464 = vector.extract_strided_slice %435 {offsets = [0, 126], sizes = [8, 16], strides = [1, 1]} : vector<8x288xf32> to vector<8x16xf32>
    %c0_293 = arith.constant 0 : index
    %c0_294 = arith.constant 0 : index
    %c112 = arith.constant 112 : index
    %465 = vector.load %arg4[%c0_293, %c0_294, %c112] : memref<1x8x256xf32, #tpu.memory_space<vmem>>, vector<1x8x16xf32>
    %466 = vector.shape_cast %465 : vector<1x8x16xf32> to vector<8x16xf32>
    %467 = vector.shape_cast %464 : vector<8x16xf32> to vector<1x8x16xf32>
    tpu.vector_store %arg4[%c0_293, %c0_294, %c112], %467 {strides = array<i32>} : memref<1x8x256xf32, #tpu.memory_space<vmem>>, vector<1x8x16xf32>,
    %468 = vector.extract_strided_slice %435 {offsets = [0, 144], sizes = [8, 16], strides = [1, 1]} : vector<8x288xf32> to vector<8x16xf32>
    %c0_295 = arith.constant 0 : index
    %c0_296 = arith.constant 0 : index
    %c128 = arith.constant 128 : index
    %469 = vector.load %arg4[%c0_295, %c0_296, %c128] : memref<1x8x256xf32, #tpu.memory_space<vmem>>, vector<1x8x16xf32>
    %470 = vector.shape_cast %469 : vector<1x8x16xf32> to vector<8x16xf32>
    %471 = vector.shape_cast %468 : vector<8x16xf32> to vector<1x8x16xf32>
    tpu.vector_store %arg4[%c0_295, %c0_296, %c128], %471 {strides = array<i32>} : memref<1x8x256xf32, #tpu.memory_space<vmem>>, vector<1x8x16xf32>,
    %472 = vector.extract_strided_slice %435 {offsets = [0, 162], sizes = [8, 16], strides = [1, 1]} : vector<8x288xf32> to vector<8x16xf32>
    %c0_297 = arith.constant 0 : index
    %c0_298 = arith.constant 0 : index
    %c144 = arith.constant 144 : index
    %473 = vector.load %arg4[%c0_297, %c0_298, %c144] : memref<1x8x256xf32, #tpu.memory_space<vmem>>, vector<1x8x16xf32>
    %474 = vector.shape_cast %473 : vector<1x8x16xf32> to vector<8x16xf32>
    %475 = vector.shape_cast %472 : vector<8x16xf32> to vector<1x8x16xf32>
    tpu.vector_store %arg4[%c0_297, %c0_298, %c144], %475 {strides = array<i32>} : memref<1x8x256xf32, #tpu.memory_space<vmem>>, vector<1x8x16xf32>,
    %476 = vector.extract_strided_slice %435 {offsets = [0, 180], sizes = [8, 16], strides = [1, 1]} : vector<8x288xf32> to vector<8x16xf32>
    %c0_299 = arith.constant 0 : index
    %c0_300 = arith.constant 0 : index
    %c160 = arith.constant 160 : index
    %477 = vector.load %arg4[%c0_299, %c0_300, %c160] : memref<1x8x256xf32, #tpu.memory_space<vmem>>, vector<1x8x16xf32>
    %478 = vector.shape_cast %477 : vector<1x8x16xf32> to vector<8x16xf32>
    %479 = vector.shape_cast %476 : vector<8x16xf32> to vector<1x8x16xf32>
    tpu.vector_store %arg4[%c0_299, %c0_300, %c160], %479 {strides = array<i32>} : memref<1x8x256xf32, #tpu.memory_space<vmem>>, vector<1x8x16xf32>,
    %480 = vector.extract_strided_slice %435 {offsets = [0, 198], sizes = [8, 16], strides = [1, 1]} : vector<8x288xf32> to vector<8x16xf32>
    %c0_301 = arith.constant 0 : index
    %c0_302 = arith.constant 0 : index
    %c176 = arith.constant 176 : index
    %481 = vector.load %arg4[%c0_301, %c0_302, %c176] : memref<1x8x256xf32, #tpu.memory_space<vmem>>, vector<1x8x16xf32>
    %482 = vector.shape_cast %481 : vector<1x8x16xf32> to vector<8x16xf32>
    %483 = vector.shape_cast %480 : vector<8x16xf32> to vector<1x8x16xf32>
    tpu.vector_store %arg4[%c0_301, %c0_302, %c176], %483 {strides = array<i32>} : memref<1x8x256xf32, #tpu.memory_space<vmem>>, vector<1x8x16xf32>,
    %484 = vector.extract_strided_slice %435 {offsets = [0, 216], sizes = [8, 16], strides = [1, 1]} : vector<8x288xf32> to vector<8x16xf32>
    %c0_303 = arith.constant 0 : index
    %c0_304 = arith.constant 0 : index
    %c192 = arith.constant 192 : index
    %485 = vector.load %arg4[%c0_303, %c0_304, %c192] : memref<1x8x256xf32, #tpu.memory_space<vmem>>, vector<1x8x16xf32>
    %486 = vector.shape_cast %485 : vector<1x8x16xf32> to vector<8x16xf32>
    %487 = vector.shape_cast %484 : vector<8x16xf32> to vector<1x8x16xf32>
    tpu.vector_store %arg4[%c0_303, %c0_304, %c192], %487 {strides = array<i32>} : memref<1x8x256xf32, #tpu.memory_space<vmem>>, vector<1x8x16xf32>,
    %488 = vector.extract_strided_slice %435 {offsets = [0, 234], sizes = [8, 16], strides = [1, 1]} : vector<8x288xf32> to vector<8x16xf32>
    %c0_305 = arith.constant 0 : index
    %c0_306 = arith.constant 0 : index
    %c208 = arith.constant 208 : index
    %489 = vector.load %arg4[%c0_305, %c0_306, %c208] : memref<1x8x256xf32, #tpu.memory_space<vmem>>, vector<1x8x16xf32>
    %490 = vector.shape_cast %489 : vector<1x8x16xf32> to vector<8x16xf32>
    %491 = vector.shape_cast %488 : vector<8x16xf32> to vector<1x8x16xf32>
    tpu.vector_store %arg4[%c0_305, %c0_306, %c208], %491 {strides = array<i32>} : memref<1x8x256xf32, #tpu.memory_space<vmem>>, vector<1x8x16xf32>,
    %492 = vector.extract_strided_slice %435 {offsets = [0, 252], sizes = [8, 16], strides = [1, 1]} : vector<8x288xf32> to vector<8x16xf32>
    %c0_307 = arith.constant 0 : index
    %c0_308 = arith.constant 0 : index
    %c224 = arith.constant 224 : index
    %493 = vector.load %arg4[%c0_307, %c0_308, %c224] : memref<1x8x256xf32, #tpu.memory_space<vmem>>, vector<1x8x16xf32>
    %494 = vector.shape_cast %493 : vector<1x8x16xf32> to vector<8x16xf32>
    %495 = vector.shape_cast %492 : vector<8x16xf32> to vector<1x8x16xf32>
    tpu.vector_store %arg4[%c0_307, %c0_308, %c224], %495 {strides = array<i32>} : memref<1x8x256xf32, #tpu.memory_space<vmem>>, vector<1x8x16xf32>,
    %496 = vector.extract_strided_slice %435 {offsets = [0, 270], sizes = [8, 16], strides = [1, 1]} : vector<8x288xf32> to vector<8x16xf32>
    %c0_309 = arith.constant 0 : index
    %c0_310 = arith.constant 0 : index
    %c240 = arith.constant 240 : index
    %497 = vector.load %arg4[%c0_309, %c0_310, %c240] : memref<1x8x256xf32, #tpu.memory_space<vmem>>, vector<1x8x16xf32>
    %498 = vector.shape_cast %497 : vector<1x8x16xf32> to vector<8x16xf32>
    %499 = vector.shape_cast %496 : vector<8x16xf32> to vector<1x8x16xf32>
    tpu.vector_store %arg4[%c0_309, %c0_310, %c240], %499 {strides = array<i32>} : memref<1x8x256xf32, #tpu.memory_space<vmem>>, vector<1x8x16xf32>,
    return
  }
  func.func @transform_0(%arg0: i32) -> (i32, i32) {
    %c0_i32 = arith.constant 0 : i32
    %c0_i32_0 = arith.constant 0 : i32
    %c0_i32_1 = arith.constant 0 : i32
    return %c0_i32, %c0_i32_0 : i32, i32
  }
  func.func @transform_1(%arg0: i32) -> (i32, i32) {
    %c0_i32 = arith.constant 0 : i32
    %c0_i32_0 = arith.constant 0 : i32
    %c0_i32_1 = arith.constant 0 : i32
    return %c0_i32, %c0_i32_0 : i32, i32
  }
  func.func @transform_2(%arg0: i32) -> (i32, i32, i32) {
    %c0_i32 = arith.constant 0 : i32
    %c0_i32_0 = arith.constant 0 : i32
    %c0_i32_1 = arith.constant 0 : i32
    return %arg0, %c0_i32, %c0_i32_0 : i32, i32, i32
  }
  func.func @transform_3(%arg0: i32) -> (i32, i32, i32) {
    %c0_i32 = arith.constant 0 : i32
    %c0_i32_0 = arith.constant 0 : i32
    %c0_i32_1 = arith.constant 0 : i32
    return %arg0, %c0_i32, %c0_i32_0 : i32, i32, i32
  }
}

module attributes {stable_mosaic.version = 11 : i64} {
  func.func @_zero_conv2d_kernel(%arg0: i32, %arg1: memref<8x36xf32, #tpu.memory_space<vmem>>, %arg2: memref<8x1xf32, #tpu.memory_space<vmem>>, %arg3: memref<2x4x256xf32, #tpu.memory_space<vmem>>, %arg4: memref<2x8x256xf32, #tpu.memory_space<vmem>>, %arg5: memref<12x342xf32, #tpu.memory_space<vmem>>, %arg6: memref<36x8x288xf32, #tpu.memory_space<vmem>>) attributes {dimension_semantics = [#tpu.dimension_semantics<parallel>], iteration_bounds = array<i64: 1>, scalar_prefetch = 0 : i64, scratch_operands = 2 : i64, tpu.core_type = #tpu.core_type<tc>, window_params = [{pipeline_mode = #tpu.pipeline_mode<synchronous>, transform_indices = @transform_0, window_bounds = array<i64: 8, 36>}, {pipeline_mode = #tpu.pipeline_mode<synchronous>, transform_indices = @transform_1, window_bounds = array<i64: 8, 1>}, {transform_indices = @transform_2, window_bounds = array<i64: 2, 4, 256>}, {transform_indices = @transform_3, window_bounds = array<i64: 2, 8, 256>}]} {
    %cst = arith.constant 1.000000e+00 : f32
    %0 = vector.broadcast %cst : f32 to vector<12x342xf32>
    %c0 = arith.constant 0 : index
    %c0_0 = arith.constant 0 : index
    %1 = vector.load %arg5[%c0, %c0_0] : memref<12x342xf32, #tpu.memory_space<vmem>>, vector<12x342xf32>
    tpu.vector_store %arg5[%c0, %c0_0], %0 {strides = array<i32>} : memref<12x342xf32, #tpu.memory_space<vmem>>, vector<12x342xf32>,
    %c0_1 = arith.constant 0 : index
    %c0_2 = arith.constant 0 : index
    %2 = vector.load %arg1[%c0_1, %c0_2] : memref<8x36xf32, #tpu.memory_space<vmem>>, vector<8x36xf32>
    %3 = vector.extract_strided_slice %2 {offsets = [0, 0], sizes = [8, 1], strides = [1, 1]} : vector<8x36xf32> to vector<8x1xf32>
    %4 = vector.shape_cast %3 : vector<8x1xf32> to vector<8x1xf32>
    %5 = vector.broadcast %4 : vector<8x1xf32> to vector<8x288xf32>
    %c0_3 = arith.constant 0 : index
    %c0_4 = arith.constant 0 : index
    %c0_5 = arith.constant 0 : index
    %6 = vector.load %arg6[%c0_3, %c0_4, %c0_5] : memref<36x8x288xf32, #tpu.memory_space<vmem>>, vector<1x8x288xf32>
    %7 = vector.shape_cast %6 : vector<1x8x288xf32> to vector<8x288xf32>
    %8 = vector.shape_cast %5 : vector<8x288xf32> to vector<1x8x288xf32>
    tpu.vector_store %arg6[%c0_3, %c0_4, %c0_5], %8 {strides = array<i32>} : memref<36x8x288xf32, #tpu.memory_space<vmem>>, vector<1x8x288xf32>,
    %9 = vector.extract_strided_slice %2 {offsets = [0, 1], sizes = [8, 1], strides = [1, 1]} : vector<8x36xf32> to vector<8x1xf32>
    %10 = vector.shape_cast %9 : vector<8x1xf32> to vector<8x1xf32>
    %11 = vector.broadcast %10 : vector<8x1xf32> to vector<8x288xf32>
    %c1 = arith.constant 1 : index
    %c0_6 = arith.constant 0 : index
    %c0_7 = arith.constant 0 : index
    %12 = vector.load %arg6[%c1, %c0_6, %c0_7] : memref<36x8x288xf32, #tpu.memory_space<vmem>>, vector<1x8x288xf32>
    %13 = vector.shape_cast %12 : vector<1x8x288xf32> to vector<8x288xf32>
    %14 = vector.shape_cast %11 : vector<8x288xf32> to vector<1x8x288xf32>
    tpu.vector_store %arg6[%c1, %c0_6, %c0_7], %14 {strides = array<i32>} : memref<36x8x288xf32, #tpu.memory_space<vmem>>, vector<1x8x288xf32>,
    %15 = vector.extract_strided_slice %2 {offsets = [0, 2], sizes = [8, 1], strides = [1, 1]} : vector<8x36xf32> to vector<8x1xf32>
    %16 = vector.shape_cast %15 : vector<8x1xf32> to vector<8x1xf32>
    %17 = vector.broadcast %16 : vector<8x1xf32> to vector<8x288xf32>
    %c2 = arith.constant 2 : index
    %c0_8 = arith.constant 0 : index
    %c0_9 = arith.constant 0 : index
    %18 = vector.load %arg6[%c2, %c0_8, %c0_9] : memref<36x8x288xf32, #tpu.memory_space<vmem>>, vector<1x8x288xf32>
    %19 = vector.shape_cast %18 : vector<1x8x288xf32> to vector<8x288xf32>
    %20 = vector.shape_cast %17 : vector<8x288xf32> to vector<1x8x288xf32>
    tpu.vector_store %arg6[%c2, %c0_8, %c0_9], %20 {strides = array<i32>} : memref<36x8x288xf32, #tpu.memory_space<vmem>>, vector<1x8x288xf32>,
    %21 = vector.extract_strided_slice %2 {offsets = [0, 3], sizes = [8, 1], strides = [1, 1]} : vector<8x36xf32> to vector<8x1xf32>
    %22 = vector.shape_cast %21 : vector<8x1xf32> to vector<8x1xf32>
    %23 = vector.broadcast %22 : vector<8x1xf32> to vector<8x288xf32>
    %c3 = arith.constant 3 : index
    %c0_10 = arith.constant 0 : index
    %c0_11 = arith.constant 0 : index
    %24 = vector.load %arg6[%c3, %c0_10, %c0_11] : memref<36x8x288xf32, #tpu.memory_space<vmem>>, vector<1x8x288xf32>
    %25 = vector.shape_cast %24 : vector<1x8x288xf32> to vector<8x288xf32>
    %26 = vector.shape_cast %23 : vector<8x288xf32> to vector<1x8x288xf32>
    tpu.vector_store %arg6[%c3, %c0_10, %c0_11], %26 {strides = array<i32>} : memref<36x8x288xf32, #tpu.memory_space<vmem>>, vector<1x8x288xf32>,
    %27 = vector.extract_strided_slice %2 {offsets = [0, 4], sizes = [8, 1], strides = [1, 1]} : vector<8x36xf32> to vector<8x1xf32>
    %28 = vector.shape_cast %27 : vector<8x1xf32> to vector<8x1xf32>
    %29 = vector.broadcast %28 : vector<8x1xf32> to vector<8x288xf32>
    %c4 = arith.constant 4 : index
    %c0_12 = arith.constant 0 : index
    %c0_13 = arith.constant 0 : index
    %30 = vector.load %arg6[%c4, %c0_12, %c0_13] : memref<36x8x288xf32, #tpu.memory_space<vmem>>, vector<1x8x288xf32>
    %31 = vector.shape_cast %30 : vector<1x8x288xf32> to vector<8x288xf32>
    %32 = vector.shape_cast %29 : vector<8x288xf32> to vector<1x8x288xf32>
    tpu.vector_store %arg6[%c4, %c0_12, %c0_13], %32 {strides = array<i32>} : memref<36x8x288xf32, #tpu.memory_space<vmem>>, vector<1x8x288xf32>,
    %33 = vector.extract_strided_slice %2 {offsets = [0, 5], sizes = [8, 1], strides = [1, 1]} : vector<8x36xf32> to vector<8x1xf32>
    %34 = vector.shape_cast %33 : vector<8x1xf32> to vector<8x1xf32>
    %35 = vector.broadcast %34 : vector<8x1xf32> to vector<8x288xf32>
    %c5 = arith.constant 5 : index
    %c0_14 = arith.constant 0 : index
    %c0_15 = arith.constant 0 : index
    %36 = vector.load %arg6[%c5, %c0_14, %c0_15] : memref<36x8x288xf32, #tpu.memory_space<vmem>>, vector<1x8x288xf32>
    %37 = vector.shape_cast %36 : vector<1x8x288xf32> to vector<8x288xf32>
    %38 = vector.shape_cast %35 : vector<8x288xf32> to vector<1x8x288xf32>
    tpu.vector_store %arg6[%c5, %c0_14, %c0_15], %38 {strides = array<i32>} : memref<36x8x288xf32, #tpu.memory_space<vmem>>, vector<1x8x288xf32>,
    %39 = vector.extract_strided_slice %2 {offsets = [0, 6], sizes = [8, 1], strides = [1, 1]} : vector<8x36xf32> to vector<8x1xf32>
    %40 = vector.shape_cast %39 : vector<8x1xf32> to vector<8x1xf32>
    %41 = vector.broadcast %40 : vector<8x1xf32> to vector<8x288xf32>
    %c6 = arith.constant 6 : index
    %c0_16 = arith.constant 0 : index
    %c0_17 = arith.constant 0 : index
    %42 = vector.load %arg6[%c6, %c0_16, %c0_17] : memref<36x8x288xf32, #tpu.memory_space<vmem>>, vector<1x8x288xf32>
    %43 = vector.shape_cast %42 : vector<1x8x288xf32> to vector<8x288xf32>
    %44 = vector.shape_cast %41 : vector<8x288xf32> to vector<1x8x288xf32>
    tpu.vector_store %arg6[%c6, %c0_16, %c0_17], %44 {strides = array<i32>} : memref<36x8x288xf32, #tpu.memory_space<vmem>>, vector<1x8x288xf32>,
    %45 = vector.extract_strided_slice %2 {offsets = [0, 7], sizes = [8, 1], strides = [1, 1]} : vector<8x36xf32> to vector<8x1xf32>
    %46 = vector.shape_cast %45 : vector<8x1xf32> to vector<8x1xf32>
    %47 = vector.broadcast %46 : vector<8x1xf32> to vector<8x288xf32>
    %c7 = arith.constant 7 : index
    %c0_18 = arith.constant 0 : index
    %c0_19 = arith.constant 0 : index
    %48 = vector.load %arg6[%c7, %c0_18, %c0_19] : memref<36x8x288xf32, #tpu.memory_space<vmem>>, vector<1x8x288xf32>
    %49 = vector.shape_cast %48 : vector<1x8x288xf32> to vector<8x288xf32>
    %50 = vector.shape_cast %47 : vector<8x288xf32> to vector<1x8x288xf32>
    tpu.vector_store %arg6[%c7, %c0_18, %c0_19], %50 {strides = array<i32>} : memref<36x8x288xf32, #tpu.memory_space<vmem>>, vector<1x8x288xf32>,
    %51 = vector.extract_strided_slice %2 {offsets = [0, 8], sizes = [8, 1], strides = [1, 1]} : vector<8x36xf32> to vector<8x1xf32>
    %52 = vector.shape_cast %51 : vector<8x1xf32> to vector<8x1xf32>
    %53 = vector.broadcast %52 : vector<8x1xf32> to vector<8x288xf32>
    %c8 = arith.constant 8 : index
    %c0_20 = arith.constant 0 : index
    %c0_21 = arith.constant 0 : index
    %54 = vector.load %arg6[%c8, %c0_20, %c0_21] : memref<36x8x288xf32, #tpu.memory_space<vmem>>, vector<1x8x288xf32>
    %55 = vector.shape_cast %54 : vector<1x8x288xf32> to vector<8x288xf32>
    %56 = vector.shape_cast %53 : vector<8x288xf32> to vector<1x8x288xf32>
    tpu.vector_store %arg6[%c8, %c0_20, %c0_21], %56 {strides = array<i32>} : memref<36x8x288xf32, #tpu.memory_space<vmem>>, vector<1x8x288xf32>,
    %57 = vector.extract_strided_slice %2 {offsets = [0, 9], sizes = [8, 1], strides = [1, 1]} : vector<8x36xf32> to vector<8x1xf32>
    %58 = vector.shape_cast %57 : vector<8x1xf32> to vector<8x1xf32>
    %59 = vector.broadcast %58 : vector<8x1xf32> to vector<8x288xf32>
    %c9 = arith.constant 9 : index
    %c0_22 = arith.constant 0 : index
    %c0_23 = arith.constant 0 : index
    %60 = vector.load %arg6[%c9, %c0_22, %c0_23] : memref<36x8x288xf32, #tpu.memory_space<vmem>>, vector<1x8x288xf32>
    %61 = vector.shape_cast %60 : vector<1x8x288xf32> to vector<8x288xf32>
    %62 = vector.shape_cast %59 : vector<8x288xf32> to vector<1x8x288xf32>
    tpu.vector_store %arg6[%c9, %c0_22, %c0_23], %62 {strides = array<i32>} : memref<36x8x288xf32, #tpu.memory_space<vmem>>, vector<1x8x288xf32>,
    %63 = vector.extract_strided_slice %2 {offsets = [0, 10], sizes = [8, 1], strides = [1, 1]} : vector<8x36xf32> to vector<8x1xf32>
    %64 = vector.shape_cast %63 : vector<8x1xf32> to vector<8x1xf32>
    %65 = vector.broadcast %64 : vector<8x1xf32> to vector<8x288xf32>
    %c10 = arith.constant 10 : index
    %c0_24 = arith.constant 0 : index
    %c0_25 = arith.constant 0 : index
    %66 = vector.load %arg6[%c10, %c0_24, %c0_25] : memref<36x8x288xf32, #tpu.memory_space<vmem>>, vector<1x8x288xf32>
    %67 = vector.shape_cast %66 : vector<1x8x288xf32> to vector<8x288xf32>
    %68 = vector.shape_cast %65 : vector<8x288xf32> to vector<1x8x288xf32>
    tpu.vector_store %arg6[%c10, %c0_24, %c0_25], %68 {strides = array<i32>} : memref<36x8x288xf32, #tpu.memory_space<vmem>>, vector<1x8x288xf32>,
    %69 = vector.extract_strided_slice %2 {offsets = [0, 11], sizes = [8, 1], strides = [1, 1]} : vector<8x36xf32> to vector<8x1xf32>
    %70 = vector.shape_cast %69 : vector<8x1xf32> to vector<8x1xf32>
    %71 = vector.broadcast %70 : vector<8x1xf32> to vector<8x288xf32>
    %c11 = arith.constant 11 : index
    %c0_26 = arith.constant 0 : index
    %c0_27 = arith.constant 0 : index
    %72 = vector.load %arg6[%c11, %c0_26, %c0_27] : memref<36x8x288xf32, #tpu.memory_space<vmem>>, vector<1x8x288xf32>
    %73 = vector.shape_cast %72 : vector<1x8x288xf32> to vector<8x288xf32>
    %74 = vector.shape_cast %71 : vector<8x288xf32> to vector<1x8x288xf32>
    tpu.vector_store %arg6[%c11, %c0_26, %c0_27], %74 {strides = array<i32>} : memref<36x8x288xf32, #tpu.memory_space<vmem>>, vector<1x8x288xf32>,
    %75 = vector.extract_strided_slice %2 {offsets = [0, 12], sizes = [8, 1], strides = [1, 1]} : vector<8x36xf32> to vector<8x1xf32>
    %76 = vector.shape_cast %75 : vector<8x1xf32> to vector<8x1xf32>
    %77 = vector.broadcast %76 : vector<8x1xf32> to vector<8x288xf32>
    %c12 = arith.constant 12 : index
    %c0_28 = arith.constant 0 : index
    %c0_29 = arith.constant 0 : index
    %78 = vector.load %arg6[%c12, %c0_28, %c0_29] : memref<36x8x288xf32, #tpu.memory_space<vmem>>, vector<1x8x288xf32>
    %79 = vector.shape_cast %78 : vector<1x8x288xf32> to vector<8x288xf32>
    %80 = vector.shape_cast %77 : vector<8x288xf32> to vector<1x8x288xf32>
    tpu.vector_store %arg6[%c12, %c0_28, %c0_29], %80 {strides = array<i32>} : memref<36x8x288xf32, #tpu.memory_space<vmem>>, vector<1x8x288xf32>,
    %81 = vector.extract_strided_slice %2 {offsets = [0, 13], sizes = [8, 1], strides = [1, 1]} : vector<8x36xf32> to vector<8x1xf32>
    %82 = vector.shape_cast %81 : vector<8x1xf32> to vector<8x1xf32>
    %83 = vector.broadcast %82 : vector<8x1xf32> to vector<8x288xf32>
    %c13 = arith.constant 13 : index
    %c0_30 = arith.constant 0 : index
    %c0_31 = arith.constant 0 : index
    %84 = vector.load %arg6[%c13, %c0_30, %c0_31] : memref<36x8x288xf32, #tpu.memory_space<vmem>>, vector<1x8x288xf32>
    %85 = vector.shape_cast %84 : vector<1x8x288xf32> to vector<8x288xf32>
    %86 = vector.shape_cast %83 : vector<8x288xf32> to vector<1x8x288xf32>
    tpu.vector_store %arg6[%c13, %c0_30, %c0_31], %86 {strides = array<i32>} : memref<36x8x288xf32, #tpu.memory_space<vmem>>, vector<1x8x288xf32>,
    %87 = vector.extract_strided_slice %2 {offsets = [0, 14], sizes = [8, 1], strides = [1, 1]} : vector<8x36xf32> to vector<8x1xf32>
    %88 = vector.shape_cast %87 : vector<8x1xf32> to vector<8x1xf32>
    %89 = vector.broadcast %88 : vector<8x1xf32> to vector<8x288xf32>
    %c14 = arith.constant 14 : index
    %c0_32 = arith.constant 0 : index
    %c0_33 = arith.constant 0 : index
    %90 = vector.load %arg6[%c14, %c0_32, %c0_33] : memref<36x8x288xf32, #tpu.memory_space<vmem>>, vector<1x8x288xf32>
    %91 = vector.shape_cast %90 : vector<1x8x288xf32> to vector<8x288xf32>
    %92 = vector.shape_cast %89 : vector<8x288xf32> to vector<1x8x288xf32>
    tpu.vector_store %arg6[%c14, %c0_32, %c0_33], %92 {strides = array<i32>} : memref<36x8x288xf32, #tpu.memory_space<vmem>>, vector<1x8x288xf32>,
    %93 = vector.extract_strided_slice %2 {offsets = [0, 15], sizes = [8, 1], strides = [1, 1]} : vector<8x36xf32> to vector<8x1xf32>
    %94 = vector.shape_cast %93 : vector<8x1xf32> to vector<8x1xf32>
    %95 = vector.broadcast %94 : vector<8x1xf32> to vector<8x288xf32>
    %c15 = arith.constant 15 : index
    %c0_34 = arith.constant 0 : index
    %c0_35 = arith.constant 0 : index
    %96 = vector.load %arg6[%c15, %c0_34, %c0_35] : memref<36x8x288xf32, #tpu.memory_space<vmem>>, vector<1x8x288xf32>
    %97 = vector.shape_cast %96 : vector<1x8x288xf32> to vector<8x288xf32>
    %98 = vector.shape_cast %95 : vector<8x288xf32> to vector<1x8x288xf32>
    tpu.vector_store %arg6[%c15, %c0_34, %c0_35], %98 {strides = array<i32>} : memref<36x8x288xf32, #tpu.memory_space<vmem>>, vector<1x8x288xf32>,
    %99 = vector.extract_strided_slice %2 {offsets = [0, 16], sizes = [8, 1], strides = [1, 1]} : vector<8x36xf32> to vector<8x1xf32>
    %100 = vector.shape_cast %99 : vector<8x1xf32> to vector<8x1xf32>
    %101 = vector.broadcast %100 : vector<8x1xf32> to vector<8x288xf32>
    %c16 = arith.constant 16 : index
    %c0_36 = arith.constant 0 : index
    %c0_37 = arith.constant 0 : index
    %102 = vector.load %arg6[%c16, %c0_36, %c0_37] : memref<36x8x288xf32, #tpu.memory_space<vmem>>, vector<1x8x288xf32>
    %103 = vector.shape_cast %102 : vector<1x8x288xf32> to vector<8x288xf32>
    %104 = vector.shape_cast %101 : vector<8x288xf32> to vector<1x8x288xf32>
    tpu.vector_store %arg6[%c16, %c0_36, %c0_37], %104 {strides = array<i32>} : memref<36x8x288xf32, #tpu.memory_space<vmem>>, vector<1x8x288xf32>,
    %105 = vector.extract_strided_slice %2 {offsets = [0, 17], sizes = [8, 1], strides = [1, 1]} : vector<8x36xf32> to vector<8x1xf32>
    %106 = vector.shape_cast %105 : vector<8x1xf32> to vector<8x1xf32>
    %107 = vector.broadcast %106 : vector<8x1xf32> to vector<8x288xf32>
    %c17 = arith.constant 17 : index
    %c0_38 = arith.constant 0 : index
    %c0_39 = arith.constant 0 : index
    %108 = vector.load %arg6[%c17, %c0_38, %c0_39] : memref<36x8x288xf32, #tpu.memory_space<vmem>>, vector<1x8x288xf32>
    %109 = vector.shape_cast %108 : vector<1x8x288xf32> to vector<8x288xf32>
    %110 = vector.shape_cast %107 : vector<8x288xf32> to vector<1x8x288xf32>
    tpu.vector_store %arg6[%c17, %c0_38, %c0_39], %110 {strides = array<i32>} : memref<36x8x288xf32, #tpu.memory_space<vmem>>, vector<1x8x288xf32>,
    %111 = vector.extract_strided_slice %2 {offsets = [0, 18], sizes = [8, 1], strides = [1, 1]} : vector<8x36xf32> to vector<8x1xf32>
    %112 = vector.shape_cast %111 : vector<8x1xf32> to vector<8x1xf32>
    %113 = vector.broadcast %112 : vector<8x1xf32> to vector<8x288xf32>
    %c18 = arith.constant 18 : index
    %c0_40 = arith.constant 0 : index
    %c0_41 = arith.constant 0 : index
    %114 = vector.load %arg6[%c18, %c0_40, %c0_41] : memref<36x8x288xf32, #tpu.memory_space<vmem>>, vector<1x8x288xf32>
    %115 = vector.shape_cast %114 : vector<1x8x288xf32> to vector<8x288xf32>
    %116 = vector.shape_cast %113 : vector<8x288xf32> to vector<1x8x288xf32>
    tpu.vector_store %arg6[%c18, %c0_40, %c0_41], %116 {strides = array<i32>} : memref<36x8x288xf32, #tpu.memory_space<vmem>>, vector<1x8x288xf32>,
    %117 = vector.extract_strided_slice %2 {offsets = [0, 19], sizes = [8, 1], strides = [1, 1]} : vector<8x36xf32> to vector<8x1xf32>
    %118 = vector.shape_cast %117 : vector<8x1xf32> to vector<8x1xf32>
    %119 = vector.broadcast %118 : vector<8x1xf32> to vector<8x288xf32>
    %c19 = arith.constant 19 : index
    %c0_42 = arith.constant 0 : index
    %c0_43 = arith.constant 0 : index
    %120 = vector.load %arg6[%c19, %c0_42, %c0_43] : memref<36x8x288xf32, #tpu.memory_space<vmem>>, vector<1x8x288xf32>
    %121 = vector.shape_cast %120 : vector<1x8x288xf32> to vector<8x288xf32>
    %122 = vector.shape_cast %119 : vector<8x288xf32> to vector<1x8x288xf32>
    tpu.vector_store %arg6[%c19, %c0_42, %c0_43], %122 {strides = array<i32>} : memref<36x8x288xf32, #tpu.memory_space<vmem>>, vector<1x8x288xf32>,
    %123 = vector.extract_strided_slice %2 {offsets = [0, 20], sizes = [8, 1], strides = [1, 1]} : vector<8x36xf32> to vector<8x1xf32>
    %124 = vector.shape_cast %123 : vector<8x1xf32> to vector<8x1xf32>
    %125 = vector.broadcast %124 : vector<8x1xf32> to vector<8x288xf32>
    %c20 = arith.constant 20 : index
    %c0_44 = arith.constant 0 : index
    %c0_45 = arith.constant 0 : index
    %126 = vector.load %arg6[%c20, %c0_44, %c0_45] : memref<36x8x288xf32, #tpu.memory_space<vmem>>, vector<1x8x288xf32>
    %127 = vector.shape_cast %126 : vector<1x8x288xf32> to vector<8x288xf32>
    %128 = vector.shape_cast %125 : vector<8x288xf32> to vector<1x8x288xf32>
    tpu.vector_store %arg6[%c20, %c0_44, %c0_45], %128 {strides = array<i32>} : memref<36x8x288xf32, #tpu.memory_space<vmem>>, vector<1x8x288xf32>,
    %129 = vector.extract_strided_slice %2 {offsets = [0, 21], sizes = [8, 1], strides = [1, 1]} : vector<8x36xf32> to vector<8x1xf32>
    %130 = vector.shape_cast %129 : vector<8x1xf32> to vector<8x1xf32>
    %131 = vector.broadcast %130 : vector<8x1xf32> to vector<8x288xf32>
    %c21 = arith.constant 21 : index
    %c0_46 = arith.constant 0 : index
    %c0_47 = arith.constant 0 : index
    %132 = vector.load %arg6[%c21, %c0_46, %c0_47] : memref<36x8x288xf32, #tpu.memory_space<vmem>>, vector<1x8x288xf32>
    %133 = vector.shape_cast %132 : vector<1x8x288xf32> to vector<8x288xf32>
    %134 = vector.shape_cast %131 : vector<8x288xf32> to vector<1x8x288xf32>
    tpu.vector_store %arg6[%c21, %c0_46, %c0_47], %134 {strides = array<i32>} : memref<36x8x288xf32, #tpu.memory_space<vmem>>, vector<1x8x288xf32>,
    %135 = vector.extract_strided_slice %2 {offsets = [0, 22], sizes = [8, 1], strides = [1, 1]} : vector<8x36xf32> to vector<8x1xf32>
    %136 = vector.shape_cast %135 : vector<8x1xf32> to vector<8x1xf32>
    %137 = vector.broadcast %136 : vector<8x1xf32> to vector<8x288xf32>
    %c22 = arith.constant 22 : index
    %c0_48 = arith.constant 0 : index
    %c0_49 = arith.constant 0 : index
    %138 = vector.load %arg6[%c22, %c0_48, %c0_49] : memref<36x8x288xf32, #tpu.memory_space<vmem>>, vector<1x8x288xf32>
    %139 = vector.shape_cast %138 : vector<1x8x288xf32> to vector<8x288xf32>
    %140 = vector.shape_cast %137 : vector<8x288xf32> to vector<1x8x288xf32>
    tpu.vector_store %arg6[%c22, %c0_48, %c0_49], %140 {strides = array<i32>} : memref<36x8x288xf32, #tpu.memory_space<vmem>>, vector<1x8x288xf32>,
    %141 = vector.extract_strided_slice %2 {offsets = [0, 23], sizes = [8, 1], strides = [1, 1]} : vector<8x36xf32> to vector<8x1xf32>
    %142 = vector.shape_cast %141 : vector<8x1xf32> to vector<8x1xf32>
    %143 = vector.broadcast %142 : vector<8x1xf32> to vector<8x288xf32>
    %c23 = arith.constant 23 : index
    %c0_50 = arith.constant 0 : index
    %c0_51 = arith.constant 0 : index
    %144 = vector.load %arg6[%c23, %c0_50, %c0_51] : memref<36x8x288xf32, #tpu.memory_space<vmem>>, vector<1x8x288xf32>
    %145 = vector.shape_cast %144 : vector<1x8x288xf32> to vector<8x288xf32>
    %146 = vector.shape_cast %143 : vector<8x288xf32> to vector<1x8x288xf32>
    tpu.vector_store %arg6[%c23, %c0_50, %c0_51], %146 {strides = array<i32>} : memref<36x8x288xf32, #tpu.memory_space<vmem>>, vector<1x8x288xf32>,
    %147 = vector.extract_strided_slice %2 {offsets = [0, 24], sizes = [8, 1], strides = [1, 1]} : vector<8x36xf32> to vector<8x1xf32>
    %148 = vector.shape_cast %147 : vector<8x1xf32> to vector<8x1xf32>
    %149 = vector.broadcast %148 : vector<8x1xf32> to vector<8x288xf32>
    %c24 = arith.constant 24 : index
    %c0_52 = arith.constant 0 : index
    %c0_53 = arith.constant 0 : index
    %150 = vector.load %arg6[%c24, %c0_52, %c0_53] : memref<36x8x288xf32, #tpu.memory_space<vmem>>, vector<1x8x288xf32>
    %151 = vector.shape_cast %150 : vector<1x8x288xf32> to vector<8x288xf32>
    %152 = vector.shape_cast %149 : vector<8x288xf32> to vector<1x8x288xf32>
    tpu.vector_store %arg6[%c24, %c0_52, %c0_53], %152 {strides = array<i32>} : memref<36x8x288xf32, #tpu.memory_space<vmem>>, vector<1x8x288xf32>,
    %153 = vector.extract_strided_slice %2 {offsets = [0, 25], sizes = [8, 1], strides = [1, 1]} : vector<8x36xf32> to vector<8x1xf32>
    %154 = vector.shape_cast %153 : vector<8x1xf32> to vector<8x1xf32>
    %155 = vector.broadcast %154 : vector<8x1xf32> to vector<8x288xf32>
    %c25 = arith.constant 25 : index
    %c0_54 = arith.constant 0 : index
    %c0_55 = arith.constant 0 : index
    %156 = vector.load %arg6[%c25, %c0_54, %c0_55] : memref<36x8x288xf32, #tpu.memory_space<vmem>>, vector<1x8x288xf32>
    %157 = vector.shape_cast %156 : vector<1x8x288xf32> to vector<8x288xf32>
    %158 = vector.shape_cast %155 : vector<8x288xf32> to vector<1x8x288xf32>
    tpu.vector_store %arg6[%c25, %c0_54, %c0_55], %158 {strides = array<i32>} : memref<36x8x288xf32, #tpu.memory_space<vmem>>, vector<1x8x288xf32>,
    %159 = vector.extract_strided_slice %2 {offsets = [0, 26], sizes = [8, 1], strides = [1, 1]} : vector<8x36xf32> to vector<8x1xf32>
    %160 = vector.shape_cast %159 : vector<8x1xf32> to vector<8x1xf32>
    %161 = vector.broadcast %160 : vector<8x1xf32> to vector<8x288xf32>
    %c26 = arith.constant 26 : index
    %c0_56 = arith.constant 0 : index
    %c0_57 = arith.constant 0 : index
    %162 = vector.load %arg6[%c26, %c0_56, %c0_57] : memref<36x8x288xf32, #tpu.memory_space<vmem>>, vector<1x8x288xf32>
    %163 = vector.shape_cast %162 : vector<1x8x288xf32> to vector<8x288xf32>
    %164 = vector.shape_cast %161 : vector<8x288xf32> to vector<1x8x288xf32>
    tpu.vector_store %arg6[%c26, %c0_56, %c0_57], %164 {strides = array<i32>} : memref<36x8x288xf32, #tpu.memory_space<vmem>>, vector<1x8x288xf32>,
    %165 = vector.extract_strided_slice %2 {offsets = [0, 27], sizes = [8, 1], strides = [1, 1]} : vector<8x36xf32> to vector<8x1xf32>
    %166 = vector.shape_cast %165 : vector<8x1xf32> to vector<8x1xf32>
    %167 = vector.broadcast %166 : vector<8x1xf32> to vector<8x288xf32>
    %c27 = arith.constant 27 : index
    %c0_58 = arith.constant 0 : index
    %c0_59 = arith.constant 0 : index
    %168 = vector.load %arg6[%c27, %c0_58, %c0_59] : memref<36x8x288xf32, #tpu.memory_space<vmem>>, vector<1x8x288xf32>
    %169 = vector.shape_cast %168 : vector<1x8x288xf32> to vector<8x288xf32>
    %170 = vector.shape_cast %167 : vector<8x288xf32> to vector<1x8x288xf32>
    tpu.vector_store %arg6[%c27, %c0_58, %c0_59], %170 {strides = array<i32>} : memref<36x8x288xf32, #tpu.memory_space<vmem>>, vector<1x8x288xf32>,
    %171 = vector.extract_strided_slice %2 {offsets = [0, 28], sizes = [8, 1], strides = [1, 1]} : vector<8x36xf32> to vector<8x1xf32>
    %172 = vector.shape_cast %171 : vector<8x1xf32> to vector<8x1xf32>
    %173 = vector.broadcast %172 : vector<8x1xf32> to vector<8x288xf32>
    %c28 = arith.constant 28 : index
    %c0_60 = arith.constant 0 : index
    %c0_61 = arith.constant 0 : index
    %174 = vector.load %arg6[%c28, %c0_60, %c0_61] : memref<36x8x288xf32, #tpu.memory_space<vmem>>, vector<1x8x288xf32>
    %175 = vector.shape_cast %174 : vector<1x8x288xf32> to vector<8x288xf32>
    %176 = vector.shape_cast %173 : vector<8x288xf32> to vector<1x8x288xf32>
    tpu.vector_store %arg6[%c28, %c0_60, %c0_61], %176 {strides = array<i32>} : memref<36x8x288xf32, #tpu.memory_space<vmem>>, vector<1x8x288xf32>,
    %177 = vector.extract_strided_slice %2 {offsets = [0, 29], sizes = [8, 1], strides = [1, 1]} : vector<8x36xf32> to vector<8x1xf32>
    %178 = vector.shape_cast %177 : vector<8x1xf32> to vector<8x1xf32>
    %179 = vector.broadcast %178 : vector<8x1xf32> to vector<8x288xf32>
    %c29 = arith.constant 29 : index
    %c0_62 = arith.constant 0 : index
    %c0_63 = arith.constant 0 : index
    %180 = vector.load %arg6[%c29, %c0_62, %c0_63] : memref<36x8x288xf32, #tpu.memory_space<vmem>>, vector<1x8x288xf32>
    %181 = vector.shape_cast %180 : vector<1x8x288xf32> to vector<8x288xf32>
    %182 = vector.shape_cast %179 : vector<8x288xf32> to vector<1x8x288xf32>
    tpu.vector_store %arg6[%c29, %c0_62, %c0_63], %182 {strides = array<i32>} : memref<36x8x288xf32, #tpu.memory_space<vmem>>, vector<1x8x288xf32>,
    %183 = vector.extract_strided_slice %2 {offsets = [0, 30], sizes = [8, 1], strides = [1, 1]} : vector<8x36xf32> to vector<8x1xf32>
    %184 = vector.shape_cast %183 : vector<8x1xf32> to vector<8x1xf32>
    %185 = vector.broadcast %184 : vector<8x1xf32> to vector<8x288xf32>
    %c30 = arith.constant 30 : index
    %c0_64 = arith.constant 0 : index
    %c0_65 = arith.constant 0 : index
    %186 = vector.load %arg6[%c30, %c0_64, %c0_65] : memref<36x8x288xf32, #tpu.memory_space<vmem>>, vector<1x8x288xf32>
    %187 = vector.shape_cast %186 : vector<1x8x288xf32> to vector<8x288xf32>
    %188 = vector.shape_cast %185 : vector<8x288xf32> to vector<1x8x288xf32>
    tpu.vector_store %arg6[%c30, %c0_64, %c0_65], %188 {strides = array<i32>} : memref<36x8x288xf32, #tpu.memory_space<vmem>>, vector<1x8x288xf32>,
    %189 = vector.extract_strided_slice %2 {offsets = [0, 31], sizes = [8, 1], strides = [1, 1]} : vector<8x36xf32> to vector<8x1xf32>
    %190 = vector.shape_cast %189 : vector<8x1xf32> to vector<8x1xf32>
    %191 = vector.broadcast %190 : vector<8x1xf32> to vector<8x288xf32>
    %c31 = arith.constant 31 : index
    %c0_66 = arith.constant 0 : index
    %c0_67 = arith.constant 0 : index
    %192 = vector.load %arg6[%c31, %c0_66, %c0_67] : memref<36x8x288xf32, #tpu.memory_space<vmem>>, vector<1x8x288xf32>
    %193 = vector.shape_cast %192 : vector<1x8x288xf32> to vector<8x288xf32>
    %194 = vector.shape_cast %191 : vector<8x288xf32> to vector<1x8x288xf32>
    tpu.vector_store %arg6[%c31, %c0_66, %c0_67], %194 {strides = array<i32>} : memref<36x8x288xf32, #tpu.memory_space<vmem>>, vector<1x8x288xf32>,
    %195 = vector.extract_strided_slice %2 {offsets = [0, 32], sizes = [8, 1], strides = [1, 1]} : vector<8x36xf32> to vector<8x1xf32>
    %196 = vector.shape_cast %195 : vector<8x1xf32> to vector<8x1xf32>
    %197 = vector.broadcast %196 : vector<8x1xf32> to vector<8x288xf32>
    %c32 = arith.constant 32 : index
    %c0_68 = arith.constant 0 : index
    %c0_69 = arith.constant 0 : index
    %198 = vector.load %arg6[%c32, %c0_68, %c0_69] : memref<36x8x288xf32, #tpu.memory_space<vmem>>, vector<1x8x288xf32>
    %199 = vector.shape_cast %198 : vector<1x8x288xf32> to vector<8x288xf32>
    %200 = vector.shape_cast %197 : vector<8x288xf32> to vector<1x8x288xf32>
    tpu.vector_store %arg6[%c32, %c0_68, %c0_69], %200 {strides = array<i32>} : memref<36x8x288xf32, #tpu.memory_space<vmem>>, vector<1x8x288xf32>,
    %201 = vector.extract_strided_slice %2 {offsets = [0, 33], sizes = [8, 1], strides = [1, 1]} : vector<8x36xf32> to vector<8x1xf32>
    %202 = vector.shape_cast %201 : vector<8x1xf32> to vector<8x1xf32>
    %203 = vector.broadcast %202 : vector<8x1xf32> to vector<8x288xf32>
    %c33 = arith.constant 33 : index
    %c0_70 = arith.constant 0 : index
    %c0_71 = arith.constant 0 : index
    %204 = vector.load %arg6[%c33, %c0_70, %c0_71] : memref<36x8x288xf32, #tpu.memory_space<vmem>>, vector<1x8x288xf32>
    %205 = vector.shape_cast %204 : vector<1x8x288xf32> to vector<8x288xf32>
    %206 = vector.shape_cast %203 : vector<8x288xf32> to vector<1x8x288xf32>
    tpu.vector_store %arg6[%c33, %c0_70, %c0_71], %206 {strides = array<i32>} : memref<36x8x288xf32, #tpu.memory_space<vmem>>, vector<1x8x288xf32>,
    %207 = vector.extract_strided_slice %2 {offsets = [0, 34], sizes = [8, 1], strides = [1, 1]} : vector<8x36xf32> to vector<8x1xf32>
    %208 = vector.shape_cast %207 : vector<8x1xf32> to vector<8x1xf32>
    %209 = vector.broadcast %208 : vector<8x1xf32> to vector<8x288xf32>
    %c34 = arith.constant 34 : index
    %c0_72 = arith.constant 0 : index
    %c0_73 = arith.constant 0 : index
    %210 = vector.load %arg6[%c34, %c0_72, %c0_73] : memref<36x8x288xf32, #tpu.memory_space<vmem>>, vector<1x8x288xf32>
    %211 = vector.shape_cast %210 : vector<1x8x288xf32> to vector<8x288xf32>
    %212 = vector.shape_cast %209 : vector<8x288xf32> to vector<1x8x288xf32>
    tpu.vector_store %arg6[%c34, %c0_72, %c0_73], %212 {strides = array<i32>} : memref<36x8x288xf32, #tpu.memory_space<vmem>>, vector<1x8x288xf32>,
    %213 = vector.extract_strided_slice %2 {offsets = [0, 35], sizes = [8, 1], strides = [1, 1]} : vector<8x36xf32> to vector<8x1xf32>
    %214 = vector.shape_cast %213 : vector<8x1xf32> to vector<8x1xf32>
    %215 = vector.broadcast %214 : vector<8x1xf32> to vector<8x288xf32>
    %c35 = arith.constant 35 : index
    %c0_74 = arith.constant 0 : index
    %c0_75 = arith.constant 0 : index
    %216 = vector.load %arg6[%c35, %c0_74, %c0_75] : memref<36x8x288xf32, #tpu.memory_space<vmem>>, vector<1x8x288xf32>
    %217 = vector.shape_cast %216 : vector<1x8x288xf32> to vector<8x288xf32>
    %218 = vector.shape_cast %215 : vector<8x288xf32> to vector<1x8x288xf32>
    tpu.vector_store %arg6[%c35, %c0_74, %c0_75], %218 {strides = array<i32>} : memref<36x8x288xf32, #tpu.memory_space<vmem>>, vector<1x8x288xf32>,
    %c0_76 = arith.constant 0 : index
    %c0_77 = arith.constant 0 : index
    %219 = vector.load %arg2[%c0_76, %c0_77] : memref<8x1xf32, #tpu.memory_space<vmem>>, vector<8x1xf32>
    %220 = vector.shape_cast %219 : vector<8x1xf32> to vector<8x1xf32>
    %221 = vector.broadcast %220 : vector<8x1xf32> to vector<8x288xf32>
    %c0_78 = arith.constant 0 : index
    %c0_79 = arith.constant 0 : index
    %c0_80 = arith.constant 0 : index
    %222 = vector.load %arg3[%c0_78, %c0_79, %c0_80] : memref<2x4x256xf32, #tpu.memory_space<vmem>>, vector<1x4x256xf32>
    %223 = vector.shape_cast %222 : vector<1x4x256xf32> to vector<4x256xf32>
    %224 = vector.extract_strided_slice %223 {offsets = [0, 0], sizes = [4, 16], strides = [1, 1]} : vector<4x256xf32> to vector<4x16xf32>
    %c0_81 = arith.constant 0 : index
    %c19_82 = arith.constant 19 : index
    %225 = vector.load %arg5[%c0_81, %c19_82] : memref<12x342xf32, #tpu.memory_space<vmem>>, vector<4x16xf32>
    tpu.vector_store %arg5[%c0_81, %c19_82], %224 {strides = array<i32>} : memref<12x342xf32, #tpu.memory_space<vmem>>, vector<4x16xf32>,
    %226 = vector.extract_strided_slice %223 {offsets = [0, 16], sizes = [4, 16], strides = [1, 1]} : vector<4x256xf32> to vector<4x16xf32>
    %c0_83 = arith.constant 0 : index
    %c37 = arith.constant 37 : index
    %227 = vector.load %arg5[%c0_83, %c37] : memref<12x342xf32, #tpu.memory_space<vmem>>, vector<4x16xf32>
    tpu.vector_store %arg5[%c0_83, %c37], %226 {strides = array<i32>} : memref<12x342xf32, #tpu.memory_space<vmem>>, vector<4x16xf32>,
    %228 = vector.extract_strided_slice %223 {offsets = [0, 32], sizes = [4, 16], strides = [1, 1]} : vector<4x256xf32> to vector<4x16xf32>
    %c0_84 = arith.constant 0 : index
    %c55 = arith.constant 55 : index
    %229 = vector.load %arg5[%c0_84, %c55] : memref<12x342xf32, #tpu.memory_space<vmem>>, vector<4x16xf32>
    tpu.vector_store %arg5[%c0_84, %c55], %228 {strides = array<i32>} : memref<12x342xf32, #tpu.memory_space<vmem>>, vector<4x16xf32>,
    %230 = vector.extract_strided_slice %223 {offsets = [0, 48], sizes = [4, 16], strides = [1, 1]} : vector<4x256xf32> to vector<4x16xf32>
    %c0_85 = arith.constant 0 : index
    %c73 = arith.constant 73 : index
    %231 = vector.load %arg5[%c0_85, %c73] : memref<12x342xf32, #tpu.memory_space<vmem>>, vector<4x16xf32>
    tpu.vector_store %arg5[%c0_85, %c73], %230 {strides = array<i32>} : memref<12x342xf32, #tpu.memory_space<vmem>>, vector<4x16xf32>,
    %232 = vector.extract_strided_slice %223 {offsets = [0, 64], sizes = [4, 16], strides = [1, 1]} : vector<4x256xf32> to vector<4x16xf32>
    %c0_86 = arith.constant 0 : index
    %c91 = arith.constant 91 : index
    %233 = vector.load %arg5[%c0_86, %c91] : memref<12x342xf32, #tpu.memory_space<vmem>>, vector<4x16xf32>
    tpu.vector_store %arg5[%c0_86, %c91], %232 {strides = array<i32>} : memref<12x342xf32, #tpu.memory_space<vmem>>, vector<4x16xf32>,
    %234 = vector.extract_strided_slice %223 {offsets = [0, 80], sizes = [4, 16], strides = [1, 1]} : vector<4x256xf32> to vector<4x16xf32>
    %c0_87 = arith.constant 0 : index
    %c109 = arith.constant 109 : index
    %235 = vector.load %arg5[%c0_87, %c109] : memref<12x342xf32, #tpu.memory_space<vmem>>, vector<4x16xf32>
    tpu.vector_store %arg5[%c0_87, %c109], %234 {strides = array<i32>} : memref<12x342xf32, #tpu.memory_space<vmem>>, vector<4x16xf32>,
    %236 = vector.extract_strided_slice %223 {offsets = [0, 96], sizes = [4, 16], strides = [1, 1]} : vector<4x256xf32> to vector<4x16xf32>
    %c0_88 = arith.constant 0 : index
    %c127 = arith.constant 127 : index
    %237 = vector.load %arg5[%c0_88, %c127] : memref<12x342xf32, #tpu.memory_space<vmem>>, vector<4x16xf32>
    tpu.vector_store %arg5[%c0_88, %c127], %236 {strides = array<i32>} : memref<12x342xf32, #tpu.memory_space<vmem>>, vector<4x16xf32>,
    %238 = vector.extract_strided_slice %223 {offsets = [0, 112], sizes = [4, 16], strides = [1, 1]} : vector<4x256xf32> to vector<4x16xf32>
    %c0_89 = arith.constant 0 : index
    %c145 = arith.constant 145 : index
    %239 = vector.load %arg5[%c0_89, %c145] : memref<12x342xf32, #tpu.memory_space<vmem>>, vector<4x16xf32>
    tpu.vector_store %arg5[%c0_89, %c145], %238 {strides = array<i32>} : memref<12x342xf32, #tpu.memory_space<vmem>>, vector<4x16xf32>,
    %240 = vector.extract_strided_slice %223 {offsets = [0, 128], sizes = [4, 16], strides = [1, 1]} : vector<4x256xf32> to vector<4x16xf32>
    %c0_90 = arith.constant 0 : index
    %c163 = arith.constant 163 : index
    %241 = vector.load %arg5[%c0_90, %c163] : memref<12x342xf32, #tpu.memory_space<vmem>>, vector<4x16xf32>
    tpu.vector_store %arg5[%c0_90, %c163], %240 {strides = array<i32>} : memref<12x342xf32, #tpu.memory_space<vmem>>, vector<4x16xf32>,
    %242 = vector.extract_strided_slice %223 {offsets = [0, 144], sizes = [4, 16], strides = [1, 1]} : vector<4x256xf32> to vector<4x16xf32>
    %c0_91 = arith.constant 0 : index
    %c181 = arith.constant 181 : index
    %243 = vector.load %arg5[%c0_91, %c181] : memref<12x342xf32, #tpu.memory_space<vmem>>, vector<4x16xf32>
    tpu.vector_store %arg5[%c0_91, %c181], %242 {strides = array<i32>} : memref<12x342xf32, #tpu.memory_space<vmem>>, vector<4x16xf32>,
    %244 = vector.extract_strided_slice %223 {offsets = [0, 160], sizes = [4, 16], strides = [1, 1]} : vector<4x256xf32> to vector<4x16xf32>
    %c0_92 = arith.constant 0 : index
    %c199 = arith.constant 199 : index
    %245 = vector.load %arg5[%c0_92, %c199] : memref<12x342xf32, #tpu.memory_space<vmem>>, vector<4x16xf32>
    tpu.vector_store %arg5[%c0_92, %c199], %244 {strides = array<i32>} : memref<12x342xf32, #tpu.memory_space<vmem>>, vector<4x16xf32>,
    %246 = vector.extract_strided_slice %223 {offsets = [0, 176], sizes = [4, 16], strides = [1, 1]} : vector<4x256xf32> to vector<4x16xf32>
    %c0_93 = arith.constant 0 : index
    %c217 = arith.constant 217 : index
    %247 = vector.load %arg5[%c0_93, %c217] : memref<12x342xf32, #tpu.memory_space<vmem>>, vector<4x16xf32>
    tpu.vector_store %arg5[%c0_93, %c217], %246 {strides = array<i32>} : memref<12x342xf32, #tpu.memory_space<vmem>>, vector<4x16xf32>,
    %248 = vector.extract_strided_slice %223 {offsets = [0, 192], sizes = [4, 16], strides = [1, 1]} : vector<4x256xf32> to vector<4x16xf32>
    %c0_94 = arith.constant 0 : index
    %c235 = arith.constant 235 : index
    %249 = vector.load %arg5[%c0_94, %c235] : memref<12x342xf32, #tpu.memory_space<vmem>>, vector<4x16xf32>
    tpu.vector_store %arg5[%c0_94, %c235], %248 {strides = array<i32>} : memref<12x342xf32, #tpu.memory_space<vmem>>, vector<4x16xf32>,
    %250 = vector.extract_strided_slice %223 {offsets = [0, 208], sizes = [4, 16], strides = [1, 1]} : vector<4x256xf32> to vector<4x16xf32>
    %c0_95 = arith.constant 0 : index
    %c253 = arith.constant 253 : index
    %251 = vector.load %arg5[%c0_95, %c253] : memref<12x342xf32, #tpu.memory_space<vmem>>, vector<4x16xf32>
    tpu.vector_store %arg5[%c0_95, %c253], %250 {strides = array<i32>} : memref<12x342xf32, #tpu.memory_space<vmem>>, vector<4x16xf32>,
    %252 = vector.extract_strided_slice %223 {offsets = [0, 224], sizes = [4, 16], strides = [1, 1]} : vector<4x256xf32> to vector<4x16xf32>
    %c0_96 = arith.constant 0 : index
    %c271 = arith.constant 271 : index
    %253 = vector.load %arg5[%c0_96, %c271] : memref<12x342xf32, #tpu.memory_space<vmem>>, vector<4x16xf32>
    tpu.vector_store %arg5[%c0_96, %c271], %252 {strides = array<i32>} : memref<12x342xf32, #tpu.memory_space<vmem>>, vector<4x16xf32>,
    %254 = vector.extract_strided_slice %223 {offsets = [0, 240], sizes = [4, 16], strides = [1, 1]} : vector<4x256xf32> to vector<4x16xf32>
    %c0_97 = arith.constant 0 : index
    %c289 = arith.constant 289 : index
    %255 = vector.load %arg5[%c0_97, %c289] : memref<12x342xf32, #tpu.memory_space<vmem>>, vector<4x16xf32>
    tpu.vector_store %arg5[%c0_97, %c289], %254 {strides = array<i32>} : memref<12x342xf32, #tpu.memory_space<vmem>>, vector<4x16xf32>,
    %c0_98 = arith.constant 0 : index
    %c0_99 = arith.constant 0 : index
    %256 = vector.load %arg5[%c0_98, %c0_99] : memref<12x342xf32, #tpu.memory_space<vmem>>, vector<4x288xf32>
    %c0_100 = arith.constant 0 : index
    %c0_101 = arith.constant 0 : index
    %c0_102 = arith.constant 0 : index
    %257 = vector.load %arg6[%c0_100, %c0_101, %c0_102] : memref<36x8x288xf32, #tpu.memory_space<vmem>>, vector<1x8x288xf32>
    %258 = vector.shape_cast %257 : vector<1x8x288xf32> to vector<8x288xf32>
    %259 = vector.extract_strided_slice %256 {offsets = [0, 0], sizes = [1, 288], strides = [1, 1]} : vector<4x288xf32> to vector<1x288xf32>
    %260 = vector.broadcast %259 : vector<1x288xf32> to vector<8x288xf32>
    %261 = arith.mulf %258, %260 : vector<8x288xf32>
    %262 = arith.addf %221, %261 : vector<8x288xf32>
    %c1_103 = arith.constant 1 : index
    %c0_104 = arith.constant 0 : index
    %c0_105 = arith.constant 0 : index
    %263 = vector.load %arg6[%c1_103, %c0_104, %c0_105] : memref<36x8x288xf32, #tpu.memory_space<vmem>>, vector<1x8x288xf32>
    %264 = vector.shape_cast %263 : vector<1x8x288xf32> to vector<8x288xf32>
    %265 = vector.extract_strided_slice %256 {offsets = [1, 0], sizes = [1, 288], strides = [1, 1]} : vector<4x288xf32> to vector<1x288xf32>
    %266 = vector.broadcast %265 : vector<1x288xf32> to vector<8x288xf32>
    %267 = arith.mulf %264, %266 : vector<8x288xf32>
    %268 = arith.addf %262, %267 : vector<8x288xf32>
    %c2_106 = arith.constant 2 : index
    %c0_107 = arith.constant 0 : index
    %c0_108 = arith.constant 0 : index
    %269 = vector.load %arg6[%c2_106, %c0_107, %c0_108] : memref<36x8x288xf32, #tpu.memory_space<vmem>>, vector<1x8x288xf32>
    %270 = vector.shape_cast %269 : vector<1x8x288xf32> to vector<8x288xf32>
    %271 = vector.extract_strided_slice %256 {offsets = [2, 0], sizes = [1, 288], strides = [1, 1]} : vector<4x288xf32> to vector<1x288xf32>
    %272 = vector.broadcast %271 : vector<1x288xf32> to vector<8x288xf32>
    %273 = arith.mulf %270, %272 : vector<8x288xf32>
    %274 = arith.addf %268, %273 : vector<8x288xf32>
    %c3_109 = arith.constant 3 : index
    %c0_110 = arith.constant 0 : index
    %c0_111 = arith.constant 0 : index
    %275 = vector.load %arg6[%c3_109, %c0_110, %c0_111] : memref<36x8x288xf32, #tpu.memory_space<vmem>>, vector<1x8x288xf32>
    %276 = vector.shape_cast %275 : vector<1x8x288xf32> to vector<8x288xf32>
    %277 = vector.extract_strided_slice %256 {offsets = [3, 0], sizes = [1, 288], strides = [1, 1]} : vector<4x288xf32> to vector<1x288xf32>
    %278 = vector.broadcast %277 : vector<1x288xf32> to vector<8x288xf32>
    %279 = arith.mulf %276, %278 : vector<8x288xf32>
    %280 = arith.addf %274, %279 : vector<8x288xf32>
    %c0_112 = arith.constant 0 : index
    %c1_113 = arith.constant 1 : index
    %281 = vector.load %arg5[%c0_112, %c1_113] : memref<12x342xf32, #tpu.memory_space<vmem>>, vector<4x288xf32>
    %c4_114 = arith.constant 4 : index
    %c0_115 = arith.constant 0 : index
    %c0_116 = arith.constant 0 : index
    %282 = vector.load %arg6[%c4_114, %c0_115, %c0_116] : memref<36x8x288xf32, #tpu.memory_space<vmem>>, vector<1x8x288xf32>
    %283 = vector.shape_cast %282 : vector<1x8x288xf32> to vector<8x288xf32>
    %284 = vector.extract_strided_slice %281 {offsets = [0, 0], sizes = [1, 288], strides = [1, 1]} : vector<4x288xf32> to vector<1x288xf32>
    %285 = vector.broadcast %284 : vector<1x288xf32> to vector<8x288xf32>
    %286 = arith.mulf %283, %285 : vector<8x288xf32>
    %287 = arith.addf %280, %286 : vector<8x288xf32>
    %c5_117 = arith.constant 5 : index
    %c0_118 = arith.constant 0 : index
    %c0_119 = arith.constant 0 : index
    %288 = vector.load %arg6[%c5_117, %c0_118, %c0_119] : memref<36x8x288xf32, #tpu.memory_space<vmem>>, vector<1x8x288xf32>
    %289 = vector.shape_cast %288 : vector<1x8x288xf32> to vector<8x288xf32>
    %290 = vector.extract_strided_slice %281 {offsets = [1, 0], sizes = [1, 288], strides = [1, 1]} : vector<4x288xf32> to vector<1x288xf32>
    %291 = vector.broadcast %290 : vector<1x288xf32> to vector<8x288xf32>
    %292 = arith.mulf %289, %291 : vector<8x288xf32>
    %293 = arith.addf %287, %292 : vector<8x288xf32>
    %c6_120 = arith.constant 6 : index
    %c0_121 = arith.constant 0 : index
    %c0_122 = arith.constant 0 : index
    %294 = vector.load %arg6[%c6_120, %c0_121, %c0_122] : memref<36x8x288xf32, #tpu.memory_space<vmem>>, vector<1x8x288xf32>
    %295 = vector.shape_cast %294 : vector<1x8x288xf32> to vector<8x288xf32>
    %296 = vector.extract_strided_slice %281 {offsets = [2, 0], sizes = [1, 288], strides = [1, 1]} : vector<4x288xf32> to vector<1x288xf32>
    %297 = vector.broadcast %296 : vector<1x288xf32> to vector<8x288xf32>
    %298 = arith.mulf %295, %297 : vector<8x288xf32>
    %299 = arith.addf %293, %298 : vector<8x288xf32>
    %c7_123 = arith.constant 7 : index
    %c0_124 = arith.constant 0 : index
    %c0_125 = arith.constant 0 : index
    %300 = vector.load %arg6[%c7_123, %c0_124, %c0_125] : memref<36x8x288xf32, #tpu.memory_space<vmem>>, vector<1x8x288xf32>
    %301 = vector.shape_cast %300 : vector<1x8x288xf32> to vector<8x288xf32>
    %302 = vector.extract_strided_slice %281 {offsets = [3, 0], sizes = [1, 288], strides = [1, 1]} : vector<4x288xf32> to vector<1x288xf32>
    %303 = vector.broadcast %302 : vector<1x288xf32> to vector<8x288xf32>
    %304 = arith.mulf %301, %303 : vector<8x288xf32>
    %305 = arith.addf %299, %304 : vector<8x288xf32>
    %c0_126 = arith.constant 0 : index
    %c2_127 = arith.constant 2 : index
    %306 = vector.load %arg5[%c0_126, %c2_127] : memref<12x342xf32, #tpu.memory_space<vmem>>, vector<4x288xf32>
    %c8_128 = arith.constant 8 : index
    %c0_129 = arith.constant 0 : index
    %c0_130 = arith.constant 0 : index
    %307 = vector.load %arg6[%c8_128, %c0_129, %c0_130] : memref<36x8x288xf32, #tpu.memory_space<vmem>>, vector<1x8x288xf32>
    %308 = vector.shape_cast %307 : vector<1x8x288xf32> to vector<8x288xf32>
    %309 = vector.extract_strided_slice %306 {offsets = [0, 0], sizes = [1, 288], strides = [1, 1]} : vector<4x288xf32> to vector<1x288xf32>
    %310 = vector.broadcast %309 : vector<1x288xf32> to vector<8x288xf32>
    %311 = arith.mulf %308, %310 : vector<8x288xf32>
    %312 = arith.addf %305, %311 : vector<8x288xf32>
    %c9_131 = arith.constant 9 : index
    %c0_132 = arith.constant 0 : index
    %c0_133 = arith.constant 0 : index
    %313 = vector.load %arg6[%c9_131, %c0_132, %c0_133] : memref<36x8x288xf32, #tpu.memory_space<vmem>>, vector<1x8x288xf32>
    %314 = vector.shape_cast %313 : vector<1x8x288xf32> to vector<8x288xf32>
    %315 = vector.extract_strided_slice %306 {offsets = [1, 0], sizes = [1, 288], strides = [1, 1]} : vector<4x288xf32> to vector<1x288xf32>
    %316 = vector.broadcast %315 : vector<1x288xf32> to vector<8x288xf32>
    %317 = arith.mulf %314, %316 : vector<8x288xf32>
    %318 = arith.addf %312, %317 : vector<8x288xf32>
    %c10_134 = arith.constant 10 : index
    %c0_135 = arith.constant 0 : index
    %c0_136 = arith.constant 0 : index
    %319 = vector.load %arg6[%c10_134, %c0_135, %c0_136] : memref<36x8x288xf32, #tpu.memory_space<vmem>>, vector<1x8x288xf32>
    %320 = vector.shape_cast %319 : vector<1x8x288xf32> to vector<8x288xf32>
    %321 = vector.extract_strided_slice %306 {offsets = [2, 0], sizes = [1, 288], strides = [1, 1]} : vector<4x288xf32> to vector<1x288xf32>
    %322 = vector.broadcast %321 : vector<1x288xf32> to vector<8x288xf32>
    %323 = arith.mulf %320, %322 : vector<8x288xf32>
    %324 = arith.addf %318, %323 : vector<8x288xf32>
    %c11_137 = arith.constant 11 : index
    %c0_138 = arith.constant 0 : index
    %c0_139 = arith.constant 0 : index
    %325 = vector.load %arg6[%c11_137, %c0_138, %c0_139] : memref<36x8x288xf32, #tpu.memory_space<vmem>>, vector<1x8x288xf32>
    %326 = vector.shape_cast %325 : vector<1x8x288xf32> to vector<8x288xf32>
    %327 = vector.extract_strided_slice %306 {offsets = [3, 0], sizes = [1, 288], strides = [1, 1]} : vector<4x288xf32> to vector<1x288xf32>
    %328 = vector.broadcast %327 : vector<1x288xf32> to vector<8x288xf32>
    %329 = arith.mulf %326, %328 : vector<8x288xf32>
    %330 = arith.addf %324, %329 : vector<8x288xf32>
    %c0_140 = arith.constant 0 : index
    %c18_141 = arith.constant 18 : index
    %331 = vector.load %arg5[%c0_140, %c18_141] : memref<12x342xf32, #tpu.memory_space<vmem>>, vector<4x288xf32>
    %c12_142 = arith.constant 12 : index
    %c0_143 = arith.constant 0 : index
    %c0_144 = arith.constant 0 : index
    %332 = vector.load %arg6[%c12_142, %c0_143, %c0_144] : memref<36x8x288xf32, #tpu.memory_space<vmem>>, vector<1x8x288xf32>
    %333 = vector.shape_cast %332 : vector<1x8x288xf32> to vector<8x288xf32>
    %334 = vector.extract_strided_slice %331 {offsets = [0, 0], sizes = [1, 288], strides = [1, 1]} : vector<4x288xf32> to vector<1x288xf32>
    %335 = vector.broadcast %334 : vector<1x288xf32> to vector<8x288xf32>
    %336 = arith.mulf %333, %335 : vector<8x288xf32>
    %337 = arith.addf %330, %336 : vector<8x288xf32>
    %c13_145 = arith.constant 13 : index
    %c0_146 = arith.constant 0 : index
    %c0_147 = arith.constant 0 : index
    %338 = vector.load %arg6[%c13_145, %c0_146, %c0_147] : memref<36x8x288xf32, #tpu.memory_space<vmem>>, vector<1x8x288xf32>
    %339 = vector.shape_cast %338 : vector<1x8x288xf32> to vector<8x288xf32>
    %340 = vector.extract_strided_slice %331 {offsets = [1, 0], sizes = [1, 288], strides = [1, 1]} : vector<4x288xf32> to vector<1x288xf32>
    %341 = vector.broadcast %340 : vector<1x288xf32> to vector<8x288xf32>
    %342 = arith.mulf %339, %341 : vector<8x288xf32>
    %343 = arith.addf %337, %342 : vector<8x288xf32>
    %c14_148 = arith.constant 14 : index
    %c0_149 = arith.constant 0 : index
    %c0_150 = arith.constant 0 : index
    %344 = vector.load %arg6[%c14_148, %c0_149, %c0_150] : memref<36x8x288xf32, #tpu.memory_space<vmem>>, vector<1x8x288xf32>
    %345 = vector.shape_cast %344 : vector<1x8x288xf32> to vector<8x288xf32>
    %346 = vector.extract_strided_slice %331 {offsets = [2, 0], sizes = [1, 288], strides = [1, 1]} : vector<4x288xf32> to vector<1x288xf32>
    %347 = vector.broadcast %346 : vector<1x288xf32> to vector<8x288xf32>
    %348 = arith.mulf %345, %347 : vector<8x288xf32>
    %349 = arith.addf %343, %348 : vector<8x288xf32>
    %c15_151 = arith.constant 15 : index
    %c0_152 = arith.constant 0 : index
    %c0_153 = arith.constant 0 : index
    %350 = vector.load %arg6[%c15_151, %c0_152, %c0_153] : memref<36x8x288xf32, #tpu.memory_space<vmem>>, vector<1x8x288xf32>
    %351 = vector.shape_cast %350 : vector<1x8x288xf32> to vector<8x288xf32>
    %352 = vector.extract_strided_slice %331 {offsets = [3, 0], sizes = [1, 288], strides = [1, 1]} : vector<4x288xf32> to vector<1x288xf32>
    %353 = vector.broadcast %352 : vector<1x288xf32> to vector<8x288xf32>
    %354 = arith.mulf %351, %353 : vector<8x288xf32>
    %355 = arith.addf %349, %354 : vector<8x288xf32>
    %c0_154 = arith.constant 0 : index
    %c19_155 = arith.constant 19 : index
    %356 = vector.load %arg5[%c0_154, %c19_155] : memref<12x342xf32, #tpu.memory_space<vmem>>, vector<4x288xf32>
    %c16_156 = arith.constant 16 : index
    %c0_157 = arith.constant 0 : index
    %c0_158 = arith.constant 0 : index
    %357 = vector.load %arg6[%c16_156, %c0_157, %c0_158] : memref<36x8x288xf32, #tpu.memory_space<vmem>>, vector<1x8x288xf32>
    %358 = vector.shape_cast %357 : vector<1x8x288xf32> to vector<8x288xf32>
    %359 = vector.extract_strided_slice %356 {offsets = [0, 0], sizes = [1, 288], strides = [1, 1]} : vector<4x288xf32> to vector<1x288xf32>
    %360 = vector.broadcast %359 : vector<1x288xf32> to vector<8x288xf32>
    %361 = arith.mulf %358, %360 : vector<8x288xf32>
    %362 = arith.addf %355, %361 : vector<8x288xf32>
    %c17_159 = arith.constant 17 : index
    %c0_160 = arith.constant 0 : index
    %c0_161 = arith.constant 0 : index
    %363 = vector.load %arg6[%c17_159, %c0_160, %c0_161] : memref<36x8x288xf32, #tpu.memory_space<vmem>>, vector<1x8x288xf32>
    %364 = vector.shape_cast %363 : vector<1x8x288xf32> to vector<8x288xf32>
    %365 = vector.extract_strided_slice %356 {offsets = [1, 0], sizes = [1, 288], strides = [1, 1]} : vector<4x288xf32> to vector<1x288xf32>
    %366 = vector.broadcast %365 : vector<1x288xf32> to vector<8x288xf32>
    %367 = arith.mulf %364, %366 : vector<8x288xf32>
    %368 = arith.addf %362, %367 : vector<8x288xf32>
    %c18_162 = arith.constant 18 : index
    %c0_163 = arith.constant 0 : index
    %c0_164 = arith.constant 0 : index
    %369 = vector.load %arg6[%c18_162, %c0_163, %c0_164] : memref<36x8x288xf32, #tpu.memory_space<vmem>>, vector<1x8x288xf32>
    %370 = vector.shape_cast %369 : vector<1x8x288xf32> to vector<8x288xf32>
    %371 = vector.extract_strided_slice %356 {offsets = [2, 0], sizes = [1, 288], strides = [1, 1]} : vector<4x288xf32> to vector<1x288xf32>
    %372 = vector.broadcast %371 : vector<1x288xf32> to vector<8x288xf32>
    %373 = arith.mulf %370, %372 : vector<8x288xf32>
    %374 = arith.addf %368, %373 : vector<8x288xf32>
    %c19_165 = arith.constant 19 : index
    %c0_166 = arith.constant 0 : index
    %c0_167 = arith.constant 0 : index
    %375 = vector.load %arg6[%c19_165, %c0_166, %c0_167] : memref<36x8x288xf32, #tpu.memory_space<vmem>>, vector<1x8x288xf32>
    %376 = vector.shape_cast %375 : vector<1x8x288xf32> to vector<8x288xf32>
    %377 = vector.extract_strided_slice %356 {offsets = [3, 0], sizes = [1, 288], strides = [1, 1]} : vector<4x288xf32> to vector<1x288xf32>
    %378 = vector.broadcast %377 : vector<1x288xf32> to vector<8x288xf32>
    %379 = arith.mulf %376, %378 : vector<8x288xf32>
    %380 = arith.addf %374, %379 : vector<8x288xf32>
    %c0_168 = arith.constant 0 : index
    %c20_169 = arith.constant 20 : index
    %381 = vector.load %arg5[%c0_168, %c20_169] : memref<12x342xf32, #tpu.memory_space<vmem>>, vector<4x288xf32>
    %c20_170 = arith.constant 20 : index
    %c0_171 = arith.constant 0 : index
    %c0_172 = arith.constant 0 : index
    %382 = vector.load %arg6[%c20_170, %c0_171, %c0_172] : memref<36x8x288xf32, #tpu.memory_space<vmem>>, vector<1x8x288xf32>
    %383 = vector.shape_cast %382 : vector<1x8x288xf32> to vector<8x288xf32>
    %384 = vector.extract_strided_slice %381 {offsets = [0, 0], sizes = [1, 288], strides = [1, 1]} : vector<4x288xf32> to vector<1x288xf32>
    %385 = vector.broadcast %384 : vector<1x288xf32> to vector<8x288xf32>
    %386 = arith.mulf %383, %385 : vector<8x288xf32>
    %387 = arith.addf %380, %386 : vector<8x288xf32>
    %c21_173 = arith.constant 21 : index
    %c0_174 = arith.constant 0 : index
    %c0_175 = arith.constant 0 : index
    %388 = vector.load %arg6[%c21_173, %c0_174, %c0_175] : memref<36x8x288xf32, #tpu.memory_space<vmem>>, vector<1x8x288xf32>
    %389 = vector.shape_cast %388 : vector<1x8x288xf32> to vector<8x288xf32>
    %390 = vector.extract_strided_slice %381 {offsets = [1, 0], sizes = [1, 288], strides = [1, 1]} : vector<4x288xf32> to vector<1x288xf32>
    %391 = vector.broadcast %390 : vector<1x288xf32> to vector<8x288xf32>
    %392 = arith.mulf %389, %391 : vector<8x288xf32>
    %393 = arith.addf %387, %392 : vector<8x288xf32>
    %c22_176 = arith.constant 22 : index
    %c0_177 = arith.constant 0 : index
    %c0_178 = arith.constant 0 : index
    %394 = vector.load %arg6[%c22_176, %c0_177, %c0_178] : memref<36x8x288xf32, #tpu.memory_space<vmem>>, vector<1x8x288xf32>
    %395 = vector.shape_cast %394 : vector<1x8x288xf32> to vector<8x288xf32>
    %396 = vector.extract_strided_slice %381 {offsets = [2, 0], sizes = [1, 288], strides = [1, 1]} : vector<4x288xf32> to vector<1x288xf32>
    %397 = vector.broadcast %396 : vector<1x288xf32> to vector<8x288xf32>
    %398 = arith.mulf %395, %397 : vector<8x288xf32>
    %399 = arith.addf %393, %398 : vector<8x288xf32>
    %c23_179 = arith.constant 23 : index
    %c0_180 = arith.constant 0 : index
    %c0_181 = arith.constant 0 : index
    %400 = vector.load %arg6[%c23_179, %c0_180, %c0_181] : memref<36x8x288xf32, #tpu.memory_space<vmem>>, vector<1x8x288xf32>
    %401 = vector.shape_cast %400 : vector<1x8x288xf32> to vector<8x288xf32>
    %402 = vector.extract_strided_slice %381 {offsets = [3, 0], sizes = [1, 288], strides = [1, 1]} : vector<4x288xf32> to vector<1x288xf32>
    %403 = vector.broadcast %402 : vector<1x288xf32> to vector<8x288xf32>
    %404 = arith.mulf %401, %403 : vector<8x288xf32>
    %405 = arith.addf %399, %404 : vector<8x288xf32>
    %c0_182 = arith.constant 0 : index
    %c36 = arith.constant 36 : index
    %406 = vector.load %arg5[%c0_182, %c36] : memref<12x342xf32, #tpu.memory_space<vmem>>, vector<4x288xf32>
    %c24_183 = arith.constant 24 : index
    %c0_184 = arith.constant 0 : index
    %c0_185 = arith.constant 0 : index
    %407 = vector.load %arg6[%c24_183, %c0_184, %c0_185] : memref<36x8x288xf32, #tpu.memory_space<vmem>>, vector<1x8x288xf32>
    %408 = vector.shape_cast %407 : vector<1x8x288xf32> to vector<8x288xf32>
    %409 = vector.extract_strided_slice %406 {offsets = [0, 0], sizes = [1, 288], strides = [1, 1]} : vector<4x288xf32> to vector<1x288xf32>
    %410 = vector.broadcast %409 : vector<1x288xf32> to vector<8x288xf32>
    %411 = arith.mulf %408, %410 : vector<8x288xf32>
    %412 = arith.addf %405, %411 : vector<8x288xf32>
    %c25_186 = arith.constant 25 : index
    %c0_187 = arith.constant 0 : index
    %c0_188 = arith.constant 0 : index
    %413 = vector.load %arg6[%c25_186, %c0_187, %c0_188] : memref<36x8x288xf32, #tpu.memory_space<vmem>>, vector<1x8x288xf32>
    %414 = vector.shape_cast %413 : vector<1x8x288xf32> to vector<8x288xf32>
    %415 = vector.extract_strided_slice %406 {offsets = [1, 0], sizes = [1, 288], strides = [1, 1]} : vector<4x288xf32> to vector<1x288xf32>
    %416 = vector.broadcast %415 : vector<1x288xf32> to vector<8x288xf32>
    %417 = arith.mulf %414, %416 : vector<8x288xf32>
    %418 = arith.addf %412, %417 : vector<8x288xf32>
    %c26_189 = arith.constant 26 : index
    %c0_190 = arith.constant 0 : index
    %c0_191 = arith.constant 0 : index
    %419 = vector.load %arg6[%c26_189, %c0_190, %c0_191] : memref<36x8x288xf32, #tpu.memory_space<vmem>>, vector<1x8x288xf32>
    %420 = vector.shape_cast %419 : vector<1x8x288xf32> to vector<8x288xf32>
    %421 = vector.extract_strided_slice %406 {offsets = [2, 0], sizes = [1, 288], strides = [1, 1]} : vector<4x288xf32> to vector<1x288xf32>
    %422 = vector.broadcast %421 : vector<1x288xf32> to vector<8x288xf32>
    %423 = arith.mulf %420, %422 : vector<8x288xf32>
    %424 = arith.addf %418, %423 : vector<8x288xf32>
    %c27_192 = arith.constant 27 : index
    %c0_193 = arith.constant 0 : index
    %c0_194 = arith.constant 0 : index
    %425 = vector.load %arg6[%c27_192, %c0_193, %c0_194] : memref<36x8x288xf32, #tpu.memory_space<vmem>>, vector<1x8x288xf32>
    %426 = vector.shape_cast %425 : vector<1x8x288xf32> to vector<8x288xf32>
    %427 = vector.extract_strided_slice %406 {offsets = [3, 0], sizes = [1, 288], strides = [1, 1]} : vector<4x288xf32> to vector<1x288xf32>
    %428 = vector.broadcast %427 : vector<1x288xf32> to vector<8x288xf32>
    %429 = arith.mulf %426, %428 : vector<8x288xf32>
    %430 = arith.addf %424, %429 : vector<8x288xf32>
    %c0_195 = arith.constant 0 : index
    %c37_196 = arith.constant 37 : index
    %431 = vector.load %arg5[%c0_195, %c37_196] : memref<12x342xf32, #tpu.memory_space<vmem>>, vector<4x288xf32>
    %c28_197 = arith.constant 28 : index
    %c0_198 = arith.constant 0 : index
    %c0_199 = arith.constant 0 : index
    %432 = vector.load %arg6[%c28_197, %c0_198, %c0_199] : memref<36x8x288xf32, #tpu.memory_space<vmem>>, vector<1x8x288xf32>
    %433 = vector.shape_cast %432 : vector<1x8x288xf32> to vector<8x288xf32>
    %434 = vector.extract_strided_slice %431 {offsets = [0, 0], sizes = [1, 288], strides = [1, 1]} : vector<4x288xf32> to vector<1x288xf32>
    %435 = vector.broadcast %434 : vector<1x288xf32> to vector<8x288xf32>
    %436 = arith.mulf %433, %435 : vector<8x288xf32>
    %437 = arith.addf %430, %436 : vector<8x288xf32>
    %c29_200 = arith.constant 29 : index
    %c0_201 = arith.constant 0 : index
    %c0_202 = arith.constant 0 : index
    %438 = vector.load %arg6[%c29_200, %c0_201, %c0_202] : memref<36x8x288xf32, #tpu.memory_space<vmem>>, vector<1x8x288xf32>
    %439 = vector.shape_cast %438 : vector<1x8x288xf32> to vector<8x288xf32>
    %440 = vector.extract_strided_slice %431 {offsets = [1, 0], sizes = [1, 288], strides = [1, 1]} : vector<4x288xf32> to vector<1x288xf32>
    %441 = vector.broadcast %440 : vector<1x288xf32> to vector<8x288xf32>
    %442 = arith.mulf %439, %441 : vector<8x288xf32>
    %443 = arith.addf %437, %442 : vector<8x288xf32>
    %c30_203 = arith.constant 30 : index
    %c0_204 = arith.constant 0 : index
    %c0_205 = arith.constant 0 : index
    %444 = vector.load %arg6[%c30_203, %c0_204, %c0_205] : memref<36x8x288xf32, #tpu.memory_space<vmem>>, vector<1x8x288xf32>
    %445 = vector.shape_cast %444 : vector<1x8x288xf32> to vector<8x288xf32>
    %446 = vector.extract_strided_slice %431 {offsets = [2, 0], sizes = [1, 288], strides = [1, 1]} : vector<4x288xf32> to vector<1x288xf32>
    %447 = vector.broadcast %446 : vector<1x288xf32> to vector<8x288xf32>
    %448 = arith.mulf %445, %447 : vector<8x288xf32>
    %449 = arith.addf %443, %448 : vector<8x288xf32>
    %c31_206 = arith.constant 31 : index
    %c0_207 = arith.constant 0 : index
    %c0_208 = arith.constant 0 : index
    %450 = vector.load %arg6[%c31_206, %c0_207, %c0_208] : memref<36x8x288xf32, #tpu.memory_space<vmem>>, vector<1x8x288xf32>
    %451 = vector.shape_cast %450 : vector<1x8x288xf32> to vector<8x288xf32>
    %452 = vector.extract_strided_slice %431 {offsets = [3, 0], sizes = [1, 288], strides = [1, 1]} : vector<4x288xf32> to vector<1x288xf32>
    %453 = vector.broadcast %452 : vector<1x288xf32> to vector<8x288xf32>
    %454 = arith.mulf %451, %453 : vector<8x288xf32>
    %455 = arith.addf %449, %454 : vector<8x288xf32>
    %c0_209 = arith.constant 0 : index
    %c38 = arith.constant 38 : index
    %456 = vector.load %arg5[%c0_209, %c38] : memref<12x342xf32, #tpu.memory_space<vmem>>, vector<4x288xf32>
    %c32_210 = arith.constant 32 : index
    %c0_211 = arith.constant 0 : index
    %c0_212 = arith.constant 0 : index
    %457 = vector.load %arg6[%c32_210, %c0_211, %c0_212] : memref<36x8x288xf32, #tpu.memory_space<vmem>>, vector<1x8x288xf32>
    %458 = vector.shape_cast %457 : vector<1x8x288xf32> to vector<8x288xf32>
    %459 = vector.extract_strided_slice %456 {offsets = [0, 0], sizes = [1, 288], strides = [1, 1]} : vector<4x288xf32> to vector<1x288xf32>
    %460 = vector.broadcast %459 : vector<1x288xf32> to vector<8x288xf32>
    %461 = arith.mulf %458, %460 : vector<8x288xf32>
    %462 = arith.addf %455, %461 : vector<8x288xf32>
    %c33_213 = arith.constant 33 : index
    %c0_214 = arith.constant 0 : index
    %c0_215 = arith.constant 0 : index
    %463 = vector.load %arg6[%c33_213, %c0_214, %c0_215] : memref<36x8x288xf32, #tpu.memory_space<vmem>>, vector<1x8x288xf32>
    %464 = vector.shape_cast %463 : vector<1x8x288xf32> to vector<8x288xf32>
    %465 = vector.extract_strided_slice %456 {offsets = [1, 0], sizes = [1, 288], strides = [1, 1]} : vector<4x288xf32> to vector<1x288xf32>
    %466 = vector.broadcast %465 : vector<1x288xf32> to vector<8x288xf32>
    %467 = arith.mulf %464, %466 : vector<8x288xf32>
    %468 = arith.addf %462, %467 : vector<8x288xf32>
    %c34_216 = arith.constant 34 : index
    %c0_217 = arith.constant 0 : index
    %c0_218 = arith.constant 0 : index
    %469 = vector.load %arg6[%c34_216, %c0_217, %c0_218] : memref<36x8x288xf32, #tpu.memory_space<vmem>>, vector<1x8x288xf32>
    %470 = vector.shape_cast %469 : vector<1x8x288xf32> to vector<8x288xf32>
    %471 = vector.extract_strided_slice %456 {offsets = [2, 0], sizes = [1, 288], strides = [1, 1]} : vector<4x288xf32> to vector<1x288xf32>
    %472 = vector.broadcast %471 : vector<1x288xf32> to vector<8x288xf32>
    %473 = arith.mulf %470, %472 : vector<8x288xf32>
    %474 = arith.addf %468, %473 : vector<8x288xf32>
    %c35_219 = arith.constant 35 : index
    %c0_220 = arith.constant 0 : index
    %c0_221 = arith.constant 0 : index
    %475 = vector.load %arg6[%c35_219, %c0_220, %c0_221] : memref<36x8x288xf32, #tpu.memory_space<vmem>>, vector<1x8x288xf32>
    %476 = vector.shape_cast %475 : vector<1x8x288xf32> to vector<8x288xf32>
    %477 = vector.extract_strided_slice %456 {offsets = [3, 0], sizes = [1, 288], strides = [1, 1]} : vector<4x288xf32> to vector<1x288xf32>
    %478 = vector.broadcast %477 : vector<1x288xf32> to vector<8x288xf32>
    %479 = arith.mulf %476, %478 : vector<8x288xf32>
    %480 = arith.addf %474, %479 : vector<8x288xf32>
    %481 = vector.extract_strided_slice %480 {offsets = [0, 0], sizes = [8, 16], strides = [1, 1]} : vector<8x288xf32> to vector<8x16xf32>
    %c0_222 = arith.constant 0 : index
    %c0_223 = arith.constant 0 : index
    %c0_224 = arith.constant 0 : index
    %482 = vector.load %arg4[%c0_222, %c0_223, %c0_224] : memref<2x8x256xf32, #tpu.memory_space<vmem>>, vector<1x8x16xf32>
    %483 = vector.shape_cast %482 : vector<1x8x16xf32> to vector<8x16xf32>
    %484 = vector.shape_cast %481 : vector<8x16xf32> to vector<1x8x16xf32>
    tpu.vector_store %arg4[%c0_222, %c0_223, %c0_224], %484 {strides = array<i32>} : memref<2x8x256xf32, #tpu.memory_space<vmem>>, vector<1x8x16xf32>,
    %485 = vector.extract_strided_slice %480 {offsets = [0, 18], sizes = [8, 16], strides = [1, 1]} : vector<8x288xf32> to vector<8x16xf32>
    %c0_225 = arith.constant 0 : index
    %c0_226 = arith.constant 0 : index
    %c16_227 = arith.constant 16 : index
    %486 = vector.load %arg4[%c0_225, %c0_226, %c16_227] : memref<2x8x256xf32, #tpu.memory_space<vmem>>, vector<1x8x16xf32>
    %487 = vector.shape_cast %486 : vector<1x8x16xf32> to vector<8x16xf32>
    %488 = vector.shape_cast %485 : vector<8x16xf32> to vector<1x8x16xf32>
    tpu.vector_store %arg4[%c0_225, %c0_226, %c16_227], %488 {strides = array<i32>} : memref<2x8x256xf32, #tpu.memory_space<vmem>>, vector<1x8x16xf32>,
    %489 = vector.extract_strided_slice %480 {offsets = [0, 36], sizes = [8, 16], strides = [1, 1]} : vector<8x288xf32> to vector<8x16xf32>
    %c0_228 = arith.constant 0 : index
    %c0_229 = arith.constant 0 : index
    %c32_230 = arith.constant 32 : index
    %490 = vector.load %arg4[%c0_228, %c0_229, %c32_230] : memref<2x8x256xf32, #tpu.memory_space<vmem>>, vector<1x8x16xf32>
    %491 = vector.shape_cast %490 : vector<1x8x16xf32> to vector<8x16xf32>
    %492 = vector.shape_cast %489 : vector<8x16xf32> to vector<1x8x16xf32>
    tpu.vector_store %arg4[%c0_228, %c0_229, %c32_230], %492 {strides = array<i32>} : memref<2x8x256xf32, #tpu.memory_space<vmem>>, vector<1x8x16xf32>,
    %493 = vector.extract_strided_slice %480 {offsets = [0, 54], sizes = [8, 16], strides = [1, 1]} : vector<8x288xf32> to vector<8x16xf32>
    %c0_231 = arith.constant 0 : index
    %c0_232 = arith.constant 0 : index
    %c48 = arith.constant 48 : index
    %494 = vector.load %arg4[%c0_231, %c0_232, %c48] : memref<2x8x256xf32, #tpu.memory_space<vmem>>, vector<1x8x16xf32>
    %495 = vector.shape_cast %494 : vector<1x8x16xf32> to vector<8x16xf32>
    %496 = vector.shape_cast %493 : vector<8x16xf32> to vector<1x8x16xf32>
    tpu.vector_store %arg4[%c0_231, %c0_232, %c48], %496 {strides = array<i32>} : memref<2x8x256xf32, #tpu.memory_space<vmem>>, vector<1x8x16xf32>,
    %497 = vector.extract_strided_slice %480 {offsets = [0, 72], sizes = [8, 16], strides = [1, 1]} : vector<8x288xf32> to vector<8x16xf32>
    %c0_233 = arith.constant 0 : index
    %c0_234 = arith.constant 0 : index
    %c64 = arith.constant 64 : index
    %498 = vector.load %arg4[%c0_233, %c0_234, %c64] : memref<2x8x256xf32, #tpu.memory_space<vmem>>, vector<1x8x16xf32>
    %499 = vector.shape_cast %498 : vector<1x8x16xf32> to vector<8x16xf32>
    %500 = vector.shape_cast %497 : vector<8x16xf32> to vector<1x8x16xf32>
    tpu.vector_store %arg4[%c0_233, %c0_234, %c64], %500 {strides = array<i32>} : memref<2x8x256xf32, #tpu.memory_space<vmem>>, vector<1x8x16xf32>,
    %501 = vector.extract_strided_slice %480 {offsets = [0, 90], sizes = [8, 16], strides = [1, 1]} : vector<8x288xf32> to vector<8x16xf32>
    %c0_235 = arith.constant 0 : index
    %c0_236 = arith.constant 0 : index
    %c80 = arith.constant 80 : index
    %502 = vector.load %arg4[%c0_235, %c0_236, %c80] : memref<2x8x256xf32, #tpu.memory_space<vmem>>, vector<1x8x16xf32>
    %503 = vector.shape_cast %502 : vector<1x8x16xf32> to vector<8x16xf32>
    %504 = vector.shape_cast %501 : vector<8x16xf32> to vector<1x8x16xf32>
    tpu.vector_store %arg4[%c0_235, %c0_236, %c80], %504 {strides = array<i32>} : memref<2x8x256xf32, #tpu.memory_space<vmem>>, vector<1x8x16xf32>,
    %505 = vector.extract_strided_slice %480 {offsets = [0, 108], sizes = [8, 16], strides = [1, 1]} : vector<8x288xf32> to vector<8x16xf32>
    %c0_237 = arith.constant 0 : index
    %c0_238 = arith.constant 0 : index
    %c96 = arith.constant 96 : index
    %506 = vector.load %arg4[%c0_237, %c0_238, %c96] : memref<2x8x256xf32, #tpu.memory_space<vmem>>, vector<1x8x16xf32>
    %507 = vector.shape_cast %506 : vector<1x8x16xf32> to vector<8x16xf32>
    %508 = vector.shape_cast %505 : vector<8x16xf32> to vector<1x8x16xf32>
    tpu.vector_store %arg4[%c0_237, %c0_238, %c96], %508 {strides = array<i32>} : memref<2x8x256xf32, #tpu.memory_space<vmem>>, vector<1x8x16xf32>,
    %509 = vector.extract_strided_slice %480 {offsets = [0, 126], sizes = [8, 16], strides = [1, 1]} : vector<8x288xf32> to vector<8x16xf32>
    %c0_239 = arith.constant 0 : index
    %c0_240 = arith.constant 0 : index
    %c112 = arith.constant 112 : index
    %510 = vector.load %arg4[%c0_239, %c0_240, %c112] : memref<2x8x256xf32, #tpu.memory_space<vmem>>, vector<1x8x16xf32>
    %511 = vector.shape_cast %510 : vector<1x8x16xf32> to vector<8x16xf32>
    %512 = vector.shape_cast %509 : vector<8x16xf32> to vector<1x8x16xf32>
    tpu.vector_store %arg4[%c0_239, %c0_240, %c112], %512 {strides = array<i32>} : memref<2x8x256xf32, #tpu.memory_space<vmem>>, vector<1x8x16xf32>,
    %513 = vector.extract_strided_slice %480 {offsets = [0, 144], sizes = [8, 16], strides = [1, 1]} : vector<8x288xf32> to vector<8x16xf32>
    %c0_241 = arith.constant 0 : index
    %c0_242 = arith.constant 0 : index
    %c128 = arith.constant 128 : index
    %514 = vector.load %arg4[%c0_241, %c0_242, %c128] : memref<2x8x256xf32, #tpu.memory_space<vmem>>, vector<1x8x16xf32>
    %515 = vector.shape_cast %514 : vector<1x8x16xf32> to vector<8x16xf32>
    %516 = vector.shape_cast %513 : vector<8x16xf32> to vector<1x8x16xf32>
    tpu.vector_store %arg4[%c0_241, %c0_242, %c128], %516 {strides = array<i32>} : memref<2x8x256xf32, #tpu.memory_space<vmem>>, vector<1x8x16xf32>,
    %517 = vector.extract_strided_slice %480 {offsets = [0, 162], sizes = [8, 16], strides = [1, 1]} : vector<8x288xf32> to vector<8x16xf32>
    %c0_243 = arith.constant 0 : index
    %c0_244 = arith.constant 0 : index
    %c144 = arith.constant 144 : index
    %518 = vector.load %arg4[%c0_243, %c0_244, %c144] : memref<2x8x256xf32, #tpu.memory_space<vmem>>, vector<1x8x16xf32>
    %519 = vector.shape_cast %518 : vector<1x8x16xf32> to vector<8x16xf32>
    %520 = vector.shape_cast %517 : vector<8x16xf32> to vector<1x8x16xf32>
    tpu.vector_store %arg4[%c0_243, %c0_244, %c144], %520 {strides = array<i32>} : memref<2x8x256xf32, #tpu.memory_space<vmem>>, vector<1x8x16xf32>,
    %521 = vector.extract_strided_slice %480 {offsets = [0, 180], sizes = [8, 16], strides = [1, 1]} : vector<8x288xf32> to vector<8x16xf32>
    %c0_245 = arith.constant 0 : index
    %c0_246 = arith.constant 0 : index
    %c160 = arith.constant 160 : index
    %522 = vector.load %arg4[%c0_245, %c0_246, %c160] : memref<2x8x256xf32, #tpu.memory_space<vmem>>, vector<1x8x16xf32>
    %523 = vector.shape_cast %522 : vector<1x8x16xf32> to vector<8x16xf32>
    %524 = vector.shape_cast %521 : vector<8x16xf32> to vector<1x8x16xf32>
    tpu.vector_store %arg4[%c0_245, %c0_246, %c160], %524 {strides = array<i32>} : memref<2x8x256xf32, #tpu.memory_space<vmem>>, vector<1x8x16xf32>,
    %525 = vector.extract_strided_slice %480 {offsets = [0, 198], sizes = [8, 16], strides = [1, 1]} : vector<8x288xf32> to vector<8x16xf32>
    %c0_247 = arith.constant 0 : index
    %c0_248 = arith.constant 0 : index
    %c176 = arith.constant 176 : index
    %526 = vector.load %arg4[%c0_247, %c0_248, %c176] : memref<2x8x256xf32, #tpu.memory_space<vmem>>, vector<1x8x16xf32>
    %527 = vector.shape_cast %526 : vector<1x8x16xf32> to vector<8x16xf32>
    %528 = vector.shape_cast %525 : vector<8x16xf32> to vector<1x8x16xf32>
    tpu.vector_store %arg4[%c0_247, %c0_248, %c176], %528 {strides = array<i32>} : memref<2x8x256xf32, #tpu.memory_space<vmem>>, vector<1x8x16xf32>,
    %529 = vector.extract_strided_slice %480 {offsets = [0, 216], sizes = [8, 16], strides = [1, 1]} : vector<8x288xf32> to vector<8x16xf32>
    %c0_249 = arith.constant 0 : index
    %c0_250 = arith.constant 0 : index
    %c192 = arith.constant 192 : index
    %530 = vector.load %arg4[%c0_249, %c0_250, %c192] : memref<2x8x256xf32, #tpu.memory_space<vmem>>, vector<1x8x16xf32>
    %531 = vector.shape_cast %530 : vector<1x8x16xf32> to vector<8x16xf32>
    %532 = vector.shape_cast %529 : vector<8x16xf32> to vector<1x8x16xf32>
    tpu.vector_store %arg4[%c0_249, %c0_250, %c192], %532 {strides = array<i32>} : memref<2x8x256xf32, #tpu.memory_space<vmem>>, vector<1x8x16xf32>,
    %533 = vector.extract_strided_slice %480 {offsets = [0, 234], sizes = [8, 16], strides = [1, 1]} : vector<8x288xf32> to vector<8x16xf32>
    %c0_251 = arith.constant 0 : index
    %c0_252 = arith.constant 0 : index
    %c208 = arith.constant 208 : index
    %534 = vector.load %arg4[%c0_251, %c0_252, %c208] : memref<2x8x256xf32, #tpu.memory_space<vmem>>, vector<1x8x16xf32>
    %535 = vector.shape_cast %534 : vector<1x8x16xf32> to vector<8x16xf32>
    %536 = vector.shape_cast %533 : vector<8x16xf32> to vector<1x8x16xf32>
    tpu.vector_store %arg4[%c0_251, %c0_252, %c208], %536 {strides = array<i32>} : memref<2x8x256xf32, #tpu.memory_space<vmem>>, vector<1x8x16xf32>,
    %537 = vector.extract_strided_slice %480 {offsets = [0, 252], sizes = [8, 16], strides = [1, 1]} : vector<8x288xf32> to vector<8x16xf32>
    %c0_253 = arith.constant 0 : index
    %c0_254 = arith.constant 0 : index
    %c224 = arith.constant 224 : index
    %538 = vector.load %arg4[%c0_253, %c0_254, %c224] : memref<2x8x256xf32, #tpu.memory_space<vmem>>, vector<1x8x16xf32>
    %539 = vector.shape_cast %538 : vector<1x8x16xf32> to vector<8x16xf32>
    %540 = vector.shape_cast %537 : vector<8x16xf32> to vector<1x8x16xf32>
    tpu.vector_store %arg4[%c0_253, %c0_254, %c224], %540 {strides = array<i32>} : memref<2x8x256xf32, #tpu.memory_space<vmem>>, vector<1x8x16xf32>,
    %541 = vector.extract_strided_slice %480 {offsets = [0, 270], sizes = [8, 16], strides = [1, 1]} : vector<8x288xf32> to vector<8x16xf32>
    %c0_255 = arith.constant 0 : index
    %c0_256 = arith.constant 0 : index
    %c240 = arith.constant 240 : index
    %542 = vector.load %arg4[%c0_255, %c0_256, %c240] : memref<2x8x256xf32, #tpu.memory_space<vmem>>, vector<1x8x16xf32>
    %543 = vector.shape_cast %542 : vector<1x8x16xf32> to vector<8x16xf32>
    %544 = vector.shape_cast %541 : vector<8x16xf32> to vector<1x8x16xf32>
    tpu.vector_store %arg4[%c0_255, %c0_256, %c240], %544 {strides = array<i32>} : memref<2x8x256xf32, #tpu.memory_space<vmem>>, vector<1x8x16xf32>,
    %c1_257 = arith.constant 1 : index
    %c0_258 = arith.constant 0 : index
    %c0_259 = arith.constant 0 : index
    %545 = vector.load %arg3[%c1_257, %c0_258, %c0_259] : memref<2x4x256xf32, #tpu.memory_space<vmem>>, vector<1x4x256xf32>
    %546 = vector.shape_cast %545 : vector<1x4x256xf32> to vector<4x256xf32>
    %547 = vector.extract_strided_slice %546 {offsets = [0, 0], sizes = [4, 16], strides = [1, 1]} : vector<4x256xf32> to vector<4x16xf32>
    %c0_260 = arith.constant 0 : index
    %c19_261 = arith.constant 19 : index
    %548 = vector.load %arg5[%c0_260, %c19_261] : memref<12x342xf32, #tpu.memory_space<vmem>>, vector<4x16xf32>
    tpu.vector_store %arg5[%c0_260, %c19_261], %547 {strides = array<i32>} : memref<12x342xf32, #tpu.memory_space<vmem>>, vector<4x16xf32>,
    %549 = vector.extract_strided_slice %546 {offsets = [0, 16], sizes = [4, 16], strides = [1, 1]} : vector<4x256xf32> to vector<4x16xf32>
    %c0_262 = arith.constant 0 : index
    %c37_263 = arith.constant 37 : index
    %550 = vector.load %arg5[%c0_262, %c37_263] : memref<12x342xf32, #tpu.memory_space<vmem>>, vector<4x16xf32>
    tpu.vector_store %arg5[%c0_262, %c37_263], %549 {strides = array<i32>} : memref<12x342xf32, #tpu.memory_space<vmem>>, vector<4x16xf32>,
    %551 = vector.extract_strided_slice %546 {offsets = [0, 32], sizes = [4, 16], strides = [1, 1]} : vector<4x256xf32> to vector<4x16xf32>
    %c0_264 = arith.constant 0 : index
    %c55_265 = arith.constant 55 : index
    %552 = vector.load %arg5[%c0_264, %c55_265] : memref<12x342xf32, #tpu.memory_space<vmem>>, vector<4x16xf32>
    tpu.vector_store %arg5[%c0_264, %c55_265], %551 {strides = array<i32>} : memref<12x342xf32, #tpu.memory_space<vmem>>, vector<4x16xf32>,
    %553 = vector.extract_strided_slice %546 {offsets = [0, 48], sizes = [4, 16], strides = [1, 1]} : vector<4x256xf32> to vector<4x16xf32>
    %c0_266 = arith.constant 0 : index
    %c73_267 = arith.constant 73 : index
    %554 = vector.load %arg5[%c0_266, %c73_267] : memref<12x342xf32, #tpu.memory_space<vmem>>, vector<4x16xf32>
    tpu.vector_store %arg5[%c0_266, %c73_267], %553 {strides = array<i32>} : memref<12x342xf32, #tpu.memory_space<vmem>>, vector<4x16xf32>,
    %555 = vector.extract_strided_slice %546 {offsets = [0, 64], sizes = [4, 16], strides = [1, 1]} : vector<4x256xf32> to vector<4x16xf32>
    %c0_268 = arith.constant 0 : index
    %c91_269 = arith.constant 91 : index
    %556 = vector.load %arg5[%c0_268, %c91_269] : memref<12x342xf32, #tpu.memory_space<vmem>>, vector<4x16xf32>
    tpu.vector_store %arg5[%c0_268, %c91_269], %555 {strides = array<i32>} : memref<12x342xf32, #tpu.memory_space<vmem>>, vector<4x16xf32>,
    %557 = vector.extract_strided_slice %546 {offsets = [0, 80], sizes = [4, 16], strides = [1, 1]} : vector<4x256xf32> to vector<4x16xf32>
    %c0_270 = arith.constant 0 : index
    %c109_271 = arith.constant 109 : index
    %558 = vector.load %arg5[%c0_270, %c109_271] : memref<12x342xf32, #tpu.memory_space<vmem>>, vector<4x16xf32>
    tpu.vector_store %arg5[%c0_270, %c109_271], %557 {strides = array<i32>} : memref<12x342xf32, #tpu.memory_space<vmem>>, vector<4x16xf32>,
    %559 = vector.extract_strided_slice %546 {offsets = [0, 96], sizes = [4, 16], strides = [1, 1]} : vector<4x256xf32> to vector<4x16xf32>
    %c0_272 = arith.constant 0 : index
    %c127_273 = arith.constant 127 : index
    %560 = vector.load %arg5[%c0_272, %c127_273] : memref<12x342xf32, #tpu.memory_space<vmem>>, vector<4x16xf32>
    tpu.vector_store %arg5[%c0_272, %c127_273], %559 {strides = array<i32>} : memref<12x342xf32, #tpu.memory_space<vmem>>, vector<4x16xf32>,
    %561 = vector.extract_strided_slice %546 {offsets = [0, 112], sizes = [4, 16], strides = [1, 1]} : vector<4x256xf32> to vector<4x16xf32>
    %c0_274 = arith.constant 0 : index
    %c145_275 = arith.constant 145 : index
    %562 = vector.load %arg5[%c0_274, %c145_275] : memref<12x342xf32, #tpu.memory_space<vmem>>, vector<4x16xf32>
    tpu.vector_store %arg5[%c0_274, %c145_275], %561 {strides = array<i32>} : memref<12x342xf32, #tpu.memory_space<vmem>>, vector<4x16xf32>,
    %563 = vector.extract_strided_slice %546 {offsets = [0, 128], sizes = [4, 16], strides = [1, 1]} : vector<4x256xf32> to vector<4x16xf32>
    %c0_276 = arith.constant 0 : index
    %c163_277 = arith.constant 163 : index
    %564 = vector.load %arg5[%c0_276, %c163_277] : memref<12x342xf32, #tpu.memory_space<vmem>>, vector<4x16xf32>
    tpu.vector_store %arg5[%c0_276, %c163_277], %563 {strides = array<i32>} : memref<12x342xf32, #tpu.memory_space<vmem>>, vector<4x16xf32>,
    %565 = vector.extract_strided_slice %546 {offsets = [0, 144], sizes = [4, 16], strides = [1, 1]} : vector<4x256xf32> to vector<4x16xf32>
    %c0_278 = arith.constant 0 : index
    %c181_279 = arith.constant 181 : index
    %566 = vector.load %arg5[%c0_278, %c181_279] : memref<12x342xf32, #tpu.memory_space<vmem>>, vector<4x16xf32>
    tpu.vector_store %arg5[%c0_278, %c181_279], %565 {strides = array<i32>} : memref<12x342xf32, #tpu.memory_space<vmem>>, vector<4x16xf32>,
    %567 = vector.extract_strided_slice %546 {offsets = [0, 160], sizes = [4, 16], strides = [1, 1]} : vector<4x256xf32> to vector<4x16xf32>
    %c0_280 = arith.constant 0 : index
    %c199_281 = arith.constant 199 : index
    %568 = vector.load %arg5[%c0_280, %c199_281] : memref<12x342xf32, #tpu.memory_space<vmem>>, vector<4x16xf32>
    tpu.vector_store %arg5[%c0_280, %c199_281], %567 {strides = array<i32>} : memref<12x342xf32, #tpu.memory_space<vmem>>, vector<4x16xf32>,
    %569 = vector.extract_strided_slice %546 {offsets = [0, 176], sizes = [4, 16], strides = [1, 1]} : vector<4x256xf32> to vector<4x16xf32>
    %c0_282 = arith.constant 0 : index
    %c217_283 = arith.constant 217 : index
    %570 = vector.load %arg5[%c0_282, %c217_283] : memref<12x342xf32, #tpu.memory_space<vmem>>, vector<4x16xf32>
    tpu.vector_store %arg5[%c0_282, %c217_283], %569 {strides = array<i32>} : memref<12x342xf32, #tpu.memory_space<vmem>>, vector<4x16xf32>,
    %571 = vector.extract_strided_slice %546 {offsets = [0, 192], sizes = [4, 16], strides = [1, 1]} : vector<4x256xf32> to vector<4x16xf32>
    %c0_284 = arith.constant 0 : index
    %c235_285 = arith.constant 235 : index
    %572 = vector.load %arg5[%c0_284, %c235_285] : memref<12x342xf32, #tpu.memory_space<vmem>>, vector<4x16xf32>
    tpu.vector_store %arg5[%c0_284, %c235_285], %571 {strides = array<i32>} : memref<12x342xf32, #tpu.memory_space<vmem>>, vector<4x16xf32>,
    %573 = vector.extract_strided_slice %546 {offsets = [0, 208], sizes = [4, 16], strides = [1, 1]} : vector<4x256xf32> to vector<4x16xf32>
    %c0_286 = arith.constant 0 : index
    %c253_287 = arith.constant 253 : index
    %574 = vector.load %arg5[%c0_286, %c253_287] : memref<12x342xf32, #tpu.memory_space<vmem>>, vector<4x16xf32>
    tpu.vector_store %arg5[%c0_286, %c253_287], %573 {strides = array<i32>} : memref<12x342xf32, #tpu.memory_space<vmem>>, vector<4x16xf32>,
    %575 = vector.extract_strided_slice %546 {offsets = [0, 224], sizes = [4, 16], strides = [1, 1]} : vector<4x256xf32> to vector<4x16xf32>
    %c0_288 = arith.constant 0 : index
    %c271_289 = arith.constant 271 : index
    %576 = vector.load %arg5[%c0_288, %c271_289] : memref<12x342xf32, #tpu.memory_space<vmem>>, vector<4x16xf32>
    tpu.vector_store %arg5[%c0_288, %c271_289], %575 {strides = array<i32>} : memref<12x342xf32, #tpu.memory_space<vmem>>, vector<4x16xf32>,
    %577 = vector.extract_strided_slice %546 {offsets = [0, 240], sizes = [4, 16], strides = [1, 1]} : vector<4x256xf32> to vector<4x16xf32>
    %c0_290 = arith.constant 0 : index
    %c289_291 = arith.constant 289 : index
    %578 = vector.load %arg5[%c0_290, %c289_291] : memref<12x342xf32, #tpu.memory_space<vmem>>, vector<4x16xf32>
    tpu.vector_store %arg5[%c0_290, %c289_291], %577 {strides = array<i32>} : memref<12x342xf32, #tpu.memory_space<vmem>>, vector<4x16xf32>,
    %c0_292 = arith.constant 0 : index
    %c0_293 = arith.constant 0 : index
    %579 = vector.load %arg5[%c0_292, %c0_293] : memref<12x342xf32, #tpu.memory_space<vmem>>, vector<4x288xf32>
    %c0_294 = arith.constant 0 : index
    %c0_295 = arith.constant 0 : index
    %c0_296 = arith.constant 0 : index
    %580 = vector.load %arg6[%c0_294, %c0_295, %c0_296] : memref<36x8x288xf32, #tpu.memory_space<vmem>>, vector<1x8x288xf32>
    %581 = vector.shape_cast %580 : vector<1x8x288xf32> to vector<8x288xf32>
    %582 = vector.extract_strided_slice %579 {offsets = [0, 0], sizes = [1, 288], strides = [1, 1]} : vector<4x288xf32> to vector<1x288xf32>
    %583 = vector.broadcast %582 : vector<1x288xf32> to vector<8x288xf32>
    %584 = arith.mulf %581, %583 : vector<8x288xf32>
    %585 = arith.addf %221, %584 : vector<8x288xf32>
    %c1_297 = arith.constant 1 : index
    %c0_298 = arith.constant 0 : index
    %c0_299 = arith.constant 0 : index
    %586 = vector.load %arg6[%c1_297, %c0_298, %c0_299] : memref<36x8x288xf32, #tpu.memory_space<vmem>>, vector<1x8x288xf32>
    %587 = vector.shape_cast %586 : vector<1x8x288xf32> to vector<8x288xf32>
    %588 = vector.extract_strided_slice %579 {offsets = [1, 0], sizes = [1, 288], strides = [1, 1]} : vector<4x288xf32> to vector<1x288xf32>
    %589 = vector.broadcast %588 : vector<1x288xf32> to vector<8x288xf32>
    %590 = arith.mulf %587, %589 : vector<8x288xf32>
    %591 = arith.addf %585, %590 : vector<8x288xf32>
    %c2_300 = arith.constant 2 : index
    %c0_301 = arith.constant 0 : index
    %c0_302 = arith.constant 0 : index
    %592 = vector.load %arg6[%c2_300, %c0_301, %c0_302] : memref<36x8x288xf32, #tpu.memory_space<vmem>>, vector<1x8x288xf32>
    %593 = vector.shape_cast %592 : vector<1x8x288xf32> to vector<8x288xf32>
    %594 = vector.extract_strided_slice %579 {offsets = [2, 0], sizes = [1, 288], strides = [1, 1]} : vector<4x288xf32> to vector<1x288xf32>
    %595 = vector.broadcast %594 : vector<1x288xf32> to vector<8x288xf32>
    %596 = arith.mulf %593, %595 : vector<8x288xf32>
    %597 = arith.addf %591, %596 : vector<8x288xf32>
    %c3_303 = arith.constant 3 : index
    %c0_304 = arith.constant 0 : index
    %c0_305 = arith.constant 0 : index
    %598 = vector.load %arg6[%c3_303, %c0_304, %c0_305] : memref<36x8x288xf32, #tpu.memory_space<vmem>>, vector<1x8x288xf32>
    %599 = vector.shape_cast %598 : vector<1x8x288xf32> to vector<8x288xf32>
    %600 = vector.extract_strided_slice %579 {offsets = [3, 0], sizes = [1, 288], strides = [1, 1]} : vector<4x288xf32> to vector<1x288xf32>
    %601 = vector.broadcast %600 : vector<1x288xf32> to vector<8x288xf32>
    %602 = arith.mulf %599, %601 : vector<8x288xf32>
    %603 = arith.addf %597, %602 : vector<8x288xf32>
    %c0_306 = arith.constant 0 : index
    %c1_307 = arith.constant 1 : index
    %604 = vector.load %arg5[%c0_306, %c1_307] : memref<12x342xf32, #tpu.memory_space<vmem>>, vector<4x288xf32>
    %c4_308 = arith.constant 4 : index
    %c0_309 = arith.constant 0 : index
    %c0_310 = arith.constant 0 : index
    %605 = vector.load %arg6[%c4_308, %c0_309, %c0_310] : memref<36x8x288xf32, #tpu.memory_space<vmem>>, vector<1x8x288xf32>
    %606 = vector.shape_cast %605 : vector<1x8x288xf32> to vector<8x288xf32>
    %607 = vector.extract_strided_slice %604 {offsets = [0, 0], sizes = [1, 288], strides = [1, 1]} : vector<4x288xf32> to vector<1x288xf32>
    %608 = vector.broadcast %607 : vector<1x288xf32> to vector<8x288xf32>
    %609 = arith.mulf %606, %608 : vector<8x288xf32>
    %610 = arith.addf %603, %609 : vector<8x288xf32>
    %c5_311 = arith.constant 5 : index
    %c0_312 = arith.constant 0 : index
    %c0_313 = arith.constant 0 : index
    %611 = vector.load %arg6[%c5_311, %c0_312, %c0_313] : memref<36x8x288xf32, #tpu.memory_space<vmem>>, vector<1x8x288xf32>
    %612 = vector.shape_cast %611 : vector<1x8x288xf32> to vector<8x288xf32>
    %613 = vector.extract_strided_slice %604 {offsets = [1, 0], sizes = [1, 288], strides = [1, 1]} : vector<4x288xf32> to vector<1x288xf32>
    %614 = vector.broadcast %613 : vector<1x288xf32> to vector<8x288xf32>
    %615 = arith.mulf %612, %614 : vector<8x288xf32>
    %616 = arith.addf %610, %615 : vector<8x288xf32>
    %c6_314 = arith.constant 6 : index
    %c0_315 = arith.constant 0 : index
    %c0_316 = arith.constant 0 : index
    %617 = vector.load %arg6[%c6_314, %c0_315, %c0_316] : memref<36x8x288xf32, #tpu.memory_space<vmem>>, vector<1x8x288xf32>
    %618 = vector.shape_cast %617 : vector<1x8x288xf32> to vector<8x288xf32>
    %619 = vector.extract_strided_slice %604 {offsets = [2, 0], sizes = [1, 288], strides = [1, 1]} : vector<4x288xf32> to vector<1x288xf32>
    %620 = vector.broadcast %619 : vector<1x288xf32> to vector<8x288xf32>
    %621 = arith.mulf %618, %620 : vector<8x288xf32>
    %622 = arith.addf %616, %621 : vector<8x288xf32>
    %c7_317 = arith.constant 7 : index
    %c0_318 = arith.constant 0 : index
    %c0_319 = arith.constant 0 : index
    %623 = vector.load %arg6[%c7_317, %c0_318, %c0_319] : memref<36x8x288xf32, #tpu.memory_space<vmem>>, vector<1x8x288xf32>
    %624 = vector.shape_cast %623 : vector<1x8x288xf32> to vector<8x288xf32>
    %625 = vector.extract_strided_slice %604 {offsets = [3, 0], sizes = [1, 288], strides = [1, 1]} : vector<4x288xf32> to vector<1x288xf32>
    %626 = vector.broadcast %625 : vector<1x288xf32> to vector<8x288xf32>
    %627 = arith.mulf %624, %626 : vector<8x288xf32>
    %628 = arith.addf %622, %627 : vector<8x288xf32>
    %c0_320 = arith.constant 0 : index
    %c2_321 = arith.constant 2 : index
    %629 = vector.load %arg5[%c0_320, %c2_321] : memref<12x342xf32, #tpu.memory_space<vmem>>, vector<4x288xf32>
    %c8_322 = arith.constant 8 : index
    %c0_323 = arith.constant 0 : index
    %c0_324 = arith.constant 0 : index
    %630 = vector.load %arg6[%c8_322, %c0_323, %c0_324] : memref<36x8x288xf32, #tpu.memory_space<vmem>>, vector<1x8x288xf32>
    %631 = vector.shape_cast %630 : vector<1x8x288xf32> to vector<8x288xf32>
    %632 = vector.extract_strided_slice %629 {offsets = [0, 0], sizes = [1, 288], strides = [1, 1]} : vector<4x288xf32> to vector<1x288xf32>
    %633 = vector.broadcast %632 : vector<1x288xf32> to vector<8x288xf32>
    %634 = arith.mulf %631, %633 : vector<8x288xf32>
    %635 = arith.addf %628, %634 : vector<8x288xf32>
    %c9_325 = arith.constant 9 : index
    %c0_326 = arith.constant 0 : index
    %c0_327 = arith.constant 0 : index
    %636 = vector.load %arg6[%c9_325, %c0_326, %c0_327] : memref<36x8x288xf32, #tpu.memory_space<vmem>>, vector<1x8x288xf32>
    %637 = vector.shape_cast %636 : vector<1x8x288xf32> to vector<8x288xf32>
    %638 = vector.extract_strided_slice %629 {offsets = [1, 0], sizes = [1, 288], strides = [1, 1]} : vector<4x288xf32> to vector<1x288xf32>
    %639 = vector.broadcast %638 : vector<1x288xf32> to vector<8x288xf32>
    %640 = arith.mulf %637, %639 : vector<8x288xf32>
    %641 = arith.addf %635, %640 : vector<8x288xf32>
    %c10_328 = arith.constant 10 : index
    %c0_329 = arith.constant 0 : index
    %c0_330 = arith.constant 0 : index
    %642 = vector.load %arg6[%c10_328, %c0_329, %c0_330] : memref<36x8x288xf32, #tpu.memory_space<vmem>>, vector<1x8x288xf32>
    %643 = vector.shape_cast %642 : vector<1x8x288xf32> to vector<8x288xf32>
    %644 = vector.extract_strided_slice %629 {offsets = [2, 0], sizes = [1, 288], strides = [1, 1]} : vector<4x288xf32> to vector<1x288xf32>
    %645 = vector.broadcast %644 : vector<1x288xf32> to vector<8x288xf32>
    %646 = arith.mulf %643, %645 : vector<8x288xf32>
    %647 = arith.addf %641, %646 : vector<8x288xf32>
    %c11_331 = arith.constant 11 : index
    %c0_332 = arith.constant 0 : index
    %c0_333 = arith.constant 0 : index
    %648 = vector.load %arg6[%c11_331, %c0_332, %c0_333] : memref<36x8x288xf32, #tpu.memory_space<vmem>>, vector<1x8x288xf32>
    %649 = vector.shape_cast %648 : vector<1x8x288xf32> to vector<8x288xf32>
    %650 = vector.extract_strided_slice %629 {offsets = [3, 0], sizes = [1, 288], strides = [1, 1]} : vector<4x288xf32> to vector<1x288xf32>
    %651 = vector.broadcast %650 : vector<1x288xf32> to vector<8x288xf32>
    %652 = arith.mulf %649, %651 : vector<8x288xf32>
    %653 = arith.addf %647, %652 : vector<8x288xf32>
    %c0_334 = arith.constant 0 : index
    %c18_335 = arith.constant 18 : index
    %654 = vector.load %arg5[%c0_334, %c18_335] : memref<12x342xf32, #tpu.memory_space<vmem>>, vector<4x288xf32>
    %c12_336 = arith.constant 12 : index
    %c0_337 = arith.constant 0 : index
    %c0_338 = arith.constant 0 : index
    %655 = vector.load %arg6[%c12_336, %c0_337, %c0_338] : memref<36x8x288xf32, #tpu.memory_space<vmem>>, vector<1x8x288xf32>
    %656 = vector.shape_cast %655 : vector<1x8x288xf32> to vector<8x288xf32>
    %657 = vector.extract_strided_slice %654 {offsets = [0, 0], sizes = [1, 288], strides = [1, 1]} : vector<4x288xf32> to vector<1x288xf32>
    %658 = vector.broadcast %657 : vector<1x288xf32> to vector<8x288xf32>
    %659 = arith.mulf %656, %658 : vector<8x288xf32>
    %660 = arith.addf %653, %659 : vector<8x288xf32>
    %c13_339 = arith.constant 13 : index
    %c0_340 = arith.constant 0 : index
    %c0_341 = arith.constant 0 : index
    %661 = vector.load %arg6[%c13_339, %c0_340, %c0_341] : memref<36x8x288xf32, #tpu.memory_space<vmem>>, vector<1x8x288xf32>
    %662 = vector.shape_cast %661 : vector<1x8x288xf32> to vector<8x288xf32>
    %663 = vector.extract_strided_slice %654 {offsets = [1, 0], sizes = [1, 288], strides = [1, 1]} : vector<4x288xf32> to vector<1x288xf32>
    %664 = vector.broadcast %663 : vector<1x288xf32> to vector<8x288xf32>
    %665 = arith.mulf %662, %664 : vector<8x288xf32>
    %666 = arith.addf %660, %665 : vector<8x288xf32>
    %c14_342 = arith.constant 14 : index
    %c0_343 = arith.constant 0 : index
    %c0_344 = arith.constant 0 : index
    %667 = vector.load %arg6[%c14_342, %c0_343, %c0_344] : memref<36x8x288xf32, #tpu.memory_space<vmem>>, vector<1x8x288xf32>
    %668 = vector.shape_cast %667 : vector<1x8x288xf32> to vector<8x288xf32>
    %669 = vector.extract_strided_slice %654 {offsets = [2, 0], sizes = [1, 288], strides = [1, 1]} : vector<4x288xf32> to vector<1x288xf32>
    %670 = vector.broadcast %669 : vector<1x288xf32> to vector<8x288xf32>
    %671 = arith.mulf %668, %670 : vector<8x288xf32>
    %672 = arith.addf %666, %671 : vector<8x288xf32>
    %c15_345 = arith.constant 15 : index
    %c0_346 = arith.constant 0 : index
    %c0_347 = arith.constant 0 : index
    %673 = vector.load %arg6[%c15_345, %c0_346, %c0_347] : memref<36x8x288xf32, #tpu.memory_space<vmem>>, vector<1x8x288xf32>
    %674 = vector.shape_cast %673 : vector<1x8x288xf32> to vector<8x288xf32>
    %675 = vector.extract_strided_slice %654 {offsets = [3, 0], sizes = [1, 288], strides = [1, 1]} : vector<4x288xf32> to vector<1x288xf32>
    %676 = vector.broadcast %675 : vector<1x288xf32> to vector<8x288xf32>
    %677 = arith.mulf %674, %676 : vector<8x288xf32>
    %678 = arith.addf %672, %677 : vector<8x288xf32>
    %c0_348 = arith.constant 0 : index
    %c19_349 = arith.constant 19 : index
    %679 = vector.load %arg5[%c0_348, %c19_349] : memref<12x342xf32, #tpu.memory_space<vmem>>, vector<4x288xf32>
    %c16_350 = arith.constant 16 : index
    %c0_351 = arith.constant 0 : index
    %c0_352 = arith.constant 0 : index
    %680 = vector.load %arg6[%c16_350, %c0_351, %c0_352] : memref<36x8x288xf32, #tpu.memory_space<vmem>>, vector<1x8x288xf32>
    %681 = vector.shape_cast %680 : vector<1x8x288xf32> to vector<8x288xf32>
    %682 = vector.extract_strided_slice %679 {offsets = [0, 0], sizes = [1, 288], strides = [1, 1]} : vector<4x288xf32> to vector<1x288xf32>
    %683 = vector.broadcast %682 : vector<1x288xf32> to vector<8x288xf32>
    %684 = arith.mulf %681, %683 : vector<8x288xf32>
    %685 = arith.addf %678, %684 : vector<8x288xf32>
    %c17_353 = arith.constant 17 : index
    %c0_354 = arith.constant 0 : index
    %c0_355 = arith.constant 0 : index
    %686 = vector.load %arg6[%c17_353, %c0_354, %c0_355] : memref<36x8x288xf32, #tpu.memory_space<vmem>>, vector<1x8x288xf32>
    %687 = vector.shape_cast %686 : vector<1x8x288xf32> to vector<8x288xf32>
    %688 = vector.extract_strided_slice %679 {offsets = [1, 0], sizes = [1, 288], strides = [1, 1]} : vector<4x288xf32> to vector<1x288xf32>
    %689 = vector.broadcast %688 : vector<1x288xf32> to vector<8x288xf32>
    %690 = arith.mulf %687, %689 : vector<8x288xf32>
    %691 = arith.addf %685, %690 : vector<8x288xf32>
    %c18_356 = arith.constant 18 : index
    %c0_357 = arith.constant 0 : index
    %c0_358 = arith.constant 0 : index
    %692 = vector.load %arg6[%c18_356, %c0_357, %c0_358] : memref<36x8x288xf32, #tpu.memory_space<vmem>>, vector<1x8x288xf32>
    %693 = vector.shape_cast %692 : vector<1x8x288xf32> to vector<8x288xf32>
    %694 = vector.extract_strided_slice %679 {offsets = [2, 0], sizes = [1, 288], strides = [1, 1]} : vector<4x288xf32> to vector<1x288xf32>
    %695 = vector.broadcast %694 : vector<1x288xf32> to vector<8x288xf32>
    %696 = arith.mulf %693, %695 : vector<8x288xf32>
    %697 = arith.addf %691, %696 : vector<8x288xf32>
    %c19_359 = arith.constant 19 : index
    %c0_360 = arith.constant 0 : index
    %c0_361 = arith.constant 0 : index
    %698 = vector.load %arg6[%c19_359, %c0_360, %c0_361] : memref<36x8x288xf32, #tpu.memory_space<vmem>>, vector<1x8x288xf32>
    %699 = vector.shape_cast %698 : vector<1x8x288xf32> to vector<8x288xf32>
    %700 = vector.extract_strided_slice %679 {offsets = [3, 0], sizes = [1, 288], strides = [1, 1]} : vector<4x288xf32> to vector<1x288xf32>
    %701 = vector.broadcast %700 : vector<1x288xf32> to vector<8x288xf32>
    %702 = arith.mulf %699, %701 : vector<8x288xf32>
    %703 = arith.addf %697, %702 : vector<8x288xf32>
    %c0_362 = arith.constant 0 : index
    %c20_363 = arith.constant 20 : index
    %704 = vector.load %arg5[%c0_362, %c20_363] : memref<12x342xf32, #tpu.memory_space<vmem>>, vector<4x288xf32>
    %c20_364 = arith.constant 20 : index
    %c0_365 = arith.constant 0 : index
    %c0_366 = arith.constant 0 : index
    %705 = vector.load %arg6[%c20_364, %c0_365, %c0_366] : memref<36x8x288xf32, #tpu.memory_space<vmem>>, vector<1x8x288xf32>
    %706 = vector.shape_cast %705 : vector<1x8x288xf32> to vector<8x288xf32>
    %707 = vector.extract_strided_slice %704 {offsets = [0, 0], sizes = [1, 288], strides = [1, 1]} : vector<4x288xf32> to vector<1x288xf32>
    %708 = vector.broadcast %707 : vector<1x288xf32> to vector<8x288xf32>
    %709 = arith.mulf %706, %708 : vector<8x288xf32>
    %710 = arith.addf %703, %709 : vector<8x288xf32>
    %c21_367 = arith.constant 21 : index
    %c0_368 = arith.constant 0 : index
    %c0_369 = arith.constant 0 : index
    %711 = vector.load %arg6[%c21_367, %c0_368, %c0_369] : memref<36x8x288xf32, #tpu.memory_space<vmem>>, vector<1x8x288xf32>
    %712 = vector.shape_cast %711 : vector<1x8x288xf32> to vector<8x288xf32>
    %713 = vector.extract_strided_slice %704 {offsets = [1, 0], sizes = [1, 288], strides = [1, 1]} : vector<4x288xf32> to vector<1x288xf32>
    %714 = vector.broadcast %713 : vector<1x288xf32> to vector<8x288xf32>
    %715 = arith.mulf %712, %714 : vector<8x288xf32>
    %716 = arith.addf %710, %715 : vector<8x288xf32>
    %c22_370 = arith.constant 22 : index
    %c0_371 = arith.constant 0 : index
    %c0_372 = arith.constant 0 : index
    %717 = vector.load %arg6[%c22_370, %c0_371, %c0_372] : memref<36x8x288xf32, #tpu.memory_space<vmem>>, vector<1x8x288xf32>
    %718 = vector.shape_cast %717 : vector<1x8x288xf32> to vector<8x288xf32>
    %719 = vector.extract_strided_slice %704 {offsets = [2, 0], sizes = [1, 288], strides = [1, 1]} : vector<4x288xf32> to vector<1x288xf32>
    %720 = vector.broadcast %719 : vector<1x288xf32> to vector<8x288xf32>
    %721 = arith.mulf %718, %720 : vector<8x288xf32>
    %722 = arith.addf %716, %721 : vector<8x288xf32>
    %c23_373 = arith.constant 23 : index
    %c0_374 = arith.constant 0 : index
    %c0_375 = arith.constant 0 : index
    %723 = vector.load %arg6[%c23_373, %c0_374, %c0_375] : memref<36x8x288xf32, #tpu.memory_space<vmem>>, vector<1x8x288xf32>
    %724 = vector.shape_cast %723 : vector<1x8x288xf32> to vector<8x288xf32>
    %725 = vector.extract_strided_slice %704 {offsets = [3, 0], sizes = [1, 288], strides = [1, 1]} : vector<4x288xf32> to vector<1x288xf32>
    %726 = vector.broadcast %725 : vector<1x288xf32> to vector<8x288xf32>
    %727 = arith.mulf %724, %726 : vector<8x288xf32>
    %728 = arith.addf %722, %727 : vector<8x288xf32>
    %c0_376 = arith.constant 0 : index
    %c36_377 = arith.constant 36 : index
    %729 = vector.load %arg5[%c0_376, %c36_377] : memref<12x342xf32, #tpu.memory_space<vmem>>, vector<4x288xf32>
    %c24_378 = arith.constant 24 : index
    %c0_379 = arith.constant 0 : index
    %c0_380 = arith.constant 0 : index
    %730 = vector.load %arg6[%c24_378, %c0_379, %c0_380] : memref<36x8x288xf32, #tpu.memory_space<vmem>>, vector<1x8x288xf32>
    %731 = vector.shape_cast %730 : vector<1x8x288xf32> to vector<8x288xf32>
    %732 = vector.extract_strided_slice %729 {offsets = [0, 0], sizes = [1, 288], strides = [1, 1]} : vector<4x288xf32> to vector<1x288xf32>
    %733 = vector.broadcast %732 : vector<1x288xf32> to vector<8x288xf32>
    %734 = arith.mulf %731, %733 : vector<8x288xf32>
    %735 = arith.addf %728, %734 : vector<8x288xf32>
    %c25_381 = arith.constant 25 : index
    %c0_382 = arith.constant 0 : index
    %c0_383 = arith.constant 0 : index
    %736 = vector.load %arg6[%c25_381, %c0_382, %c0_383] : memref<36x8x288xf32, #tpu.memory_space<vmem>>, vector<1x8x288xf32>
    %737 = vector.shape_cast %736 : vector<1x8x288xf32> to vector<8x288xf32>
    %738 = vector.extract_strided_slice %729 {offsets = [1, 0], sizes = [1, 288], strides = [1, 1]} : vector<4x288xf32> to vector<1x288xf32>
    %739 = vector.broadcast %738 : vector<1x288xf32> to vector<8x288xf32>
    %740 = arith.mulf %737, %739 : vector<8x288xf32>
    %741 = arith.addf %735, %740 : vector<8x288xf32>
    %c26_384 = arith.constant 26 : index
    %c0_385 = arith.constant 0 : index
    %c0_386 = arith.constant 0 : index
    %742 = vector.load %arg6[%c26_384, %c0_385, %c0_386] : memref<36x8x288xf32, #tpu.memory_space<vmem>>, vector<1x8x288xf32>
    %743 = vector.shape_cast %742 : vector<1x8x288xf32> to vector<8x288xf32>
    %744 = vector.extract_strided_slice %729 {offsets = [2, 0], sizes = [1, 288], strides = [1, 1]} : vector<4x288xf32> to vector<1x288xf32>
    %745 = vector.broadcast %744 : vector<1x288xf32> to vector<8x288xf32>
    %746 = arith.mulf %743, %745 : vector<8x288xf32>
    %747 = arith.addf %741, %746 : vector<8x288xf32>
    %c27_387 = arith.constant 27 : index
    %c0_388 = arith.constant 0 : index
    %c0_389 = arith.constant 0 : index
    %748 = vector.load %arg6[%c27_387, %c0_388, %c0_389] : memref<36x8x288xf32, #tpu.memory_space<vmem>>, vector<1x8x288xf32>
    %749 = vector.shape_cast %748 : vector<1x8x288xf32> to vector<8x288xf32>
    %750 = vector.extract_strided_slice %729 {offsets = [3, 0], sizes = [1, 288], strides = [1, 1]} : vector<4x288xf32> to vector<1x288xf32>
    %751 = vector.broadcast %750 : vector<1x288xf32> to vector<8x288xf32>
    %752 = arith.mulf %749, %751 : vector<8x288xf32>
    %753 = arith.addf %747, %752 : vector<8x288xf32>
    %c0_390 = arith.constant 0 : index
    %c37_391 = arith.constant 37 : index
    %754 = vector.load %arg5[%c0_390, %c37_391] : memref<12x342xf32, #tpu.memory_space<vmem>>, vector<4x288xf32>
    %c28_392 = arith.constant 28 : index
    %c0_393 = arith.constant 0 : index
    %c0_394 = arith.constant 0 : index
    %755 = vector.load %arg6[%c28_392, %c0_393, %c0_394] : memref<36x8x288xf32, #tpu.memory_space<vmem>>, vector<1x8x288xf32>
    %756 = vector.shape_cast %755 : vector<1x8x288xf32> to vector<8x288xf32>
    %757 = vector.extract_strided_slice %754 {offsets = [0, 0], sizes = [1, 288], strides = [1, 1]} : vector<4x288xf32> to vector<1x288xf32>
    %758 = vector.broadcast %757 : vector<1x288xf32> to vector<8x288xf32>
    %759 = arith.mulf %756, %758 : vector<8x288xf32>
    %760 = arith.addf %753, %759 : vector<8x288xf32>
    %c29_395 = arith.constant 29 : index
    %c0_396 = arith.constant 0 : index
    %c0_397 = arith.constant 0 : index
    %761 = vector.load %arg6[%c29_395, %c0_396, %c0_397] : memref<36x8x288xf32, #tpu.memory_space<vmem>>, vector<1x8x288xf32>
    %762 = vector.shape_cast %761 : vector<1x8x288xf32> to vector<8x288xf32>
    %763 = vector.extract_strided_slice %754 {offsets = [1, 0], sizes = [1, 288], strides = [1, 1]} : vector<4x288xf32> to vector<1x288xf32>
    %764 = vector.broadcast %763 : vector<1x288xf32> to vector<8x288xf32>
    %765 = arith.mulf %762, %764 : vector<8x288xf32>
    %766 = arith.addf %760, %765 : vector<8x288xf32>
    %c30_398 = arith.constant 30 : index
    %c0_399 = arith.constant 0 : index
    %c0_400 = arith.constant 0 : index
    %767 = vector.load %arg6[%c30_398, %c0_399, %c0_400] : memref<36x8x288xf32, #tpu.memory_space<vmem>>, vector<1x8x288xf32>
    %768 = vector.shape_cast %767 : vector<1x8x288xf32> to vector<8x288xf32>
    %769 = vector.extract_strided_slice %754 {offsets = [2, 0], sizes = [1, 288], strides = [1, 1]} : vector<4x288xf32> to vector<1x288xf32>
    %770 = vector.broadcast %769 : vector<1x288xf32> to vector<8x288xf32>
    %771 = arith.mulf %768, %770 : vector<8x288xf32>
    %772 = arith.addf %766, %771 : vector<8x288xf32>
    %c31_401 = arith.constant 31 : index
    %c0_402 = arith.constant 0 : index
    %c0_403 = arith.constant 0 : index
    %773 = vector.load %arg6[%c31_401, %c0_402, %c0_403] : memref<36x8x288xf32, #tpu.memory_space<vmem>>, vector<1x8x288xf32>
    %774 = vector.shape_cast %773 : vector<1x8x288xf32> to vector<8x288xf32>
    %775 = vector.extract_strided_slice %754 {offsets = [3, 0], sizes = [1, 288], strides = [1, 1]} : vector<4x288xf32> to vector<1x288xf32>
    %776 = vector.broadcast %775 : vector<1x288xf32> to vector<8x288xf32>
    %777 = arith.mulf %774, %776 : vector<8x288xf32>
    %778 = arith.addf %772, %777 : vector<8x288xf32>
    %c0_404 = arith.constant 0 : index
    %c38_405 = arith.constant 38 : index
    %779 = vector.load %arg5[%c0_404, %c38_405] : memref<12x342xf32, #tpu.memory_space<vmem>>, vector<4x288xf32>
    %c32_406 = arith.constant 32 : index
    %c0_407 = arith.constant 0 : index
    %c0_408 = arith.constant 0 : index
    %780 = vector.load %arg6[%c32_406, %c0_407, %c0_408] : memref<36x8x288xf32, #tpu.memory_space<vmem>>, vector<1x8x288xf32>
    %781 = vector.shape_cast %780 : vector<1x8x288xf32> to vector<8x288xf32>
    %782 = vector.extract_strided_slice %779 {offsets = [0, 0], sizes = [1, 288], strides = [1, 1]} : vector<4x288xf32> to vector<1x288xf32>
    %783 = vector.broadcast %782 : vector<1x288xf32> to vector<8x288xf32>
    %784 = arith.mulf %781, %783 : vector<8x288xf32>
    %785 = arith.addf %778, %784 : vector<8x288xf32>
    %c33_409 = arith.constant 33 : index
    %c0_410 = arith.constant 0 : index
    %c0_411 = arith.constant 0 : index
    %786 = vector.load %arg6[%c33_409, %c0_410, %c0_411] : memref<36x8x288xf32, #tpu.memory_space<vmem>>, vector<1x8x288xf32>
    %787 = vector.shape_cast %786 : vector<1x8x288xf32> to vector<8x288xf32>
    %788 = vector.extract_strided_slice %779 {offsets = [1, 0], sizes = [1, 288], strides = [1, 1]} : vector<4x288xf32> to vector<1x288xf32>
    %789 = vector.broadcast %788 : vector<1x288xf32> to vector<8x288xf32>
    %790 = arith.mulf %787, %789 : vector<8x288xf32>
    %791 = arith.addf %785, %790 : vector<8x288xf32>
    %c34_412 = arith.constant 34 : index
    %c0_413 = arith.constant 0 : index
    %c0_414 = arith.constant 0 : index
    %792 = vector.load %arg6[%c34_412, %c0_413, %c0_414] : memref<36x8x288xf32, #tpu.memory_space<vmem>>, vector<1x8x288xf32>
    %793 = vector.shape_cast %792 : vector<1x8x288xf32> to vector<8x288xf32>
    %794 = vector.extract_strided_slice %779 {offsets = [2, 0], sizes = [1, 288], strides = [1, 1]} : vector<4x288xf32> to vector<1x288xf32>
    %795 = vector.broadcast %794 : vector<1x288xf32> to vector<8x288xf32>
    %796 = arith.mulf %793, %795 : vector<8x288xf32>
    %797 = arith.addf %791, %796 : vector<8x288xf32>
    %c35_415 = arith.constant 35 : index
    %c0_416 = arith.constant 0 : index
    %c0_417 = arith.constant 0 : index
    %798 = vector.load %arg6[%c35_415, %c0_416, %c0_417] : memref<36x8x288xf32, #tpu.memory_space<vmem>>, vector<1x8x288xf32>
    %799 = vector.shape_cast %798 : vector<1x8x288xf32> to vector<8x288xf32>
    %800 = vector.extract_strided_slice %779 {offsets = [3, 0], sizes = [1, 288], strides = [1, 1]} : vector<4x288xf32> to vector<1x288xf32>
    %801 = vector.broadcast %800 : vector<1x288xf32> to vector<8x288xf32>
    %802 = arith.mulf %799, %801 : vector<8x288xf32>
    %803 = arith.addf %797, %802 : vector<8x288xf32>
    %804 = vector.extract_strided_slice %803 {offsets = [0, 0], sizes = [8, 16], strides = [1, 1]} : vector<8x288xf32> to vector<8x16xf32>
    %c1_418 = arith.constant 1 : index
    %c0_419 = arith.constant 0 : index
    %c0_420 = arith.constant 0 : index
    %805 = vector.load %arg4[%c1_418, %c0_419, %c0_420] : memref<2x8x256xf32, #tpu.memory_space<vmem>>, vector<1x8x16xf32>
    %806 = vector.shape_cast %805 : vector<1x8x16xf32> to vector<8x16xf32>
    %807 = vector.shape_cast %804 : vector<8x16xf32> to vector<1x8x16xf32>
    tpu.vector_store %arg4[%c1_418, %c0_419, %c0_420], %807 {strides = array<i32>} : memref<2x8x256xf32, #tpu.memory_space<vmem>>, vector<1x8x16xf32>,
    %808 = vector.extract_strided_slice %803 {offsets = [0, 18], sizes = [8, 16], strides = [1, 1]} : vector<8x288xf32> to vector<8x16xf32>
    %c1_421 = arith.constant 1 : index
    %c0_422 = arith.constant 0 : index
    %c16_423 = arith.constant 16 : index
    %809 = vector.load %arg4[%c1_421, %c0_422, %c16_423] : memref<2x8x256xf32, #tpu.memory_space<vmem>>, vector<1x8x16xf32>
    %810 = vector.shape_cast %809 : vector<1x8x16xf32> to vector<8x16xf32>
    %811 = vector.shape_cast %808 : vector<8x16xf32> to vector<1x8x16xf32>
    tpu.vector_store %arg4[%c1_421, %c0_422, %c16_423], %811 {strides = array<i32>} : memref<2x8x256xf32, #tpu.memory_space<vmem>>, vector<1x8x16xf32>,
    %812 = vector.extract_strided_slice %803 {offsets = [0, 36], sizes = [8, 16], strides = [1, 1]} : vector<8x288xf32> to vector<8x16xf32>
    %c1_424 = arith.constant 1 : index
    %c0_425 = arith.constant 0 : index
    %c32_426 = arith.constant 32 : index
    %813 = vector.load %arg4[%c1_424, %c0_425, %c32_426] : memref<2x8x256xf32, #tpu.memory_space<vmem>>, vector<1x8x16xf32>
    %814 = vector.shape_cast %813 : vector<1x8x16xf32> to vector<8x16xf32>
    %815 = vector.shape_cast %812 : vector<8x16xf32> to vector<1x8x16xf32>
    tpu.vector_store %arg4[%c1_424, %c0_425, %c32_426], %815 {strides = array<i32>} : memref<2x8x256xf32, #tpu.memory_space<vmem>>, vector<1x8x16xf32>,
    %816 = vector.extract_strided_slice %803 {offsets = [0, 54], sizes = [8, 16], strides = [1, 1]} : vector<8x288xf32> to vector<8x16xf32>
    %c1_427 = arith.constant 1 : index
    %c0_428 = arith.constant 0 : index
    %c48_429 = arith.constant 48 : index
    %817 = vector.load %arg4[%c1_427, %c0_428, %c48_429] : memref<2x8x256xf32, #tpu.memory_space<vmem>>, vector<1x8x16xf32>
    %818 = vector.shape_cast %817 : vector<1x8x16xf32> to vector<8x16xf32>
    %819 = vector.shape_cast %816 : vector<8x16xf32> to vector<1x8x16xf32>
    tpu.vector_store %arg4[%c1_427, %c0_428, %c48_429], %819 {strides = array<i32>} : memref<2x8x256xf32, #tpu.memory_space<vmem>>, vector<1x8x16xf32>,
    %820 = vector.extract_strided_slice %803 {offsets = [0, 72], sizes = [8, 16], strides = [1, 1]} : vector<8x288xf32> to vector<8x16xf32>
    %c1_430 = arith.constant 1 : index
    %c0_431 = arith.constant 0 : index
    %c64_432 = arith.constant 64 : index
    %821 = vector.load %arg4[%c1_430, %c0_431, %c64_432] : memref<2x8x256xf32, #tpu.memory_space<vmem>>, vector<1x8x16xf32>
    %822 = vector.shape_cast %821 : vector<1x8x16xf32> to vector<8x16xf32>
    %823 = vector.shape_cast %820 : vector<8x16xf32> to vector<1x8x16xf32>
    tpu.vector_store %arg4[%c1_430, %c0_431, %c64_432], %823 {strides = array<i32>} : memref<2x8x256xf32, #tpu.memory_space<vmem>>, vector<1x8x16xf32>,
    %824 = vector.extract_strided_slice %803 {offsets = [0, 90], sizes = [8, 16], strides = [1, 1]} : vector<8x288xf32> to vector<8x16xf32>
    %c1_433 = arith.constant 1 : index
    %c0_434 = arith.constant 0 : index
    %c80_435 = arith.constant 80 : index
    %825 = vector.load %arg4[%c1_433, %c0_434, %c80_435] : memref<2x8x256xf32, #tpu.memory_space<vmem>>, vector<1x8x16xf32>
    %826 = vector.shape_cast %825 : vector<1x8x16xf32> to vector<8x16xf32>
    %827 = vector.shape_cast %824 : vector<8x16xf32> to vector<1x8x16xf32>
    tpu.vector_store %arg4[%c1_433, %c0_434, %c80_435], %827 {strides = array<i32>} : memref<2x8x256xf32, #tpu.memory_space<vmem>>, vector<1x8x16xf32>,
    %828 = vector.extract_strided_slice %803 {offsets = [0, 108], sizes = [8, 16], strides = [1, 1]} : vector<8x288xf32> to vector<8x16xf32>
    %c1_436 = arith.constant 1 : index
    %c0_437 = arith.constant 0 : index
    %c96_438 = arith.constant 96 : index
    %829 = vector.load %arg4[%c1_436, %c0_437, %c96_438] : memref<2x8x256xf32, #tpu.memory_space<vmem>>, vector<1x8x16xf32>
    %830 = vector.shape_cast %829 : vector<1x8x16xf32> to vector<8x16xf32>
    %831 = vector.shape_cast %828 : vector<8x16xf32> to vector<1x8x16xf32>
    tpu.vector_store %arg4[%c1_436, %c0_437, %c96_438], %831 {strides = array<i32>} : memref<2x8x256xf32, #tpu.memory_space<vmem>>, vector<1x8x16xf32>,
    %832 = vector.extract_strided_slice %803 {offsets = [0, 126], sizes = [8, 16], strides = [1, 1]} : vector<8x288xf32> to vector<8x16xf32>
    %c1_439 = arith.constant 1 : index
    %c0_440 = arith.constant 0 : index
    %c112_441 = arith.constant 112 : index
    %833 = vector.load %arg4[%c1_439, %c0_440, %c112_441] : memref<2x8x256xf32, #tpu.memory_space<vmem>>, vector<1x8x16xf32>
    %834 = vector.shape_cast %833 : vector<1x8x16xf32> to vector<8x16xf32>
    %835 = vector.shape_cast %832 : vector<8x16xf32> to vector<1x8x16xf32>
    tpu.vector_store %arg4[%c1_439, %c0_440, %c112_441], %835 {strides = array<i32>} : memref<2x8x256xf32, #tpu.memory_space<vmem>>, vector<1x8x16xf32>,
    %836 = vector.extract_strided_slice %803 {offsets = [0, 144], sizes = [8, 16], strides = [1, 1]} : vector<8x288xf32> to vector<8x16xf32>
    %c1_442 = arith.constant 1 : index
    %c0_443 = arith.constant 0 : index
    %c128_444 = arith.constant 128 : index
    %837 = vector.load %arg4[%c1_442, %c0_443, %c128_444] : memref<2x8x256xf32, #tpu.memory_space<vmem>>, vector<1x8x16xf32>
    %838 = vector.shape_cast %837 : vector<1x8x16xf32> to vector<8x16xf32>
    %839 = vector.shape_cast %836 : vector<8x16xf32> to vector<1x8x16xf32>
    tpu.vector_store %arg4[%c1_442, %c0_443, %c128_444], %839 {strides = array<i32>} : memref<2x8x256xf32, #tpu.memory_space<vmem>>, vector<1x8x16xf32>,
    %840 = vector.extract_strided_slice %803 {offsets = [0, 162], sizes = [8, 16], strides = [1, 1]} : vector<8x288xf32> to vector<8x16xf32>
    %c1_445 = arith.constant 1 : index
    %c0_446 = arith.constant 0 : index
    %c144_447 = arith.constant 144 : index
    %841 = vector.load %arg4[%c1_445, %c0_446, %c144_447] : memref<2x8x256xf32, #tpu.memory_space<vmem>>, vector<1x8x16xf32>
    %842 = vector.shape_cast %841 : vector<1x8x16xf32> to vector<8x16xf32>
    %843 = vector.shape_cast %840 : vector<8x16xf32> to vector<1x8x16xf32>
    tpu.vector_store %arg4[%c1_445, %c0_446, %c144_447], %843 {strides = array<i32>} : memref<2x8x256xf32, #tpu.memory_space<vmem>>, vector<1x8x16xf32>,
    %844 = vector.extract_strided_slice %803 {offsets = [0, 180], sizes = [8, 16], strides = [1, 1]} : vector<8x288xf32> to vector<8x16xf32>
    %c1_448 = arith.constant 1 : index
    %c0_449 = arith.constant 0 : index
    %c160_450 = arith.constant 160 : index
    %845 = vector.load %arg4[%c1_448, %c0_449, %c160_450] : memref<2x8x256xf32, #tpu.memory_space<vmem>>, vector<1x8x16xf32>
    %846 = vector.shape_cast %845 : vector<1x8x16xf32> to vector<8x16xf32>
    %847 = vector.shape_cast %844 : vector<8x16xf32> to vector<1x8x16xf32>
    tpu.vector_store %arg4[%c1_448, %c0_449, %c160_450], %847 {strides = array<i32>} : memref<2x8x256xf32, #tpu.memory_space<vmem>>, vector<1x8x16xf32>,
    %848 = vector.extract_strided_slice %803 {offsets = [0, 198], sizes = [8, 16], strides = [1, 1]} : vector<8x288xf32> to vector<8x16xf32>
    %c1_451 = arith.constant 1 : index
    %c0_452 = arith.constant 0 : index
    %c176_453 = arith.constant 176 : index
    %849 = vector.load %arg4[%c1_451, %c0_452, %c176_453] : memref<2x8x256xf32, #tpu.memory_space<vmem>>, vector<1x8x16xf32>
    %850 = vector.shape_cast %849 : vector<1x8x16xf32> to vector<8x16xf32>
    %851 = vector.shape_cast %848 : vector<8x16xf32> to vector<1x8x16xf32>
    tpu.vector_store %arg4[%c1_451, %c0_452, %c176_453], %851 {strides = array<i32>} : memref<2x8x256xf32, #tpu.memory_space<vmem>>, vector<1x8x16xf32>,
    %852 = vector.extract_strided_slice %803 {offsets = [0, 216], sizes = [8, 16], strides = [1, 1]} : vector<8x288xf32> to vector<8x16xf32>
    %c1_454 = arith.constant 1 : index
    %c0_455 = arith.constant 0 : index
    %c192_456 = arith.constant 192 : index
    %853 = vector.load %arg4[%c1_454, %c0_455, %c192_456] : memref<2x8x256xf32, #tpu.memory_space<vmem>>, vector<1x8x16xf32>
    %854 = vector.shape_cast %853 : vector<1x8x16xf32> to vector<8x16xf32>
    %855 = vector.shape_cast %852 : vector<8x16xf32> to vector<1x8x16xf32>
    tpu.vector_store %arg4[%c1_454, %c0_455, %c192_456], %855 {strides = array<i32>} : memref<2x8x256xf32, #tpu.memory_space<vmem>>, vector<1x8x16xf32>,
    %856 = vector.extract_strided_slice %803 {offsets = [0, 234], sizes = [8, 16], strides = [1, 1]} : vector<8x288xf32> to vector<8x16xf32>
    %c1_457 = arith.constant 1 : index
    %c0_458 = arith.constant 0 : index
    %c208_459 = arith.constant 208 : index
    %857 = vector.load %arg4[%c1_457, %c0_458, %c208_459] : memref<2x8x256xf32, #tpu.memory_space<vmem>>, vector<1x8x16xf32>
    %858 = vector.shape_cast %857 : vector<1x8x16xf32> to vector<8x16xf32>
    %859 = vector.shape_cast %856 : vector<8x16xf32> to vector<1x8x16xf32>
    tpu.vector_store %arg4[%c1_457, %c0_458, %c208_459], %859 {strides = array<i32>} : memref<2x8x256xf32, #tpu.memory_space<vmem>>, vector<1x8x16xf32>,
    %860 = vector.extract_strided_slice %803 {offsets = [0, 252], sizes = [8, 16], strides = [1, 1]} : vector<8x288xf32> to vector<8x16xf32>
    %c1_460 = arith.constant 1 : index
    %c0_461 = arith.constant 0 : index
    %c224_462 = arith.constant 224 : index
    %861 = vector.load %arg4[%c1_460, %c0_461, %c224_462] : memref<2x8x256xf32, #tpu.memory_space<vmem>>, vector<1x8x16xf32>
    %862 = vector.shape_cast %861 : vector<1x8x16xf32> to vector<8x16xf32>
    %863 = vector.shape_cast %860 : vector<8x16xf32> to vector<1x8x16xf32>
    tpu.vector_store %arg4[%c1_460, %c0_461, %c224_462], %863 {strides = array<i32>} : memref<2x8x256xf32, #tpu.memory_space<vmem>>, vector<1x8x16xf32>,
    %864 = vector.extract_strided_slice %803 {offsets = [0, 270], sizes = [8, 16], strides = [1, 1]} : vector<8x288xf32> to vector<8x16xf32>
    %c1_463 = arith.constant 1 : index
    %c0_464 = arith.constant 0 : index
    %c240_465 = arith.constant 240 : index
    %865 = vector.load %arg4[%c1_463, %c0_464, %c240_465] : memref<2x8x256xf32, #tpu.memory_space<vmem>>, vector<1x8x16xf32>
    %866 = vector.shape_cast %865 : vector<1x8x16xf32> to vector<8x16xf32>
    %867 = vector.shape_cast %864 : vector<8x16xf32> to vector<1x8x16xf32>
    tpu.vector_store %arg4[%c1_463, %c0_464, %c240_465], %867 {strides = array<i32>} : memref<2x8x256xf32, #tpu.memory_space<vmem>>, vector<1x8x16xf32>,
    return
  }
  func.func @transform_0(%arg0: i32) -> (i32, i32) {
    %c0_i32 = arith.constant 0 : i32
    %c0_i32_0 = arith.constant 0 : i32
    %c0_i32_1 = arith.constant 0 : i32
    return %c0_i32, %c0_i32_0 : i32, i32
  }
  func.func @transform_1(%arg0: i32) -> (i32, i32) {
    %c0_i32 = arith.constant 0 : i32
    %c0_i32_0 = arith.constant 0 : i32
    %c0_i32_1 = arith.constant 0 : i32
    return %c0_i32, %c0_i32_0 : i32, i32
  }
  func.func @transform_2(%arg0: i32) -> (i32, i32, i32) {
    %c0_i32 = arith.constant 0 : i32
    %c0_i32_0 = arith.constant 0 : i32
    %c0_i32_1 = arith.constant 0 : i32
    return %arg0, %c0_i32, %c0_i32_0 : i32, i32, i32
  }
  func.func @transform_3(%arg0: i32) -> (i32, i32, i32) {
    %c0_i32 = arith.constant 0 : i32
    %c0_i32_0 = arith.constant 0 : i32
    %c0_i32_1 = arith.constant 0 : i32
    return %arg0, %c0_i32, %c0_i32_0 : i32, i32, i32
  }
}

</mosaic_0001>

<llo_original>
// kernel: _zero_conv2d_pallas.1
$region0: #{_zero_conv2d_pallas.1}
  #allocation0 [shape = 'u32[]', space=smem, size = 0x4, offset = 0x4, fixed_abs, tag = 'smem constant byte address 0x4 - core index']
  #allocation1 [shape = 'u32[144,128]{1,0:T(1,128)}', space=vmem, size = 0x12000, scoped, tag = 'internal scratch']
  #allocation2 [shape = 'f32[12,342]{1,0:T(8,128)}', space=vmem, size = 0x6000, scoped, tag = 'scratch operand']
  #allocation3 [shape = 'f32[36,8,288]{2,1,0:T(8,128)}', space=vmem, size = 0x6c000, scoped, tag = 'scratch operand']
  %s0 = inlined_call_operand.vmem [shape: f32[8,36], index: 0, kind: input, shape index: {}]
  %s1 = inlined_call_operand.vmem [shape: f32[8,1], index: 1, kind: input, shape index: {}]
  %s2 = inlined_call_operand.hbm [shape: f32[2,4,256], index: 2, kind: input, shape index: {}]
  %s3 = inlined_call_operand.vmem [shape: f32[2,8,256], index: 3, kind: output, shape index: {}]
  %s4 = sld [smem:[#allocation0]]
  $region26: #{_zero_conv2d_pallas.1} parent=0
    _
  %s6 = ssub.s32 1, %s4
  %s7 = scalar_select 0, %s6, %s4
  $region1: #{_zero_conv2d_pallas.1} parent=0
    #allocation4 [shape = 'u8[8192]{0}', space=vmem, size = 0x2000, scoped, tag = 'input window, operand 2, single buffered']
    #allocation5 [shape = 's32[1]{0}', space=sflag, size = 0x4, scoped, tag = 'scoped memory for _zero_conv2d_pallas.1']
    %8 = vsyncpa [#allocation5], 0
    // Predicated region
    $region2: #{_zero_conv2d_pallas.1} parent=1 // pred_check
      _
    $region3: #{_zero_conv2d_pallas.1} parent=1 // pred_check_branch
      %10 = sbr.rel (0) target = $region5
    $region4: #{_zero_conv2d_pallas.1} parent=1 // pred_region
      _
    $region5: #{_zero_conv2d_pallas.1} parent=1 // pred_fallthru
      _
    // Predicated region
    $region6: #{_zero_conv2d_pallas.1} parent=1 // pred_check
      _
    $region7: #{_zero_conv2d_pallas.1} parent=1 // pred_check_branch
      %12 = sbr.rel (0) target = $region9
    $region8: #{_zero_conv2d_pallas.1} parent=1 // pred_region
      _
    $region9: #{_zero_conv2d_pallas.1} parent=1 // pred_fallthru
      _
    // Predicated region
    $region10: #{_zero_conv2d_pallas.1} parent=1 // pred_check
      _
    $region11: #{_zero_conv2d_pallas.1} parent=1 // pred_check_branch
      %14 = sbr.rel (0) target = $region13
    $region12: #{_zero_conv2d_pallas.1} parent=1 // pred_region
      %s16 = ssub.s32 256, 256
      %17 = vsyncadd [#allocation5], %s16
      %s18 = sshll.u32 [#allocation4], 4
      %s19 = int_to_ptr.vmem [resolvable:$true] %s18
      %24 = dma.hbm_to_vmem [thread:$0]  %s2, 256, %s19, [#allocation5], 128, 128, 8
    $region13: #{_zero_conv2d_pallas.1} parent=1 // pred_fallthru
      _
    // Predicated region
    $region14: #{_zero_conv2d_pallas.1} parent=1 // pred_check
      _
    $region15: #{_zero_conv2d_pallas.1} parent=1 // pred_check_branch
      %26 = sbr.rel (0) target = $region17
    $region16: #{_zero_conv2d_pallas.1} parent=1 // pred_region
      %27 = dma.done [#allocation5], 256
    $region17: #{_zero_conv2d_pallas.1} parent=1 // pred_fallthru
      _
    %28 = vst [vmem:[#allocation2] sm:$0xff] 1.0
    %29 = vst [vmem:[#allocation2 + $0x8] sm:$0xff] 1.0
    %vm30 = vcmask 703488
    %31 = vst.msk [vmem:[#allocation2 + $0x10] sm:$0xff] %vm30, 1.0
    %32 = vst [vmem:[#allocation2 + $0x18] sm:$0xf] 1.0
    %33 = vst [vmem:[#allocation2 + $0x20] sm:$0xf] 1.0
    %vm34 = vcmask 699392
    %35 = vst.msk [vmem:[#allocation2 + $0x28] sm:$0xf] %vm34, 1.0
    %v36 = vld [vmem:[%s0] sm:$0xff]
    %38 = vset.pattern.permute.xlu0 0
    %39 = vperm.xlu0 %38, %v36
    %v40 = vpop.permute.xlu0 %39
    %42 = vst [vmem:[#allocation3] sm:$0xff] %v40
    %43 = vst [vmem:[#allocation3 + $0x8] sm:$0xff] %v40
    %vm44 = vcmask 261120
    %45 = vst.msk [vmem:[#allocation3 + $0x10] sm:$0xff] %vm44, %v40
    %46 = vset.pattern.permute.xlu0 1
    %47 = vperm.xlu0 %46, %v36
    %v48 = vpop.permute.xlu0 %47
    %s50 = scalar_lea.vmem [#allocation3], 24
    %51 = vst [vmem:[%s50] sm:$0xff] %v48
    %52 = vst [vmem:[%s50 + $0x8] sm:$0xff] %v48
    %53 = vst.msk [vmem:[%s50 + $0x10] sm:$0xff] %vm44, %v48
    %54 = vset.pattern.permute.xlu0 2
    %55 = vperm.xlu0 %54, %v36
    %v56 = vpop.permute.xlu0 %55
    %s58 = scalar_lea.vmem [#allocation3], 48
    %59 = vst [vmem:[%s58] sm:$0xff] %v56
    %60 = vst [vmem:[%s58 + $0x8] sm:$0xff] %v56
    %61 = vst.msk [vmem:[%s58 + $0x10] sm:$0xff] %vm44, %v56
    %62 = vset.pattern.permute.xlu0 3
    %63 = vperm.xlu0 %62, %v36
    %v64 = vpop.permute.xlu0 %63
    %s66 = scalar_lea.vmem [#allocation3], 72
    %67 = vst [vmem:[%s66] sm:$0xff] %v64
    %68 = vst [vmem:[%s66 + $0x8] sm:$0xff] %v64
    %69 = vst.msk [vmem:[%s66 + $0x10] sm:$0xff] %vm44, %v64
    %70 = vset.pattern.permute.xlu0 4
    %71 = vperm.xlu0 %70, %v36
    %v72 = vpop.permute.xlu0 %71
    %s74 = scalar_lea.vmem [#allocation3], 96
    %75 = vst [vmem:[%s74] sm:$0xff] %v72
    %76 = vst [vmem:[%s74 + $0x8] sm:$0xff] %v72
    %77 = vst.msk [vmem:[%s74 + $0x10] sm:$0xff] %vm44, %v72
    %78 = vset.pattern.permute.xlu0 5
    %79 = vperm.xlu0 %78, %v36
    %v80 = vpop.permute.xlu0 %79
    %s82 = scalar_lea.vmem [#allocation3], 120
    %83 = vst [vmem:[%s82] sm:$0xff] %v80
    %84 = vst [vmem:[%s82 + $0x8] sm:$0xff] %v80
    %85 = vst.msk [vmem:[%s82 + $0x10] sm:$0xff] %vm44, %v80
    %86 = vset.pattern.permute.xlu0 6
    %87 = vperm.xlu0 %86, %v36
    %v88 = vpop.permute.xlu0 %87
    %s90 = scalar_lea.vmem [#allocation3], 144
    %91 = vst [vmem:[%s90] sm:$0xff] %v88
    %92 = vst [vmem:[%s90 + $0x8] sm:$0xff] %v88
    %93 = vst.msk [vmem:[%s90 + $0x10] sm:$0xff] %vm44, %v88
    %94 = vset.pattern.permute.xlu0 7
    %95 = vperm.xlu0 %94, %v36
    %v96 = vpop.permute.xlu0 %95
    %s98 = scalar_lea.vmem [#allocation3], 168
    %99 = vst [vmem:[%s98] sm:$0xff] %v96
    %100 = vst [vmem:[%s98 + $0x8] sm:$0xff] %v96
    %101 = vst.msk [vmem:[%s98 + $0x10] sm:$0xff] %vm44, %v96
    %102 = vset.pattern.permute.xlu0 8
    %103 = vperm.xlu0 %102, %v36
    %v104 = vpop.permute.xlu0 %103
    %s106 = scalar_lea.vmem [#allocation3], 192
    %107 = vst [vmem:[%s106] sm:$0xff] %v104
    %108 = vst [vmem:[%s106 + $0x8] sm:$0xff] %v104
    %109 = vst.msk [vmem:[%s106 + $0x10] sm:$0xff] %vm44, %v104
    %110 = vset.pattern.permute.xlu0 9
    %111 = vperm.xlu0 %110, %v36
    %v112 = vpop.permute.xlu0 %111
    %s114 = scalar_lea.vmem [#allocation3], 216
    %115 = vst [vmem:[%s114] sm:$0xff] %v112
    %116 = vst [vmem:[%s114 + $0x8] sm:$0xff] %v112
    %117 = vst.msk [vmem:[%s114 + $0x10] sm:$0xff] %vm44, %v112
    %118 = vset.pattern.permute.xlu0 10
    %119 = vperm.xlu0 %118, %v36
    %v120 = vpop.permute.xlu0 %119
    %s122 = scalar_lea.vmem [#allocation3], 240
    %123 = vst [vmem:[%s122] sm:$0xff] %v120
    %124 = vst [vmem:[%s122 + $0x8] sm:$0xff] %v120
    %125 = vst.msk [vmem:[%s122 + $0x10] sm:$0xff] %vm44, %v120
    %126 = vset.pattern.permute.xlu0 11
    %127 = vperm.xlu0 %126, %v36
    %v128 = vpop.permute.xlu0 %127
    %s130 = scalar_lea.vmem [#allocation3], 264
    %131 = vst [vmem:[%s130] sm:$0xff] %v128
    %132 = vst [vmem:[%s130 + $0x8] sm:$0xff] %v128
    %133 = vst.msk [vmem:[%s130 + $0x10] sm:$0xff] %vm44, %v128
    %134 = vset.pattern.permute.xlu0 12
    %135 = vperm.xlu0 %134, %v36
    %v136 = vpop.permute.xlu0 %135
    %s138 = scalar_lea.vmem [#allocation3], 288
    %139 = vst [vmem:[%s138] sm:$0xff] %v136
    %140 = vst [vmem:[%s138 + $0x8] sm:$0xff] %v136
    %141 = vst.msk [vmem:[%s138 + $0x10] sm:$0xff] %vm44, %v136
    %142 = vset.pattern.permute.xlu0 13
    %143 = vperm.xlu0 %142, %v36
    %v144 = vpop.permute.xlu0 %143
    %s146 = scalar_lea.vmem [#allocation3], 312
    %147 = vst [vmem:[%s146] sm:$0xff] %v144
    %148 = vst [vmem:[%s146 + $0x8] sm:$0xff] %v144
    %149 = vst.msk [vmem:[%s146 + $0x10] sm:$0xff] %vm44, %v144
    %150 = vset.pattern.permute.xlu0 14
    %151 = vperm.xlu0 %150, %v36
    %v152 = vpop.permute.xlu0 %151
    %s154 = scalar_lea.vmem [#allocation3], 336
    %155 = vst [vmem:[%s154] sm:$0xff] %v152
    %156 = vst [vmem:[%s154 + $0x8] sm:$0xff] %v152
    %157 = vst.msk [vmem:[%s154 + $0x10] sm:$0xff] %vm44, %v152
    %158 = vset.pattern.permute.xlu0 15
    %159 = vperm.xlu0 %158, %v36
    %v160 = vpop.permute.xlu0 %159
    %s162 = scalar_lea.vmem [#allocation3], 360
    %163 = vst [vmem:[%s162] sm:$0xff] %v160
    %164 = vst [vmem:[%s162 + $0x8] sm:$0xff] %v160
    %165 = vst.msk [vmem:[%s162 + $0x10] sm:$0xff] %vm44, %v160
    %166 = vset.pattern.permute.xlu0 16
    %167 = vperm.xlu0 %166, %v36
    %v168 = vpop.permute.xlu0 %167
    %s170 = scalar_lea.vmem [#allocation3], 384
    %171 = vst [vmem:[%s170] sm:$0xff] %v168
    %172 = vst [vmem:[%s170 + $0x8] sm:$0xff] %v168
    %173 = vst.msk [vmem:[%s170 + $0x10] sm:$0xff] %vm44, %v168
    %174 = vset.pattern.permute.xlu0 17
    %175 = vperm.xlu0 %174, %v36
    %v176 = vpop.permute.xlu0 %175
    %s178 = scalar_lea.vmem [#allocation3], 408
    %179 = vst [vmem:[%s178] sm:$0xff] %v176
    %180 = vst [vmem:[%s178 + $0x8] sm:$0xff] %v176
    %181 = vst.msk [vmem:[%s178 + $0x10] sm:$0xff] %vm44, %v176
    %182 = vset.pattern.permute.xlu0 18
    %183 = vperm.xlu0 %182, %v36
    %v184 = vpop.permute.xlu0 %183
    %s186 = scalar_lea.vmem [#allocation3], 432
    %187 = vst [vmem:[%s186] sm:$0xff] %v184
    %188 = vst [vmem:[%s186 + $0x8] sm:$0xff] %v184
    %189 = vst.msk [vmem:[%s186 + $0x10] sm:$0xff] %vm44, %v184
    %190 = vset.pattern.permute.xlu0 19
    %191 = vperm.xlu0 %190, %v36
    %v192 = vpop.permute.xlu0 %191
    %s194 = scalar_lea.vmem [#allocation3], 456
    %195 = vst [vmem:[%s194] sm:$0xff] %v192
    %196 = vst [vmem:[%s194 + $0x8] sm:$0xff] %v192
    %197 = vst.msk [vmem:[%s194 + $0x10] sm:$0xff] %vm44, %v192
    %198 = vset.pattern.permute.xlu0 20
    %199 = vperm.xlu0 %198, %v36
    %v200 = vpop.permute.xlu0 %199
    %s202 = scalar_lea.vmem [#allocation3], 480
    %203 = vst [vmem:[%s202] sm:$0xff] %v200
    %204 = vst [vmem:[%s202 + $0x8] sm:$0xff] %v200
    %205 = vst.msk [vmem:[%s202 + $0x10] sm:$0xff] %vm44, %v200
    %206 = vset.pattern.permute.xlu0 21
    %207 = vperm.xlu0 %206, %v36
    %v208 = vpop.permute.xlu0 %207
    %s210 = scalar_lea.vmem [#allocation3], 504
    %211 = vst [vmem:[%s210] sm:$0xff] %v208
    %212 = vst [vmem:[%s210 + $0x8] sm:$0xff] %v208
    %213 = vst.msk [vmem:[%s210 + $0x10] sm:$0xff] %vm44, %v208
    %214 = vset.pattern.permute.xlu0 22
    %215 = vperm.xlu0 %214, %v36
    %v216 = vpop.permute.xlu0 %215
    %s218 = scalar_lea.vmem [#allocation3], 528
    %219 = vst [vmem:[%s218] sm:$0xff] %v216
    %220 = vst [vmem:[%s218 + $0x8] sm:$0xff] %v216
    %221 = vst.msk [vmem:[%s218 + $0x10] sm:$0xff] %vm44, %v216
    %222 = vset.pattern.permute.xlu0 23
    %223 = vperm.xlu0 %222, %v36
    %v224 = vpop.permute.xlu0 %223
    %s226 = scalar_lea.vmem [#allocation3], 552
    %227 = vst [vmem:[%s226] sm:$0xff] %v224
    %228 = vst [vmem:[%s226 + $0x8] sm:$0xff] %v224
    %229 = vst.msk [vmem:[%s226 + $0x10] sm:$0xff] %vm44, %v224
    %230 = vset.pattern.permute.xlu0 24
    %231 = vperm.xlu0 %230, %v36
    %v232 = vpop.permute.xlu0 %231
    %s234 = scalar_lea.vmem [#allocation3], 576
    %235 = vst [vmem:[%s234] sm:$0xff] %v232
    %236 = vst [vmem:[%s234 + $0x8] sm:$0xff] %v232
    %237 = vst.msk [vmem:[%s234 + $0x10] sm:$0xff] %vm44, %v232
    %238 = vset.pattern.permute.xlu0 25
    %239 = vperm.xlu0 %238, %v36
    %v240 = vpop.permute.xlu0 %239
    %s242 = scalar_lea.vmem [#allocation3], 600
    %243 = vst [vmem:[%s242] sm:$0xff] %v240
    %244 = vst [vmem:[%s242 + $0x8] sm:$0xff] %v240
    %245 = vst.msk [vmem:[%s242 + $0x10] sm:$0xff] %vm44, %v240
    %246 = vset.pattern.permute.xlu0 26
    %247 = vperm.xlu0 %246, %v36
    %v248 = vpop.permute.xlu0 %247
    %s250 = scalar_lea.vmem [#allocation3], 624
    %251 = vst [vmem:[%s250] sm:$0xff] %v248
    %252 = vst [vmem:[%s250 + $0x8] sm:$0xff] %v248
    %253 = vst.msk [vmem:[%s250 + $0x10] sm:$0xff] %vm44, %v248
    %254 = vset.pattern.permute.xlu0 27
    %255 = vperm.xlu0 %254, %v36
    %v256 = vpop.permute.xlu0 %255
    %s258 = scalar_lea.vmem [#allocation3], 648
    %259 = vst [vmem:[%s258] sm:$0xff] %v256
    %260 = vst [vmem:[%s258 + $0x8] sm:$0xff] %v256
    %261 = vst.msk [vmem:[%s258 + $0x10] sm:$0xff] %vm44, %v256
    %262 = vset.pattern.permute.xlu0 28
    %263 = vperm.xlu0 %262, %v36
    %v264 = vpop.permute.xlu0 %263
    %s266 = scalar_lea.vmem [#allocation3], 672
    %267 = vst [vmem:[%s266] sm:$0xff] %v264
    %268 = vst [vmem:[%s266 + $0x8] sm:$0xff] %v264
    %269 = vst.msk [vmem:[%s266 + $0x10] sm:$0xff] %vm44, %v264
    %270 = vset.pattern.permute.xlu0 29
    %271 = vperm.xlu0 %270, %v36
    %v272 = vpop.permute.xlu0 %271
    %s274 = scalar_lea.vmem [#allocation3], 696
    %275 = vst [vmem:[%s274] sm:$0xff] %v272
    %276 = vst [vmem:[%s274 + $0x8] sm:$0xff] %v272
    %277 = vst.msk [vmem:[%s274 + $0x10] sm:$0xff] %vm44, %v272
    %278 = vset.pattern.permute.xlu0 30
    %279 = vperm.xlu0 %278, %v36
    %v280 = vpop.permute.xlu0 %279
    %s282 = scalar_lea.vmem [#allocation3], 720
    %283 = vst [vmem:[%s282] sm:$0xff] %v280
    %284 = vst [vmem:[%s282 + $0x8] sm:$0xff] %v280
    %285 = vst.msk [vmem:[%s282 + $0x10] sm:$0xff] %vm44, %v280
    %286 = vset.pattern.permute.xlu0 31
    %287 = vperm.xlu0 %286, %v36
    %v288 = vpop.permute.xlu0 %287
    %s290 = scalar_lea.vmem [#allocation3], 744
    %291 = vst [vmem:[%s290] sm:$0xff] %v288
    %292 = vst [vmem:[%s290 + $0x8] sm:$0xff] %v288
    %293 = vst.msk [vmem:[%s290 + $0x10] sm:$0xff] %vm44, %v288
    %294 = vset.pattern.permute.xlu0 32
    %295 = vperm.xlu0 %294, %v36
    %v296 = vpop.permute.xlu0 %295
    %s298 = scalar_lea.vmem [#allocation3], 768
    %299 = vst [vmem:[%s298] sm:$0xff] %v296
    %300 = vst [vmem:[%s298 + $0x8] sm:$0xff] %v296
    %301 = vst.msk [vmem:[%s298 + $0x10] sm:$0xff] %vm44, %v296
    %302 = vset.pattern.permute.xlu0 33
    %303 = vperm.xlu0 %302, %v36
    %v304 = vpop.permute.xlu0 %303
    %s306 = scalar_lea.vmem [#allocation3], 792
    %307 = vst [vmem:[%s306] sm:$0xff] %v304
    %308 = vst [vmem:[%s306 + $0x8] sm:$0xff] %v304
    %309 = vst.msk [vmem:[%s306 + $0x10] sm:$0xff] %vm44, %v304
    %310 = vset.pattern.permute.xlu0 34
    %311 = vperm.xlu0 %310, %v36
    %v312 = vpop.permute.xlu0 %311
    %s314 = scalar_lea.vmem [#allocation3], 816
    %315 = vst [vmem:[%s314] sm:$0xff] %v312
    %316 = vst [vmem:[%s314 + $0x8] sm:$0xff] %v312
    %317 = vst.msk [vmem:[%s314 + $0x10] sm:$0xff] %vm44, %v312
    %318 = vset.pattern.permute.xlu0 35
    %319 = vperm.xlu0 %318, %v36
    %v320 = vpop.permute.xlu0 %319
    %s322 = scalar_lea.vmem [#allocation3], 840
    %323 = vst [vmem:[%s322] sm:$0xff] %v320
    %324 = vst [vmem:[%s322 + $0x8] sm:$0xff] %v320
    %325 = vst.msk [vmem:[%s322 + $0x10] sm:$0xff] %vm44, %v320
    %v326 = vld [vmem:[%s1] sm:$0xff]
    %328 = vset.pattern.permute.xlu0 0
    %329 = vperm.xlu0 %328, %v326
    %v330 = vpop.permute.xlu0 %329
    %v332 = vld [vmem:[#allocation4] sm:$0xff]
    %334 = vrot.lane.b32.xlu0 %v332, 19
    %v335 = vpop.permute.xlu0 %334
    %vm337 = vcmask 281752
    %338 = vst.msk [vmem:[#allocation2] sm:$0xf] %vm337, %v335
    %339 = vrot.lane.b32.xlu0 %v332, 21
    %v340 = vpop.permute.xlu0 %339
    %vm342 = vcmask 429352
    %343 = vst.msk [vmem:[#allocation2] sm:$0xf] %vm342, %v340
    %344 = vrot.lane.b32.xlu0 %v332, 23
    %v345 = vpop.permute.xlu0 %344
    %vm347 = vcmask 576952
    %348 = vst.msk [vmem:[#allocation2] sm:$0xf] %vm347, %v345
    %349 = vrot.lane.b32.xlu0 %v332, 25
    %v350 = vpop.permute.xlu0 %349
    %vm352 = vcmask 724552
    %353 = vst.msk [vmem:[#allocation2] sm:$0xf] %vm352, %v350
    %354 = vrot.lane.b32.xlu0 %v332, 27
    %v355 = vpop.permute.xlu0 %354
    %vm357 = vcmask 872152
    %358 = vst.msk [vmem:[#allocation2] sm:$0xf] %vm357, %v355
    %359 = vrot.lane.b32.xlu0 %v332, 29
    %v360 = vpop.permute.xlu0 %359
    %vm362 = vcmask 1019752
    %363 = vst.msk [vmem:[#allocation2] sm:$0xf] %vm362, %v360
    %364 = vrot.lane.b32.xlu0 %v332, 31
    %v365 = vpop.permute.xlu0 %364
    %vm367 = vcmask 1044472
    %368 = vst.msk [vmem:[#allocation2] sm:$0xf] %vm367, %v365
    %vm369 = vcmask 117760
    %370 = vst.msk [vmem:[#allocation2 + $0x8] sm:$0xf] %vm369, %v365
    %371 = vrot.lane.b32.xlu0 %v332, 33
    %v372 = vpop.permute.xlu0 %371
    %vm374 = vcmask 265352
    %375 = vst.msk [vmem:[#allocation2 + $0x8] sm:$0xf] %vm374, %v372
    %v376 = vcombine.high %v332, %v332
    %377 = vrot.lane.b32.xlu0 %v376, 35
    %v378 = vpop.permute.xlu0 %377
    %vm380 = vcmask 412952
    %381 = vst.msk [vmem:[#allocation2 + $0x8] sm:$0xf] %vm380, %v378
    %382 = vrot.lane.b32.xlu0 %v376, 37
    %v383 = vpop.permute.xlu0 %382
    %vm385 = vcmask 560552
    %386 = vst.msk [vmem:[#allocation2 + $0x8] sm:$0xf] %vm385, %v383
    %387 = vrot.lane.b32.xlu0 %v376, 39
    %v388 = vpop.permute.xlu0 %387
    %vm390 = vcmask 708152
    %391 = vst.msk [vmem:[#allocation2 + $0x8] sm:$0xf] %vm390, %v388
    %392 = vrot.lane.b32.xlu0 %v376, 41
    %v393 = vpop.permute.xlu0 %392
    %vm395 = vcmask 855752
    %396 = vst.msk [vmem:[#allocation2 + $0x8] sm:$0xf] %vm395, %v393
    %397 = vrot.lane.b32.xlu0 %v376, 43
    %v398 = vpop.permute.xlu0 %397
    %vm400 = vcmask 1003352
    %401 = vst.msk [vmem:[#allocation2 + $0x8] sm:$0xf] %vm400, %v398
    %402 = vrot.lane.b32.xlu0 %v376, 45
    %v403 = vpop.permute.xlu0 %402
    %vm405 = vcmask 1044456
    %406 = vst.msk [vmem:[#allocation2 + $0x8] sm:$0xf] %vm405, %v403
    %vm407 = vcmask 101376
    %408 = vst.msk [vmem:[#allocation2 + $0x10] sm:$0xf] %vm407, %v403
    %409 = vrot.lane.b32.xlu0 %v376, 47
    %v410 = vpop.permute.xlu0 %409
    %vm412 = vcmask 248952
    %413 = vst.msk [vmem:[#allocation2 + $0x10] sm:$0xf] %vm412, %v410
    %414 = vrot.lane.b32.xlu0 %v376, 49
    %v415 = vpop.permute.xlu0 %414
    %vm417 = vcmask 396552
    %418 = vst.msk [vmem:[#allocation2 + $0x10] sm:$0xf] %vm417, %v415
    %v419 = vld [vmem:[#allocation2] sm:$0xf]
    %v420 = vld [vmem:[#allocation2 + $0x8] sm:$0xf]
    %v421 = vld [vmem:[#allocation2 + $0x10] sm:$0xf]
    %v422 = vld [vmem:[#allocation3] sm:$0xff]
    %v423 = vld [vmem:[#allocation3 + $0x8] sm:$0xff]
    %v424 = vld [vmem:[#allocation3 + $0x10] sm:$0xff]
    %v425 = vlaneseq
    %v426 = vshrl.u32 %v425, 7
    %v427 = vsub.s32 0, %v426
    %v428 = vrot.slane %v419, %v427
    %v429 = vlaneseq
    %v430 = vshrl.u32 %v429, 7
    %v431 = vsub.s32 0, %v430
    %v432 = vrot.slane %v420, %v431
    %v433 = vlaneseq
    %v434 = vshrl.u32 %v433, 7
    %v435 = vsub.s32 0, %v434
    %v436 = vrot.slane %v421, %v435
    %v437 = vmul.f32 %v422, %v428
    %v438 = vmul.f32 %v423, %v432
    %v439 = vmul.f32 %v424, %v436
    %v440 = vadd.f32 %v330, %v437
    %v441 = vadd.f32 %v330, %v438
    %v442 = vadd.f32 %v330, %v439
    %v443 = vld [vmem:[%s50] sm:$0xff]
    %v444 = vld [vmem:[%s50 + $0x8] sm:$0xff]
    %v445 = vld [vmem:[%s50 + $0x10] sm:$0xff]
    %v446 = vlaneseq
    %v447 = vshrl.u32 %v446, 7
    %v448 = vsub.s32 1, %v447
    %v449 = vrot.slane %v419, %v448
    %v450 = vlaneseq
    %v451 = vshrl.u32 %v450, 7
    %v452 = vsub.s32 1, %v451
    %v453 = vrot.slane %v420, %v452
    %v454 = vlaneseq
    %v455 = vshrl.u32 %v454, 7
    %v456 = vsub.s32 1, %v455
    %v457 = vrot.slane %v421, %v456
    %v458 = vmul.f32 %v443, %v449
    %v459 = vmul.f32 %v444, %v453
    %v460 = vmul.f32 %v445, %v457
    %v461 = vadd.f32 %v440, %v458
    %v462 = vadd.f32 %v441, %v459
    %v463 = vadd.f32 %v442, %v460
    %v464 = vld [vmem:[%s58] sm:$0xff]
    %v465 = vld [vmem:[%s58 + $0x8] sm:$0xff]
    %v466 = vld [vmem:[%s58 + $0x10] sm:$0xff]
    %v467 = vlaneseq
    %v468 = vshrl.u32 %v467, 7
    %v469 = vsub.s32 2, %v468
    %v470 = vrot.slane %v419, %v469
    %v471 = vlaneseq
    %v472 = vshrl.u32 %v471, 7
    %v473 = vsub.s32 2, %v472
    %v474 = vrot.slane %v420, %v473
    %v475 = vlaneseq
    %v476 = vshrl.u32 %v475, 7
    %v477 = vsub.s32 2, %v476
    %v478 = vrot.slane %v421, %v477
    %v479 = vmul.f32 %v464, %v470
    %v480 = vmul.f32 %v465, %v474
    %v481 = vmul.f32 %v466, %v478
    %v482 = vadd.f32 %v461, %v479
    %v483 = vadd.f32 %v462, %v480
    %v484 = vadd.f32 %v463, %v481
    %v485 = vld [vmem:[%s66] sm:$0xff]
    %v486 = vld [vmem:[%s66 + $0x8] sm:$0xff]
    %v487 = vld [vmem:[%s66 + $0x10] sm:$0xff]
    %v488 = vlaneseq
    %v489 = vshrl.u32 %v488, 7
    %v490 = vsub.s32 3, %v489
    %v491 = vrot.slane %v419, %v490
    %v492 = vlaneseq
    %v493 = vshrl.u32 %v492, 7
    %v494 = vsub.s32 3, %v493
    %v495 = vrot.slane %v420, %v494
    %v496 = vlaneseq
    %v497 = vshrl.u32 %v496, 7
    %v498 = vsub.s32 3, %v497
    %v499 = vrot.slane %v421, %v498
    %v500 = vmul.f32 %v485, %v491
    %v501 = vmul.f32 %v486, %v495
    %v502 = vmul.f32 %v487, %v499
    %v503 = vadd.f32 %v482, %v500
    %v504 = vadd.f32 %v483, %v501
    %v505 = vadd.f32 %v484, %v502
    %v506 = vld [vmem:[%s74] sm:$0xff]
    %v507 = vld [vmem:[%s74 + $0x8] sm:$0xff]
    %v508 = vld [vmem:[%s74 + $0x10] sm:$0xff]
    %512 = vrot.lane.b32.xlu0 %v428, 127
    %v513 = vpop.permute.xlu0 %512
    %514 = vrot.lane.b32.xlu0 %v432, 127
    %v515 = vpop.permute.xlu0 %514
    %516 = vrot.lane.b32.xlu0 %v436, 127
    %v517 = vpop.permute.xlu0 %516
    %vm518 = vcmask 1039360
    %v519 = vsel %vm518, %v513, %v515
    %v520 = vsel %vm518, %v515, %v517
    %v524 = vmul.f32 %v506, %v519
    %v525 = vmul.f32 %v507, %v520
    %v526 = vmul.f32 %v508, %v517
    %v527 = vadd.f32 %v503, %v524
    %v528 = vadd.f32 %v504, %v525
    %v529 = vadd.f32 %v505, %v526
    %v530 = vld [vmem:[%s82] sm:$0xff]
    %v531 = vld [vmem:[%s82 + $0x8] sm:$0xff]
    %v532 = vld [vmem:[%s82 + $0x10] sm:$0xff]
    %536 = vrot.lane.b32.xlu0 %v449, 127
    %v537 = vpop.permute.xlu0 %536
    %538 = vrot.lane.b32.xlu0 %v453, 127
    %v539 = vpop.permute.xlu0 %538
    %540 = vrot.lane.b32.xlu0 %v457, 127
    %v541 = vpop.permute.xlu0 %540
    %v542 = vsel %vm518, %v537, %v539
    %v543 = vsel %vm518, %v539, %v541
    %v547 = vmul.f32 %v530, %v542
    %v548 = vmul.f32 %v531, %v543
    %v549 = vmul.f32 %v532, %v541
    %v550 = vadd.f32 %v527, %v547
    %v551 = vadd.f32 %v528, %v548
    %v552 = vadd.f32 %v529, %v549
    %v553 = vld [vmem:[%s90] sm:$0xff]
    %v554 = vld [vmem:[%s90 + $0x8] sm:$0xff]
    %v555 = vld [vmem:[%s90 + $0x10] sm:$0xff]
    %559 = vrot.lane.b32.xlu0 %v470, 127
    %v560 = vpop.permute.xlu0 %559
    %561 = vrot.lane.b32.xlu0 %v474, 127
    %v562 = vpop.permute.xlu0 %561
    %563 = vrot.lane.b32.xlu0 %v478, 127
    %v564 = vpop.permute.xlu0 %563
    %v565 = vsel %vm518, %v560, %v562
    %v566 = vsel %vm518, %v562, %v564
    %v570 = vmul.f32 %v553, %v565
    %v571 = vmul.f32 %v554, %v566
    %v572 = vmul.f32 %v555, %v564
    %v573 = vadd.f32 %v550, %v570
    %v574 = vadd.f32 %v551, %v571
    %v575 = vadd.f32 %v552, %v572
    %v576 = vld [vmem:[%s98] sm:$0xff]
    %v577 = vld [vmem:[%s98 + $0x8] sm:$0xff]
    %v578 = vld [vmem:[%s98 + $0x10] sm:$0xff]
    %582 = vrot.lane.b32.xlu0 %v491, 127
    %v583 = vpop.permute.xlu0 %582
    %584 = vrot.lane.b32.xlu0 %v495, 127
    %v585 = vpop.permute.xlu0 %584
    %586 = vrot.lane.b32.xlu0 %v499, 127
    %v587 = vpop.permute.xlu0 %586
    %v588 = vsel %vm518, %v583, %v585
    %v589 = vsel %vm518, %v585, %v587
    %v593 = vmul.f32 %v576, %v588
    %v594 = vmul.f32 %v577, %v589
    %v595 = vmul.f32 %v578, %v587
    %v596 = vadd.f32 %v573, %v593
    %v597 = vadd.f32 %v574, %v594
    %v598 = vadd.f32 %v575, %v595
    %v599 = vld [vmem:[%s106] sm:$0xff]
    %v600 = vld [vmem:[%s106 + $0x8] sm:$0xff]
    %v601 = vld [vmem:[%s106 + $0x10] sm:$0xff]
    %602 = vrot.lane.b32.xlu0 %v428, 126
    %v603 = vpop.permute.xlu0 %602
    %604 = vrot.lane.b32.xlu0 %v432, 126
    %v605 = vpop.permute.xlu0 %604
    %606 = vrot.lane.b32.xlu0 %v436, 126
    %v607 = vpop.permute.xlu0 %606
    %vm608 = vcmask 1031168
    %v609 = vsel %vm608, %v603, %v605
    %v610 = vsel %vm608, %v605, %v607
    %v614 = vmul.f32 %v599, %v609
    %v615 = vmul.f32 %v600, %v610
    %v616 = vmul.f32 %v601, %v607
    %v617 = vadd.f32 %v596, %v614
    %v618 = vadd.f32 %v597, %v615
    %v619 = vadd.f32 %v598, %v616
    %v620 = vld [vmem:[%s114] sm:$0xff]
    %v621 = vld [vmem:[%s114 + $0x8] sm:$0xff]
    %v622 = vld [vmem:[%s114 + $0x10] sm:$0xff]
    %623 = vrot.lane.b32.xlu0 %v449, 126
    %v624 = vpop.permute.xlu0 %623
    %625 = vrot.lane.b32.xlu0 %v453, 126
    %v626 = vpop.permute.xlu0 %625
    %627 = vrot.lane.b32.xlu0 %v457, 126
    %v628 = vpop.permute.xlu0 %627
    %v629 = vsel %vm608, %v624, %v626
    %v630 = vsel %vm608, %v626, %v628
    %v634 = vmul.f32 %v620, %v629
    %v635 = vmul.f32 %v621, %v630
    %v636 = vmul.f32 %v622, %v628
    %v637 = vadd.f32 %v617, %v634
    %v638 = vadd.f32 %v618, %v635
    %v639 = vadd.f32 %v619, %v636
    %v640 = vld [vmem:[%s122] sm:$0xff]
    %v641 = vld [vmem:[%s122 + $0x8] sm:$0xff]
    %v642 = vld [vmem:[%s122 + $0x10] sm:$0xff]
    %643 = vrot.lane.b32.xlu0 %v470, 126
    %v644 = vpop.permute.xlu0 %643
    %645 = vrot.lane.b32.xlu0 %v474, 126
    %v646 = vpop.permute.xlu0 %645
    %647 = vrot.lane.b32.xlu0 %v478, 126
    %v648 = vpop.permute.xlu0 %647
    %v649 = vsel %vm608, %v644, %v646
    %v650 = vsel %vm608, %v646, %v648
    %v654 = vmul.f32 %v640, %v649
    %v655 = vmul.f32 %v641, %v650
    %v656 = vmul.f32 %v642, %v648
    %v657 = vadd.f32 %v637, %v654
    %v658 = vadd.f32 %v638, %v655
    %v659 = vadd.f32 %v639, %v656
    %v660 = vld [vmem:[%s130] sm:$0xff]
    %v661 = vld [vmem:[%s130 + $0x8] sm:$0xff]
    %v662 = vld [vmem:[%s130 + $0x10] sm:$0xff]
    %663 = vrot.lane.b32.xlu0 %v491, 126
    %v664 = vpop.permute.xlu0 %663
    %665 = vrot.lane.b32.xlu0 %v495, 126
    %v666 = vpop.permute.xlu0 %665
    %667 = vrot.lane.b32.xlu0 %v499, 126
    %v668 = vpop.permute.xlu0 %667
    %v669 = vsel %vm608, %v664, %v666
    %v670 = vsel %vm608, %v666, %v668
    %v674 = vmul.f32 %v660, %v669
    %v675 = vmul.f32 %v661, %v670
    %v676 = vmul.f32 %v662, %v668
    %v677 = vadd.f32 %v657, %v674
    %v678 = vadd.f32 %v658, %v675
    %v679 = vadd.f32 %v659, %v676
    %v680 = vld [vmem:[%s138] sm:$0xff]
    %v681 = vld [vmem:[%s138 + $0x8] sm:$0xff]
    %v682 = vld [vmem:[%s138 + $0x10] sm:$0xff]
    %683 = vrot.lane.b32.xlu0 %v428, 110
    %v684 = vpop.permute.xlu0 %683
    %685 = vrot.lane.b32.xlu0 %v432, 110
    %v686 = vpop.permute.xlu0 %685
    %687 = vrot.lane.b32.xlu0 %v436, 110
    %v688 = vpop.permute.xlu0 %687
    %vm689 = vcmask 900096
    %v690 = vsel %vm689, %v684, %v686
    %v691 = vsel %vm689, %v686, %v688
    %v695 = vmul.f32 %v680, %v690
    %v696 = vmul.f32 %v681, %v691
    %v697 = vmul.f32 %v682, %v688
    %v698 = vadd.f32 %v677, %v695
    %v699 = vadd.f32 %v678, %v696
    %v700 = vadd.f32 %v679, %v697
    %v701 = vld [vmem:[%s146] sm:$0xff]
    %v702 = vld [vmem:[%s146 + $0x8] sm:$0xff]
    %v703 = vld [vmem:[%s146 + $0x10] sm:$0xff]
    %704 = vrot.lane.b32.xlu0 %v449, 110
    %v705 = vpop.permute.xlu0 %704
    %706 = vrot.lane.b32.xlu0 %v453, 110
    %v707 = vpop.permute.xlu0 %706
    %708 = vrot.lane.b32.xlu0 %v457, 110
    %v709 = vpop.permute.xlu0 %708
    %v710 = vsel %vm689, %v705, %v707
    %v711 = vsel %vm689, %v707, %v709
    %v715 = vmul.f32 %v701, %v710
    %v716 = vmul.f32 %v702, %v711
    %v717 = vmul.f32 %v703, %v709
    %v718 = vadd.f32 %v698, %v715
    %v719 = vadd.f32 %v699, %v716
    %v720 = vadd.f32 %v700, %v717
    %v721 = vld [vmem:[%s154] sm:$0xff]
    %v722 = vld [vmem:[%s154 + $0x8] sm:$0xff]
    %v723 = vld [vmem:[%s154 + $0x10] sm:$0xff]
    %724 = vrot.lane.b32.xlu0 %v470, 110
    %v725 = vpop.permute.xlu0 %724
    %726 = vrot.lane.b32.xlu0 %v474, 110
    %v727 = vpop.permute.xlu0 %726
    %728 = vrot.lane.b32.xlu0 %v478, 110
    %v729 = vpop.permute.xlu0 %728
    %v730 = vsel %vm689, %v725, %v727
    %v731 = vsel %vm689, %v727, %v729
    %v735 = vmul.f32 %v721, %v730
    %v736 = vmul.f32 %v722, %v731
    %v737 = vmul.f32 %v723, %v729
    %v738 = vadd.f32 %v718, %v735
    %v739 = vadd.f32 %v719, %v736
    %v740 = vadd.f32 %v720, %v737
    %v741 = vld [vmem:[%s162] sm:$0xff]
    %v742 = vld [vmem:[%s162 + $0x8] sm:$0xff]
    %v743 = vld [vmem:[%s162 + $0x10] sm:$0xff]
    %744 = vrot.lane.b32.xlu0 %v491, 110
    %v745 = vpop.permute.xlu0 %744
    %746 = vrot.lane.b32.xlu0 %v495, 110
    %v747 = vpop.permute.xlu0 %746
    %748 = vrot.lane.b32.xlu0 %v499, 110
    %v749 = vpop.permute.xlu0 %748
    %v750 = vsel %vm689, %v745, %v747
    %v751 = vsel %vm689, %v747, %v749
    %v755 = vmul.f32 %v741, %v750
    %v756 = vmul.f32 %v742, %v751
    %v757 = vmul.f32 %v743, %v749
    %v758 = vadd.f32 %v738, %v755
    %v759 = vadd.f32 %v739, %v756
    %v760 = vadd.f32 %v740, %v757
    %v761 = vld [vmem:[%s170] sm:$0xff]
    %v762 = vld [vmem:[%s170 + $0x8] sm:$0xff]
    %v763 = vld [vmem:[%s170 + $0x10] sm:$0xff]
    %764 = vrot.lane.b32.xlu0 %v428, 109
    %v765 = vpop.permute.xlu0 %764
    %766 = vrot.lane.b32.xlu0 %v432, 109
    %v767 = vpop.permute.xlu0 %766
    %768 = vrot.lane.b32.xlu0 %v436, 109
    %v769 = vpop.permute.xlu0 %768
    %vm770 = vcmask 891904
    %v771 = vsel %vm770, %v765, %v767
    %v772 = vsel %vm770, %v767, %v769
    %v776 = vmul.f32 %v761, %v771
    %v777 = vmul.f32 %v762, %v772
    %v778 = vmul.f32 %v763, %v769
    %v779 = vadd.f32 %v758, %v776
    %v780 = vadd.f32 %v759, %v777
    %v781 = vadd.f32 %v760, %v778
    %v782 = vld [vmem:[%s178] sm:$0xff]
    %v783 = vld [vmem:[%s178 + $0x8] sm:$0xff]
    %v784 = vld [vmem:[%s178 + $0x10] sm:$0xff]
    %785 = vrot.lane.b32.xlu0 %v449, 109
    %v786 = vpop.permute.xlu0 %785
    %787 = vrot.lane.b32.xlu0 %v453, 109
    %v788 = vpop.permute.xlu0 %787
    %789 = vrot.lane.b32.xlu0 %v457, 109
    %v790 = vpop.permute.xlu0 %789
    %v791 = vsel %vm770, %v786, %v788
    %v792 = vsel %vm770, %v788, %v790
    %v796 = vmul.f32 %v782, %v791
    %v797 = vmul.f32 %v783, %v792
    %v798 = vmul.f32 %v784, %v790
    %v799 = vadd.f32 %v779, %v796
    %v800 = vadd.f32 %v780, %v797
    %v801 = vadd.f32 %v781, %v798
    %v802 = vld [vmem:[%s186] sm:$0xff]
    %v803 = vld [vmem:[%s186 + $0x8] sm:$0xff]
    %v804 = vld [vmem:[%s186 + $0x10] sm:$0xff]
    %805 = vrot.lane.b32.xlu0 %v470, 109
    %v806 = vpop.permute.xlu0 %805
    %807 = vrot.lane.b32.xlu0 %v474, 109
    %v808 = vpop.permute.xlu0 %807
    %809 = vrot.lane.b32.xlu0 %v478, 109
    %v810 = vpop.permute.xlu0 %809
    %v811 = vsel %vm770, %v806, %v808
    %v812 = vsel %vm770, %v808, %v810
    %v816 = vmul.f32 %v802, %v811
    %v817 = vmul.f32 %v803, %v812
    %v818 = vmul.f32 %v804, %v810
    %v819 = vadd.f32 %v799, %v816
    %v820 = vadd.f32 %v800, %v817
    %v821 = vadd.f32 %v801, %v818
    %v822 = vld [vmem:[%s194] sm:$0xff]
    %v823 = vld [vmem:[%s194 + $0x8] sm:$0xff]
    %v824 = vld [vmem:[%s194 + $0x10] sm:$0xff]
    %825 = vrot.lane.b32.xlu0 %v491, 109
    %v826 = vpop.permute.xlu0 %825
    %827 = vrot.lane.b32.xlu0 %v495, 109
    %v828 = vpop.permute.xlu0 %827
    %829 = vrot.lane.b32.xlu0 %v499, 109
    %v830 = vpop.permute.xlu0 %829
    %v831 = vsel %vm770, %v826, %v828
    %v832 = vsel %vm770, %v828, %v830
    %v836 = vmul.f32 %v822, %v831
    %v837 = vmul.f32 %v823, %v832
    %v838 = vmul.f32 %v824, %v830
    %v839 = vadd.f32 %v819, %v836
    %v840 = vadd.f32 %v820, %v837
    %v841 = vadd.f32 %v821, %v838
    %v842 = vld [vmem:[%s202] sm:$0xff]
    %v843 = vld [vmem:[%s202 + $0x8] sm:$0xff]
    %v844 = vld [vmem:[%s202 + $0x10] sm:$0xff]
    %845 = vrot.lane.b32.xlu0 %v428, 108
    %v846 = vpop.permute.xlu0 %845
    %847 = vrot.lane.b32.xlu0 %v432, 108
    %v848 = vpop.permute.xlu0 %847
    %849 = vrot.lane.b32.xlu0 %v436, 108
    %v850 = vpop.permute.xlu0 %849
    %vm851 = vcmask 883712
    %v852 = vsel %vm851, %v846, %v848
    %v853 = vsel %vm851, %v848, %v850
    %v857 = vmul.f32 %v842, %v852
    %v858 = vmul.f32 %v843, %v853
    %v859 = vmul.f32 %v844, %v850
    %v860 = vadd.f32 %v839, %v857
    %v861 = vadd.f32 %v840, %v858
    %v862 = vadd.f32 %v841, %v859
    %v863 = vld [vmem:[%s210] sm:$0xff]
    %v864 = vld [vmem:[%s210 + $0x8] sm:$0xff]
    %v865 = vld [vmem:[%s210 + $0x10] sm:$0xff]
    %866 = vrot.lane.b32.xlu0 %v449, 108
    %v867 = vpop.permute.xlu0 %866
    %868 = vrot.lane.b32.xlu0 %v453, 108
    %v869 = vpop.permute.xlu0 %868
    %870 = vrot.lane.b32.xlu0 %v457, 108
    %v871 = vpop.permute.xlu0 %870
    %v872 = vsel %vm851, %v867, %v869
    %v873 = vsel %vm851, %v869, %v871
    %v877 = vmul.f32 %v863, %v872
    %v878 = vmul.f32 %v864, %v873
    %v879 = vmul.f32 %v865, %v871
    %v880 = vadd.f32 %v860, %v877
    %v881 = vadd.f32 %v861, %v878
    %v882 = vadd.f32 %v862, %v879
    %v883 = vld [vmem:[%s218] sm:$0xff]
    %v884 = vld [vmem:[%s218 + $0x8] sm:$0xff]
    %v885 = vld [vmem:[%s218 + $0x10] sm:$0xff]
    %886 = vrot.lane.b32.xlu0 %v470, 108
    %v887 = vpop.permute.xlu0 %886
    %888 = vrot.lane.b32.xlu0 %v474, 108
    %v889 = vpop.permute.xlu0 %888
    %890 = vrot.lane.b32.xlu0 %v478, 108
    %v891 = vpop.permute.xlu0 %890
    %v892 = vsel %vm851, %v887, %v889
    %v893 = vsel %vm851, %v889, %v891
    %v897 = vmul.f32 %v883, %v892
    %v898 = vmul.f32 %v884, %v893
    %v899 = vmul.f32 %v885, %v891
    %v900 = vadd.f32 %v880, %v897
    %v901 = vadd.f32 %v881, %v898
    %v902 = vadd.f32 %v882, %v899
    %v903 = vld [vmem:[%s226] sm:$0xff]
    %v904 = vld [vmem:[%s226 + $0x8] sm:$0xff]
    %v905 = vld [vmem:[%s226 + $0x10] sm:$0xff]
    %906 = vrot.lane.b32.xlu0 %v491, 108
    %v907 = vpop.permute.xlu0 %906
    %908 = vrot.lane.b32.xlu0 %v495, 108
    %v909 = vpop.permute.xlu0 %908
    %910 = vrot.lane.b32.xlu0 %v499, 108
    %v911 = vpop.permute.xlu0 %910
    %v912 = vsel %vm851, %v907, %v909
    %v913 = vsel %vm851, %v909, %v911
    %v917 = vmul.f32 %v903, %v912
    %v918 = vmul.f32 %v904, %v913
    %v919 = vmul.f32 %v905, %v911
    %v920 = vadd.f32 %v900, %v917
    %v921 = vadd.f32 %v901, %v918
    %v922 = vadd.f32 %v902, %v919
    %v923 = vld [vmem:[%s234] sm:$0xff]
    %v924 = vld [vmem:[%s234 + $0x8] sm:$0xff]
    %v925 = vld [vmem:[%s234 + $0x10] sm:$0xff]
    %926 = vrot.lane.b32.xlu0 %v428, 92
    %v927 = vpop.permute.xlu0 %926
    %928 = vrot.lane.b32.xlu0 %v432, 92
    %v929 = vpop.permute.xlu0 %928
    %930 = vrot.lane.b32.xlu0 %v436, 92
    %v931 = vpop.permute.xlu0 %930
    %vm932 = vcmask 752640
    %v933 = vsel %vm932, %v927, %v929
    %v934 = vsel %vm932, %v929, %v931
    %v938 = vmul.f32 %v923, %v933
    %v939 = vmul.f32 %v924, %v934
    %v940 = vmul.f32 %v925, %v931
    %v941 = vadd.f32 %v920, %v938
    %v942 = vadd.f32 %v921, %v939
    %v943 = vadd.f32 %v922, %v940
    %v944 = vld [vmem:[%s242] sm:$0xff]
    %v945 = vld [vmem:[%s242 + $0x8] sm:$0xff]
    %v946 = vld [vmem:[%s242 + $0x10] sm:$0xff]
    %947 = vrot.lane.b32.xlu0 %v449, 92
    %v948 = vpop.permute.xlu0 %947
    %949 = vrot.lane.b32.xlu0 %v453, 92
    %v950 = vpop.permute.xlu0 %949
    %951 = vrot.lane.b32.xlu0 %v457, 92
    %v952 = vpop.permute.xlu0 %951
    %v953 = vsel %vm932, %v948, %v950
    %v954 = vsel %vm932, %v950, %v952
    %v958 = vmul.f32 %v944, %v953
    %v959 = vmul.f32 %v945, %v954
    %v960 = vmul.f32 %v946, %v952
    %v961 = vadd.f32 %v941, %v958
    %v962 = vadd.f32 %v942, %v959
    %v963 = vadd.f32 %v943, %v960
    %v964 = vld [vmem:[%s250] sm:$0xff]
    %v965 = vld [vmem:[%s250 + $0x8] sm:$0xff]
    %v966 = vld [vmem:[%s250 + $0x10] sm:$0xff]
    %967 = vrot.lane.b32.xlu0 %v470, 92
    %v968 = vpop.permute.xlu0 %967
    %969 = vrot.lane.b32.xlu0 %v474, 92
    %v970 = vpop.permute.xlu0 %969
    %971 = vrot.lane.b32.xlu0 %v478, 92
    %v972 = vpop.permute.xlu0 %971
    %v973 = vsel %vm932, %v968, %v970
    %v974 = vsel %vm932, %v970, %v972
    %v978 = vmul.f32 %v964, %v973
    %v979 = vmul.f32 %v965, %v974
    %v980 = vmul.f32 %v966, %v972
    %v981 = vadd.f32 %v961, %v978
    %v982 = vadd.f32 %v962, %v979
    %v983 = vadd.f32 %v963, %v980
    %v984 = vld [vmem:[%s258] sm:$0xff]
    %v985 = vld [vmem:[%s258 + $0x8] sm:$0xff]
    %v986 = vld [vmem:[%s258 + $0x10] sm:$0xff]
    %987 = vrot.lane.b32.xlu0 %v491, 92
    %v988 = vpop.permute.xlu0 %987
    %989 = vrot.lane.b32.xlu0 %v495, 92
    %v990 = vpop.permute.xlu0 %989
    %991 = vrot.lane.b32.xlu0 %v499, 92
    %v992 = vpop.permute.xlu0 %991
    %v993 = vsel %vm932, %v988, %v990
    %v994 = vsel %vm932, %v990, %v992
    %v998 = vmul.f32 %v984, %v993
    %v999 = vmul.f32 %v985, %v994
    %v1000 = vmul.f32 %v986, %v992
    %v1001 = vadd.f32 %v981, %v998
    %v1002 = vadd.f32 %v982, %v999
    %v1003 = vadd.f32 %v983, %v1000
    %v1004 = vld [vmem:[%s266] sm:$0xff]
    %v1005 = vld [vmem:[%s266 + $0x8] sm:$0xff]
    %v1006 = vld [vmem:[%s266 + $0x10] sm:$0xff]
    %1007 = vrot.lane.b32.xlu0 %v428, 91
    %v1008 = vpop.permute.xlu0 %1007
    %1009 = vrot.lane.b32.xlu0 %v432, 91
    %v1010 = vpop.permute.xlu0 %1009
    %1011 = vrot.lane.b32.xlu0 %v436, 91
    %v1012 = vpop.permute.xlu0 %1011
    %vm1013 = vcmask 744448
    %v1014 = vsel %vm1013, %v1008, %v1010
    %v1015 = vsel %vm1013, %v1010, %v1012
    %v1019 = vmul.f32 %v1004, %v1014
    %v1020 = vmul.f32 %v1005, %v1015
    %v1021 = vmul.f32 %v1006, %v1012
    %v1022 = vadd.f32 %v1001, %v1019
    %v1023 = vadd.f32 %v1002, %v1020
    %v1024 = vadd.f32 %v1003, %v1021
    %v1025 = vld [vmem:[%s274] sm:$0xff]
    %v1026 = vld [vmem:[%s274 + $0x8] sm:$0xff]
    %v1027 = vld [vmem:[%s274 + $0x10] sm:$0xff]
    %1028 = vrot.lane.b32.xlu0 %v449, 91
    %v1029 = vpop.permute.xlu0 %1028
    %1030 = vrot.lane.b32.xlu0 %v453, 91
    %v1031 = vpop.permute.xlu0 %1030
    %1032 = vrot.lane.b32.xlu0 %v457, 91
    %v1033 = vpop.permute.xlu0 %1032
    %v1034 = vsel %vm1013, %v1029, %v1031
    %v1035 = vsel %vm1013, %v1031, %v1033
    %v1039 = vmul.f32 %v1025, %v1034
    %v1040 = vmul.f32 %v1026, %v1035
    %v1041 = vmul.f32 %v1027, %v1033
    %v1042 = vadd.f32 %v1022, %v1039
    %v1043 = vadd.f32 %v1023, %v1040
    %v1044 = vadd.f32 %v1024, %v1041
    %v1045 = vld [vmem:[%s282] sm:$0xff]
    %v1046 = vld [vmem:[%s282 + $0x8] sm:$0xff]
    %v1047 = vld [vmem:[%s282 + $0x10] sm:$0xff]
    %1048 = vrot.lane.b32.xlu0 %v470, 91
    %v1049 = vpop.permute.xlu0 %1048
    %1050 = vrot.lane.b32.xlu0 %v474, 91
    %v1051 = vpop.permute.xlu0 %1050
    %1052 = vrot.lane.b32.xlu0 %v478, 91
    %v1053 = vpop.permute.xlu0 %1052
    %v1054 = vsel %vm1013, %v1049, %v1051
    %v1055 = vsel %vm1013, %v1051, %v1053
    %v1059 = vmul.f32 %v1045, %v1054
    %v1060 = vmul.f32 %v1046, %v1055
    %v1061 = vmul.f32 %v1047, %v1053
    %v1062 = vadd.f32 %v1042, %v1059
    %v1063 = vadd.f32 %v1043, %v1060
    %v1064 = vadd.f32 %v1044, %v1061
    %v1065 = vld [vmem:[%s290] sm:$0xff]
    %v1066 = vld [vmem:[%s290 + $0x8] sm:$0xff]
    %v1067 = vld [vmem:[%s290 + $0x10] sm:$0xff]
    %1068 = vrot.lane.b32.xlu0 %v491, 91
    %v1069 = vpop.permute.xlu0 %1068
    %1070 = vrot.lane.b32.xlu0 %v495, 91
    %v1071 = vpop.permute.xlu0 %1070
    %1072 = vrot.lane.b32.xlu0 %v499, 91
    %v1073 = vpop.permute.xlu0 %1072
    %v1074 = vsel %vm1013, %v1069, %v1071
    %v1075 = vsel %vm1013, %v1071, %v1073
    %v1079 = vmul.f32 %v1065, %v1074
    %v1080 = vmul.f32 %v1066, %v1075
    %v1081 = vmul.f32 %v1067, %v1073
    %v1082 = vadd.f32 %v1062, %v1079
    %v1083 = vadd.f32 %v1063, %v1080
    %v1084 = vadd.f32 %v1064, %v1081
    %v1085 = vld [vmem:[%s298] sm:$0xff]
    %v1086 = vld [vmem:[%s298 + $0x8] sm:$0xff]
    %v1087 = vld [vmem:[%s298 + $0x10] sm:$0xff]
    %1088 = vrot.lane.b32.xlu0 %v428, 90
    %v1089 = vpop.permute.xlu0 %1088
    %1090 = vrot.lane.b32.xlu0 %v432, 90
    %v1091 = vpop.permute.xlu0 %1090
    %1092 = vrot.lane.b32.xlu0 %v436, 90
    %v1093 = vpop.permute.xlu0 %1092
    %vm1094 = vcmask 736256
    %v1095 = vsel %vm1094, %v1089, %v1091
    %v1096 = vsel %vm1094, %v1091, %v1093
    %v1100 = vmul.f32 %v1085, %v1095
    %v1101 = vmul.f32 %v1086, %v1096
    %v1102 = vmul.f32 %v1087, %v1093
    %v1103 = vadd.f32 %v1082, %v1100
    %v1104 = vadd.f32 %v1083, %v1101
    %v1105 = vadd.f32 %v1084, %v1102
    %v1106 = vld [vmem:[%s306] sm:$0xff]
    %v1107 = vld [vmem:[%s306 + $0x8] sm:$0xff]
    %v1108 = vld [vmem:[%s306 + $0x10] sm:$0xff]
    %1109 = vrot.lane.b32.xlu0 %v449, 90
    %v1110 = vpop.permute.xlu0 %1109
    %1111 = vrot.lane.b32.xlu0 %v453, 90
    %v1112 = vpop.permute.xlu0 %1111
    %1113 = vrot.lane.b32.xlu0 %v457, 90
    %v1114 = vpop.permute.xlu0 %1113
    %v1115 = vsel %vm1094, %v1110, %v1112
    %v1116 = vsel %vm1094, %v1112, %v1114
    %v1120 = vmul.f32 %v1106, %v1115
    %v1121 = vmul.f32 %v1107, %v1116
    %v1122 = vmul.f32 %v1108, %v1114
    %v1123 = vadd.f32 %v1103, %v1120
    %v1124 = vadd.f32 %v1104, %v1121
    %v1125 = vadd.f32 %v1105, %v1122
    %v1126 = vld [vmem:[%s314] sm:$0xff]
    %v1127 = vld [vmem:[%s314 + $0x8] sm:$0xff]
    %v1128 = vld [vmem:[%s314 + $0x10] sm:$0xff]
    %1129 = vrot.lane.b32.xlu0 %v470, 90
    %v1130 = vpop.permute.xlu0 %1129
    %1131 = vrot.lane.b32.xlu0 %v474, 90
    %v1132 = vpop.permute.xlu0 %1131
    %1133 = vrot.lane.b32.xlu0 %v478, 90
    %v1134 = vpop.permute.xlu0 %1133
    %v1135 = vsel %vm1094, %v1130, %v1132
    %v1136 = vsel %vm1094, %v1132, %v1134
    %v1140 = vmul.f32 %v1126, %v1135
    %v1141 = vmul.f32 %v1127, %v1136
    %v1142 = vmul.f32 %v1128, %v1134
    %v1143 = vadd.f32 %v1123, %v1140
    %v1144 = vadd.f32 %v1124, %v1141
    %v1145 = vadd.f32 %v1125, %v1142
    %v1146 = vld [vmem:[%s322] sm:$0xff]
    %v1147 = vld [vmem:[%s322 + $0x8] sm:$0xff]
    %v1148 = vld [vmem:[%s322 + $0x10] sm:$0xff]
    %1149 = vrot.lane.b32.xlu0 %v491, 90
    %v1150 = vpop.permute.xlu0 %1149
    %1151 = vrot.lane.b32.xlu0 %v495, 90
    %v1152 = vpop.permute.xlu0 %1151
    %1153 = vrot.lane.b32.xlu0 %v499, 90
    %v1154 = vpop.permute.xlu0 %1153
    %v1155 = vsel %vm1094, %v1150, %v1152
    %v1156 = vsel %vm1094, %v1152, %v1154
    %v1160 = vmul.f32 %v1146, %v1155
    %v1161 = vmul.f32 %v1147, %v1156
    %v1162 = vmul.f32 %v1148, %v1154
    %v1163 = vadd.f32 %v1143, %v1160
    %v1164 = vadd.f32 %v1144, %v1161
    %v1165 = vadd.f32 %v1145, %v1162
    %vm1166 = vcmask 130048
    %1167 = vst.msk [vmem:[%s3] sm:$0xff] %vm1166, %v1163
    %1169 = vrot.lane.b32.xlu0 %v1163, 126
    %v1170 = vpop.permute.xlu0 %1169
    %vm1172 = vcmask 261248
    %1173 = vst.msk [vmem:[%s3] sm:$0xff] %vm1172, %v1170
    %1174 = vrot.lane.b32.xlu0 %v1163, 124
    %v1175 = vpop.permute.xlu0 %1174
    %vm1177 = vcmask 392448
    %1178 = vst.msk [vmem:[%s3] sm:$0xff] %vm1177, %v1175
    %1179 = vrot.lane.b32.xlu0 %v1163, 122
    %v1180 = vpop.permute.xlu0 %1179
    %vm1182 = vcmask 523648
    %1183 = vst.msk [vmem:[%s3] sm:$0xff] %vm1182, %v1180
    %1184 = vrot.lane.b32.xlu0 %v1163, 120
    %v1185 = vpop.permute.xlu0 %1184
    %vm1187 = vcmask 654848
    %1188 = vst.msk [vmem:[%s3] sm:$0xff] %vm1187, %v1185
    %1189 = vrot.lane.b32.xlu0 %v1163, 118
    %v1190 = vpop.permute.xlu0 %1189
    %vm1192 = vcmask 786048
    %1193 = vst.msk [vmem:[%s3] sm:$0xff] %vm1192, %v1190
    %1194 = vrot.lane.b32.xlu0 %v1163, 116
    %v1195 = vpop.permute.xlu0 %1194
    %vm1197 = vcmask 917248
    %1198 = vst.msk [vmem:[%s3] sm:$0xff] %vm1197, %v1195
    %1200 = vrot.lane.b32.xlu0 %v1163, 114
    %v1201 = vpop.permute.xlu0 %1200
    %1202 = vrot.lane.b32.xlu0 %v1164, 114
    %v1203 = vpop.permute.xlu0 %1202
    %vm1204 = vcmask 932864
    %v1205 = vsel %vm1204, %v1201, %v1203
    %vm1207 = vcmask 1048448
    %1208 = vst.msk [vmem:[%s3] sm:$0xff] %vm1207, %v1205
    %1209 = vrot.lane.b32.xlu0 %v1164, 112
    %v1210 = vpop.permute.xlu0 %1209
    %1212 = vst.msk [vmem:[%s3 + $0x8] sm:$0xff] %vm1166, %v1210
    %1213 = vrot.lane.b32.xlu0 %v1164, 110
    %v1214 = vpop.permute.xlu0 %1213
    %1216 = vst.msk [vmem:[%s3 + $0x8] sm:$0xff] %vm1172, %v1214
    %1217 = vrot.lane.b32.xlu0 %v1164, 108
    %v1218 = vpop.permute.xlu0 %1217
    %1220 = vst.msk [vmem:[%s3 + $0x8] sm:$0xff] %vm1177, %v1218
    %1221 = vrot.lane.b32.xlu0 %v1164, 106
    %v1222 = vpop.permute.xlu0 %1221
    %1224 = vst.msk [vmem:[%s3 + $0x8] sm:$0xff] %vm1182, %v1222
    %1225 = vrot.lane.b32.xlu0 %v1164, 104
    %v1226 = vpop.permute.xlu0 %1225
    %1228 = vst.msk [vmem:[%s3 + $0x8] sm:$0xff] %vm1187, %v1226
    %1229 = vrot.lane.b32.xlu0 %v1164, 102
    %v1230 = vpop.permute.xlu0 %1229
    %1232 = vst.msk [vmem:[%s3 + $0x8] sm:$0xff] %vm1192, %v1230
    %1234 = vrot.lane.b32.xlu0 %v1164, 100
    %v1235 = vpop.permute.xlu0 %1234
    %1236 = vrot.lane.b32.xlu0 %v1165, 100
    %v1237 = vpop.permute.xlu0 %1236
    %vm1238 = vcmask 818176
    %v1239 = vsel %vm1238, %v1235, %v1237
    %1241 = vst.msk [vmem:[%s3 + $0x8] sm:$0xff] %vm1197, %v1239
    %1242 = vrot.lane.b32.xlu0 %v1165, 98
    %v1243 = vpop.permute.xlu0 %1242
    %1245 = vst.msk [vmem:[%s3 + $0x8] sm:$0xff] %vm1207, %v1243
    %s1246 = scalar_lea.vmem [#allocation4], 8
    %v1247 = vld [vmem:[%s1246] sm:$0xff]
    %1249 = vrot.lane.b32.xlu0 %v1247, 19
    %v1250 = vpop.permute.xlu0 %1249
    %1252 = vst.msk [vmem:[#allocation2] sm:$0xf] %vm337, %v1250
    %1253 = vrot.lane.b32.xlu0 %v1247, 21
    %v1254 = vpop.permute.xlu0 %1253
    %1256 = vst.msk [vmem:[#allocation2] sm:$0xf] %vm342, %v1254
    %1257 = vrot.lane.b32.xlu0 %v1247, 23
    %v1258 = vpop.permute.xlu0 %1257
    %1260 = vst.msk [vmem:[#allocation2] sm:$0xf] %vm347, %v1258
    %1261 = vrot.lane.b32.xlu0 %v1247, 25
    %v1262 = vpop.permute.xlu0 %1261
    %1264 = vst.msk [vmem:[#allocation2] sm:$0xf] %vm352, %v1262
    %1265 = vrot.lane.b32.xlu0 %v1247, 27
    %v1266 = vpop.permute.xlu0 %1265
    %1268 = vst.msk [vmem:[#allocation2] sm:$0xf] %vm357, %v1266
    %1269 = vrot.lane.b32.xlu0 %v1247, 29
    %v1270 = vpop.permute.xlu0 %1269
    %1272 = vst.msk [vmem:[#allocation2] sm:$0xf] %vm362, %v1270
    %1273 = vrot.lane.b32.xlu0 %v1247, 31
    %v1274 = vpop.permute.xlu0 %1273
    %1276 = vst.msk [vmem:[#allocation2] sm:$0xf] %vm367, %v1274
    %1277 = vst.msk [vmem:[#allocation2 + $0x8] sm:$0xf] %vm369, %v1274
    %1278 = vrot.lane.b32.xlu0 %v1247, 33
    %v1279 = vpop.permute.xlu0 %1278
    %1281 = vst.msk [vmem:[#allocation2 + $0x8] sm:$0xf] %vm374, %v1279
    %v1282 = vcombine.high %v1247, %v1247
    %1283 = vrot.lane.b32.xlu0 %v1282, 35
    %v1284 = vpop.permute.xlu0 %1283
    %1286 = vst.msk [vmem:[#allocation2 + $0x8] sm:$0xf] %vm380, %v1284
    %1287 = vrot.lane.b32.xlu0 %v1282, 37
    %v1288 = vpop.permute.xlu0 %1287
    %1290 = vst.msk [vmem:[#allocation2 + $0x8] sm:$0xf] %vm385, %v1288
    %1291 = vrot.lane.b32.xlu0 %v1282, 39
    %v1292 = vpop.permute.xlu0 %1291
    %1294 = vst.msk [vmem:[#allocation2 + $0x8] sm:$0xf] %vm390, %v1292
    %1295 = vrot.lane.b32.xlu0 %v1282, 41
    %v1296 = vpop.permute.xlu0 %1295
    %1298 = vst.msk [vmem:[#allocation2 + $0x8] sm:$0xf] %vm395, %v1296
    %1299 = vrot.lane.b32.xlu0 %v1282, 43
    %v1300 = vpop.permute.xlu0 %1299
    %1302 = vst.msk [vmem:[#allocation2 + $0x8] sm:$0xf] %vm400, %v1300
    %1303 = vrot.lane.b32.xlu0 %v1282, 45
    %v1304 = vpop.permute.xlu0 %1303
    %1306 = vst.msk [vmem:[#allocation2 + $0x8] sm:$0xf] %vm405, %v1304
    %1307 = vst.msk [vmem:[#allocation2 + $0x10] sm:$0xf] %vm407, %v1304
    %1308 = vrot.lane.b32.xlu0 %v1282, 47
    %v1309 = vpop.permute.xlu0 %1308
    %1311 = vst.msk [vmem:[#allocation2 + $0x10] sm:$0xf] %vm412, %v1309
    %1312 = vrot.lane.b32.xlu0 %v1282, 49
    %v1313 = vpop.permute.xlu0 %1312
    %1315 = vst.msk [vmem:[#allocation2 + $0x10] sm:$0xf] %vm417, %v1313
    %v1316 = vld [vmem:[#allocation2] sm:$0xf]
    %v1317 = vld [vmem:[#allocation2 + $0x8] sm:$0xf]
    %v1318 = vld [vmem:[#allocation2 + $0x10] sm:$0xf]
    %v1319 = vld [vmem:[#allocation3] sm:$0xff]
    %v1320 = vld [vmem:[#allocation3 + $0x8] sm:$0xff]
    %v1321 = vld [vmem:[#allocation3 + $0x10] sm:$0xff]
    %v1322 = vlaneseq
    %v1323 = vshrl.u32 %v1322, 7
    %v1324 = vsub.s32 0, %v1323
    %v1325 = vrot.slane %v1316, %v1324
    %v1326 = vlaneseq
    %v1327 = vshrl.u32 %v1326, 7
    %v1328 = vsub.s32 0, %v1327
    %v1329 = vrot.slane %v1317, %v1328
    %v1330 = vlaneseq
    %v1331 = vshrl.u32 %v1330, 7
    %v1332 = vsub.s32 0, %v1331
    %v1333 = vrot.slane %v1318, %v1332
    %v1334 = vmul.f32 %v1319, %v1325
    %v1335 = vmul.f32 %v1320, %v1329
    %v1336 = vmul.f32 %v1321, %v1333
    %v1337 = vadd.f32 %v330, %v1334
    %v1338 = vadd.f32 %v330, %v1335
    %v1339 = vadd.f32 %v330, %v1336
    %v1340 = vld [vmem:[%s50] sm:$0xff]
    %v1341 = vld [vmem:[%s50 + $0x8] sm:$0xff]
    %v1342 = vld [vmem:[%s50 + $0x10] sm:$0xff]
    %v1343 = vlaneseq
    %v1344 = vshrl.u32 %v1343, 7
    %v1345 = vsub.s32 1, %v1344
    %v1346 = vrot.slane %v1316, %v1345
    %v1347 = vlaneseq
    %v1348 = vshrl.u32 %v1347, 7
    %v1349 = vsub.s32 1, %v1348
    %v1350 = vrot.slane %v1317, %v1349
    %v1351 = vlaneseq
    %v1352 = vshrl.u32 %v1351, 7
    %v1353 = vsub.s32 1, %v1352
    %v1354 = vrot.slane %v1318, %v1353
    %v1355 = vmul.f32 %v1340, %v1346
    %v1356 = vmul.f32 %v1341, %v1350
    %v1357 = vmul.f32 %v1342, %v1354
    %v1358 = vadd.f32 %v1337, %v1355
    %v1359 = vadd.f32 %v1338, %v1356
    %v1360 = vadd.f32 %v1339, %v1357
    %v1361 = vld [vmem:[%s58] sm:$0xff]
    %v1362 = vld [vmem:[%s58 + $0x8] sm:$0xff]
    %v1363 = vld [vmem:[%s58 + $0x10] sm:$0xff]
    %v1364 = vlaneseq
    %v1365 = vshrl.u32 %v1364, 7
    %v1366 = vsub.s32 2, %v1365
    %v1367 = vrot.slane %v1316, %v1366
    %v1368 = vlaneseq
    %v1369 = vshrl.u32 %v1368, 7
    %v1370 = vsub.s32 2, %v1369
    %v1371 = vrot.slane %v1317, %v1370
    %v1372 = vlaneseq
    %v1373 = vshrl.u32 %v1372, 7
    %v1374 = vsub.s32 2, %v1373
    %v1375 = vrot.slane %v1318, %v1374
    %v1376 = vmul.f32 %v1361, %v1367
    %v1377 = vmul.f32 %v1362, %v1371
    %v1378 = vmul.f32 %v1363, %v1375
    %v1379 = vadd.f32 %v1358, %v1376
    %v1380 = vadd.f32 %v1359, %v1377
    %v1381 = vadd.f32 %v1360, %v1378
    %v1382 = vld [vmem:[%s66] sm:$0xff]
    %v1383 = vld [vmem:[%s66 + $0x8] sm:$0xff]
    %v1384 = vld [vmem:[%s66 + $0x10] sm:$0xff]
    %v1385 = vlaneseq
    %v1386 = vshrl.u32 %v1385, 7
    %v1387 = vsub.s32 3, %v1386
    %v1388 = vrot.slane %v1316, %v1387
    %v1389 = vlaneseq
    %v1390 = vshrl.u32 %v1389, 7
    %v1391 = vsub.s32 3, %v1390
    %v1392 = vrot.slane %v1317, %v1391
    %v1393 = vlaneseq
    %v1394 = vshrl.u32 %v1393, 7
    %v1395 = vsub.s32 3, %v1394
    %v1396 = vrot.slane %v1318, %v1395
    %v1397 = vmul.f32 %v1382, %v1388
    %v1398 = vmul.f32 %v1383, %v1392
    %v1399 = vmul.f32 %v1384, %v1396
    %v1400 = vadd.f32 %v1379, %v1397
    %v1401 = vadd.f32 %v1380, %v1398
    %v1402 = vadd.f32 %v1381, %v1399
    %v1403 = vld [vmem:[%s74] sm:$0xff]
    %v1404 = vld [vmem:[%s74 + $0x8] sm:$0xff]
    %v1405 = vld [vmem:[%s74 + $0x10] sm:$0xff]
    %1409 = vrot.lane.b32.xlu0 %v1325, 127
    %v1410 = vpop.permute.xlu0 %1409
    %1411 = vrot.lane.b32.xlu0 %v1329, 127
    %v1412 = vpop.permute.xlu0 %1411
    %1413 = vrot.lane.b32.xlu0 %v1333, 127
    %v1414 = vpop.permute.xlu0 %1413
    %v1415 = vsel %vm518, %v1410, %v1412
    %v1416 = vsel %vm518, %v1412, %v1414
    %v1420 = vmul.f32 %v1403, %v1415
    %v1421 = vmul.f32 %v1404, %v1416
    %v1422 = vmul.f32 %v1405, %v1414
    %v1423 = vadd.f32 %v1400, %v1420
    %v1424 = vadd.f32 %v1401, %v1421
    %v1425 = vadd.f32 %v1402, %v1422
    %v1426 = vld [vmem:[%s82] sm:$0xff]
    %v1427 = vld [vmem:[%s82 + $0x8] sm:$0xff]
    %v1428 = vld [vmem:[%s82 + $0x10] sm:$0xff]
    %1432 = vrot.lane.b32.xlu0 %v1346, 127
    %v1433 = vpop.permute.xlu0 %1432
    %1434 = vrot.lane.b32.xlu0 %v1350, 127
    %v1435 = vpop.permute.xlu0 %1434
    %1436 = vrot.lane.b32.xlu0 %v1354, 127
    %v1437 = vpop.permute.xlu0 %1436
    %v1438 = vsel %vm518, %v1433, %v1435
    %v1439 = vsel %vm518, %v1435, %v1437
    %v1443 = vmul.f32 %v1426, %v1438
    %v1444 = vmul.f32 %v1427, %v1439
    %v1445 = vmul.f32 %v1428, %v1437
    %v1446 = vadd.f32 %v1423, %v1443
    %v1447 = vadd.f32 %v1424, %v1444
    %v1448 = vadd.f32 %v1425, %v1445
    %v1449 = vld [vmem:[%s90] sm:$0xff]
    %v1450 = vld [vmem:[%s90 + $0x8] sm:$0xff]
    %v1451 = vld [vmem:[%s90 + $0x10] sm:$0xff]
    %1455 = vrot.lane.b32.xlu0 %v1367, 127
    %v1456 = vpop.permute.xlu0 %1455
    %1457 = vrot.lane.b32.xlu0 %v1371, 127
    %v1458 = vpop.permute.xlu0 %1457
    %1459 = vrot.lane.b32.xlu0 %v1375, 127
    %v1460 = vpop.permute.xlu0 %1459
    %v1461 = vsel %vm518, %v1456, %v1458
    %v1462 = vsel %vm518, %v1458, %v1460
    %v1466 = vmul.f32 %v1449, %v1461
    %v1467 = vmul.f32 %v1450, %v1462
    %v1468 = vmul.f32 %v1451, %v1460
    %v1469 = vadd.f32 %v1446, %v1466
    %v1470 = vadd.f32 %v1447, %v1467
    %v1471 = vadd.f32 %v1448, %v1468
    %v1472 = vld [vmem:[%s98] sm:$0xff]
    %v1473 = vld [vmem:[%s98 + $0x8] sm:$0xff]
    %v1474 = vld [vmem:[%s98 + $0x10] sm:$0xff]
    %1478 = vrot.lane.b32.xlu0 %v1388, 127
    %v1479 = vpop.permute.xlu0 %1478
    %1480 = vrot.lane.b32.xlu0 %v1392, 127
    %v1481 = vpop.permute.xlu0 %1480
    %1482 = vrot.lane.b32.xlu0 %v1396, 127
    %v1483 = vpop.permute.xlu0 %1482
    %v1484 = vsel %vm518, %v1479, %v1481
    %v1485 = vsel %vm518, %v1481, %v1483
    %v1489 = vmul.f32 %v1472, %v1484
    %v1490 = vmul.f32 %v1473, %v1485
    %v1491 = vmul.f32 %v1474, %v1483
    %v1492 = vadd.f32 %v1469, %v1489
    %v1493 = vadd.f32 %v1470, %v1490
    %v1494 = vadd.f32 %v1471, %v1491
    %v1495 = vld [vmem:[%s106] sm:$0xff]
    %v1496 = vld [vmem:[%s106 + $0x8] sm:$0xff]
    %v1497 = vld [vmem:[%s106 + $0x10] sm:$0xff]
    %1498 = vrot.lane.b32.xlu0 %v1325, 126
    %v1499 = vpop.permute.xlu0 %1498
    %1500 = vrot.lane.b32.xlu0 %v1329, 126
    %v1501 = vpop.permute.xlu0 %1500
    %1502 = vrot.lane.b32.xlu0 %v1333, 126
    %v1503 = vpop.permute.xlu0 %1502
    %v1504 = vsel %vm608, %v1499, %v1501
    %v1505 = vsel %vm608, %v1501, %v1503
    %v1509 = vmul.f32 %v1495, %v1504
    %v1510 = vmul.f32 %v1496, %v1505
    %v1511 = vmul.f32 %v1497, %v1503
    %v1512 = vadd.f32 %v1492, %v1509
    %v1513 = vadd.f32 %v1493, %v1510
    %v1514 = vadd.f32 %v1494, %v1511
    %v1515 = vld [vmem:[%s114] sm:$0xff]
    %v1516 = vld [vmem:[%s114 + $0x8] sm:$0xff]
    %v1517 = vld [vmem:[%s114 + $0x10] sm:$0xff]
    %1518 = vrot.lane.b32.xlu0 %v1346, 126
    %v1519 = vpop.permute.xlu0 %1518
    %1520 = vrot.lane.b32.xlu0 %v1350, 126
    %v1521 = vpop.permute.xlu0 %1520
    %1522 = vrot.lane.b32.xlu0 %v1354, 126
    %v1523 = vpop.permute.xlu0 %1522
    %v1524 = vsel %vm608, %v1519, %v1521
    %v1525 = vsel %vm608, %v1521, %v1523
    %v1529 = vmul.f32 %v1515, %v1524
    %v1530 = vmul.f32 %v1516, %v1525
    %v1531 = vmul.f32 %v1517, %v1523
    %v1532 = vadd.f32 %v1512, %v1529
    %v1533 = vadd.f32 %v1513, %v1530
    %v1534 = vadd.f32 %v1514, %v1531
    %v1535 = vld [vmem:[%s122] sm:$0xff]
    %v1536 = vld [vmem:[%s122 + $0x8] sm:$0xff]
    %v1537 = vld [vmem:[%s122 + $0x10] sm:$0xff]
    %1538 = vrot.lane.b32.xlu0 %v1367, 126
    %v1539 = vpop.permute.xlu0 %1538
    %1540 = vrot.lane.b32.xlu0 %v1371, 126
    %v1541 = vpop.permute.xlu0 %1540
    %1542 = vrot.lane.b32.xlu0 %v1375, 126
    %v1543 = vpop.permute.xlu0 %1542
    %v1544 = vsel %vm608, %v1539, %v1541
    %v1545 = vsel %vm608, %v1541, %v1543
    %v1549 = vmul.f32 %v1535, %v1544
    %v1550 = vmul.f32 %v1536, %v1545
    %v1551 = vmul.f32 %v1537, %v1543
    %v1552 = vadd.f32 %v1532, %v1549
    %v1553 = vadd.f32 %v1533, %v1550
    %v1554 = vadd.f32 %v1534, %v1551
    %v1555 = vld [vmem:[%s130] sm:$0xff]
    %v1556 = vld [vmem:[%s130 + $0x8] sm:$0xff]
    %v1557 = vld [vmem:[%s130 + $0x10] sm:$0xff]
    %1558 = vrot.lane.b32.xlu0 %v1388, 126
    %v1559 = vpop.permute.xlu0 %1558
    %1560 = vrot.lane.b32.xlu0 %v1392, 126
    %v1561 = vpop.permute.xlu0 %1560
    %1562 = vrot.lane.b32.xlu0 %v1396, 126
    %v1563 = vpop.permute.xlu0 %1562
    %v1564 = vsel %vm608, %v1559, %v1561
    %v1565 = vsel %vm608, %v1561, %v1563
    %v1569 = vmul.f32 %v1555, %v1564
    %v1570 = vmul.f32 %v1556, %v1565
    %v1571 = vmul.f32 %v1557, %v1563
    %v1572 = vadd.f32 %v1552, %v1569
    %v1573 = vadd.f32 %v1553, %v1570
    %v1574 = vadd.f32 %v1554, %v1571
    %v1575 = vld [vmem:[%s138] sm:$0xff]
    %v1576 = vld [vmem:[%s138 + $0x8] sm:$0xff]
    %v1577 = vld [vmem:[%s138 + $0x10] sm:$0xff]
    %1578 = vrot.lane.b32.xlu0 %v1325, 110
    %v1579 = vpop.permute.xlu0 %1578
    %1580 = vrot.lane.b32.xlu0 %v1329, 110
    %v1581 = vpop.permute.xlu0 %1580
    %1582 = vrot.lane.b32.xlu0 %v1333, 110
    %v1583 = vpop.permute.xlu0 %1582
    %v1584 = vsel %vm689, %v1579, %v1581
    %v1585 = vsel %vm689, %v1581, %v1583
    %v1589 = vmul.f32 %v1575, %v1584
    %v1590 = vmul.f32 %v1576, %v1585
    %v1591 = vmul.f32 %v1577, %v1583
    %v1592 = vadd.f32 %v1572, %v1589
    %v1593 = vadd.f32 %v1573, %v1590
    %v1594 = vadd.f32 %v1574, %v1591
    %v1595 = vld [vmem:[%s146] sm:$0xff]
    %v1596 = vld [vmem:[%s146 + $0x8] sm:$0xff]
    %v1597 = vld [vmem:[%s146 + $0x10] sm:$0xff]
    %1598 = vrot.lane.b32.xlu0 %v1346, 110
    %v1599 = vpop.permute.xlu0 %1598
    %1600 = vrot.lane.b32.xlu0 %v1350, 110
    %v1601 = vpop.permute.xlu0 %1600
    %1602 = vrot.lane.b32.xlu0 %v1354, 110
    %v1603 = vpop.permute.xlu0 %1602
    %v1604 = vsel %vm689, %v1599, %v1601
    %v1605 = vsel %vm689, %v1601, %v1603
    %v1609 = vmul.f32 %v1595, %v1604
    %v1610 = vmul.f32 %v1596, %v1605
    %v1611 = vmul.f32 %v1597, %v1603
    %v1612 = vadd.f32 %v1592, %v1609
    %v1613 = vadd.f32 %v1593, %v1610
    %v1614 = vadd.f32 %v1594, %v1611
    %v1615 = vld [vmem:[%s154] sm:$0xff]
    %v1616 = vld [vmem:[%s154 + $0x8] sm:$0xff]
    %v1617 = vld [vmem:[%s154 + $0x10] sm:$0xff]
    %1618 = vrot.lane.b32.xlu0 %v1367, 110
    %v1619 = vpop.permute.xlu0 %1618
    %1620 = vrot.lane.b32.xlu0 %v1371, 110
    %v1621 = vpop.permute.xlu0 %1620
    %1622 = vrot.lane.b32.xlu0 %v1375, 110
    %v1623 = vpop.permute.xlu0 %1622
    %v1624 = vsel %vm689, %v1619, %v1621
    %v1625 = vsel %vm689, %v1621, %v1623
    %v1629 = vmul.f32 %v1615, %v1624
    %v1630 = vmul.f32 %v1616, %v1625
    %v1631 = vmul.f32 %v1617, %v1623
    %v1632 = vadd.f32 %v1612, %v1629
    %v1633 = vadd.f32 %v1613, %v1630
    %v1634 = vadd.f32 %v1614, %v1631
    %v1635 = vld [vmem:[%s162] sm:$0xff]
    %v1636 = vld [vmem:[%s162 + $0x8] sm:$0xff]
    %v1637 = vld [vmem:[%s162 + $0x10] sm:$0xff]
    %1638 = vrot.lane.b32.xlu0 %v1388, 110
    %v1639 = vpop.permute.xlu0 %1638
    %1640 = vrot.lane.b32.xlu0 %v1392, 110
    %v1641 = vpop.permute.xlu0 %1640
    %1642 = vrot.lane.b32.xlu0 %v1396, 110
    %v1643 = vpop.permute.xlu0 %1642
    %v1644 = vsel %vm689, %v1639, %v1641
    %v1645 = vsel %vm689, %v1641, %v1643
    %v1649 = vmul.f32 %v1635, %v1644
    %v1650 = vmul.f32 %v1636, %v1645
    %v1651 = vmul.f32 %v1637, %v1643
    %v1652 = vadd.f32 %v1632, %v1649
    %v1653 = vadd.f32 %v1633, %v1650
    %v1654 = vadd.f32 %v1634, %v1651
    %v1655 = vld [vmem:[%s170] sm:$0xff]
    %v1656 = vld [vmem:[%s170 + $0x8] sm:$0xff]
    %v1657 = vld [vmem:[%s170 + $0x10] sm:$0xff]
    %1658 = vrot.lane.b32.xlu0 %v1325, 109
    %v1659 = vpop.permute.xlu0 %1658
    %1660 = vrot.lane.b32.xlu0 %v1329, 109
    %v1661 = vpop.permute.xlu0 %1660
    %1662 = vrot.lane.b32.xlu0 %v1333, 109
    %v1663 = vpop.permute.xlu0 %1662
    %v1664 = vsel %vm770, %v1659, %v1661
    %v1665 = vsel %vm770, %v1661, %v1663
    %v1669 = vmul.f32 %v1655, %v1664
    %v1670 = vmul.f32 %v1656, %v1665
    %v1671 = vmul.f32 %v1657, %v1663
    %v1672 = vadd.f32 %v1652, %v1669
    %v1673 = vadd.f32 %v1653, %v1670
    %v1674 = vadd.f32 %v1654, %v1671
    %v1675 = vld [vmem:[%s178] sm:$0xff]
    %v1676 = vld [vmem:[%s178 + $0x8] sm:$0xff]
    %v1677 = vld [vmem:[%s178 + $0x10] sm:$0xff]
    %1678 = vrot.lane.b32.xlu0 %v1346, 109
    %v1679 = vpop.permute.xlu0 %1678
    %1680 = vrot.lane.b32.xlu0 %v1350, 109
    %v1681 = vpop.permute.xlu0 %1680
    %1682 = vrot.lane.b32.xlu0 %v1354, 109
    %v1683 = vpop.permute.xlu0 %1682
    %v1684 = vsel %vm770, %v1679, %v1681
    %v1685 = vsel %vm770, %v1681, %v1683
    %v1689 = vmul.f32 %v1675, %v1684
    %v1690 = vmul.f32 %v1676, %v1685
    %v1691 = vmul.f32 %v1677, %v1683
    %v1692 = vadd.f32 %v1672, %v1689
    %v1693 = vadd.f32 %v1673, %v1690
    %v1694 = vadd.f32 %v1674, %v1691
    %v1695 = vld [vmem:[%s186] sm:$0xff]
    %v1696 = vld [vmem:[%s186 + $0x8] sm:$0xff]
    %v1697 = vld [vmem:[%s186 + $0x10] sm:$0xff]
    %1698 = vrot.lane.b32.xlu0 %v1367, 109
    %v1699 = vpop.permute.xlu0 %1698
    %1700 = vrot.lane.b32.xlu0 %v1371, 109
    %v1701 = vpop.permute.xlu0 %1700
    %1702 = vrot.lane.b32.xlu0 %v1375, 109
    %v1703 = vpop.permute.xlu0 %1702
    %v1704 = vsel %vm770, %v1699, %v1701
    %v1705 = vsel %vm770, %v1701, %v1703
    %v1709 = vmul.f32 %v1695, %v1704
    %v1710 = vmul.f32 %v1696, %v1705
    %v1711 = vmul.f32 %v1697, %v1703
    %v1712 = vadd.f32 %v1692, %v1709
    %v1713 = vadd.f32 %v1693, %v1710
    %v1714 = vadd.f32 %v1694, %v1711
    %v1715 = vld [vmem:[%s194] sm:$0xff]
    %v1716 = vld [vmem:[%s194 + $0x8] sm:$0xff]
    %v1717 = vld [vmem:[%s194 + $0x10] sm:$0xff]
    %1718 = vrot.lane.b32.xlu0 %v1388, 109
    %v1719 = vpop.permute.xlu0 %1718
    %1720 = vrot.lane.b32.xlu0 %v1392, 109
    %v1721 = vpop.permute.xlu0 %1720
    %1722 = vrot.lane.b32.xlu0 %v1396, 109
    %v1723 = vpop.permute.xlu0 %1722
    %v1724 = vsel %vm770, %v1719, %v1721
    %v1725 = vsel %vm770, %v1721, %v1723
    %v1729 = vmul.f32 %v1715, %v1724
    %v1730 = vmul.f32 %v1716, %v1725
    %v1731 = vmul.f32 %v1717, %v1723
    %v1732 = vadd.f32 %v1712, %v1729
    %v1733 = vadd.f32 %v1713, %v1730
    %v1734 = vadd.f32 %v1714, %v1731
    %v1735 = vld [vmem:[%s202] sm:$0xff]
    %v1736 = vld [vmem:[%s202 + $0x8] sm:$0xff]
    %v1737 = vld [vmem:[%s202 + $0x10] sm:$0xff]
    %1738 = vrot.lane.b32.xlu0 %v1325, 108
    %v1739 = vpop.permute.xlu0 %1738
    %1740 = vrot.lane.b32.xlu0 %v1329, 108
    %v1741 = vpop.permute.xlu0 %1740
    %1742 = vrot.lane.b32.xlu0 %v1333, 108
    %v1743 = vpop.permute.xlu0 %1742
    %v1744 = vsel %vm851, %v1739, %v1741
    %v1745 = vsel %vm851, %v1741, %v1743
    %v1749 = vmul.f32 %v1735, %v1744
    %v1750 = vmul.f32 %v1736, %v1745
    %v1751 = vmul.f32 %v1737, %v1743
    %v1752 = vadd.f32 %v1732, %v1749
    %v1753 = vadd.f32 %v1733, %v1750
    %v1754 = vadd.f32 %v1734, %v1751
    %v1755 = vld [vmem:[%s210] sm:$0xff]
    %v1756 = vld [vmem:[%s210 + $0x8] sm:$0xff]
    %v1757 = vld [vmem:[%s210 + $0x10] sm:$0xff]
    %1758 = vrot.lane.b32.xlu0 %v1346, 108
    %v1759 = vpop.permute.xlu0 %1758
    %1760 = vrot.lane.b32.xlu0 %v1350, 108
    %v1761 = vpop.permute.xlu0 %1760
    %1762 = vrot.lane.b32.xlu0 %v1354, 108
    %v1763 = vpop.permute.xlu0 %1762
    %v1764 = vsel %vm851, %v1759, %v1761
    %v1765 = vsel %vm851, %v1761, %v1763
    %v1769 = vmul.f32 %v1755, %v1764
    %v1770 = vmul.f32 %v1756, %v1765
    %v1771 = vmul.f32 %v1757, %v1763
    %v1772 = vadd.f32 %v1752, %v1769
    %v1773 = vadd.f32 %v1753, %v1770
    %v1774 = vadd.f32 %v1754, %v1771
    %v1775 = vld [vmem:[%s218] sm:$0xff]
    %v1776 = vld [vmem:[%s218 + $0x8] sm:$0xff]
    %v1777 = vld [vmem:[%s218 + $0x10] sm:$0xff]
    %1778 = vrot.lane.b32.xlu0 %v1367, 108
    %v1779 = vpop.permute.xlu0 %1778
    %1780 = vrot.lane.b32.xlu0 %v1371, 108
    %v1781 = vpop.permute.xlu0 %1780
    %1782 = vrot.lane.b32.xlu0 %v1375, 108
    %v1783 = vpop.permute.xlu0 %1782
    %v1784 = vsel %vm851, %v1779, %v1781
    %v1785 = vsel %vm851, %v1781, %v1783
    %v1789 = vmul.f32 %v1775, %v1784
    %v1790 = vmul.f32 %v1776, %v1785
    %v1791 = vmul.f32 %v1777, %v1783
    %v1792 = vadd.f32 %v1772, %v1789
    %v1793 = vadd.f32 %v1773, %v1790
    %v1794 = vadd.f32 %v1774, %v1791
    %v1795 = vld [vmem:[%s226] sm:$0xff]
    %v1796 = vld [vmem:[%s226 + $0x8] sm:$0xff]
    %v1797 = vld [vmem:[%s226 + $0x10] sm:$0xff]
    %1798 = vrot.lane.b32.xlu0 %v1388, 108
    %v1799 = vpop.permute.xlu0 %1798
    %1800 = vrot.lane.b32.xlu0 %v1392, 108
    %v1801 = vpop.permute.xlu0 %1800
    %1802 = vrot.lane.b32.xlu0 %v1396, 108
    %v1803 = vpop.permute.xlu0 %1802
    %v1804 = vsel %vm851, %v1799, %v1801
    %v1805 = vsel %vm851, %v1801, %v1803
    %v1809 = vmul.f32 %v1795, %v1804
    %v1810 = vmul.f32 %v1796, %v1805
    %v1811 = vmul.f32 %v1797, %v1803
    %v1812 = vadd.f32 %v1792, %v1809
    %v1813 = vadd.f32 %v1793, %v1810
    %v1814 = vadd.f32 %v1794, %v1811
    %v1815 = vld [vmem:[%s234] sm:$0xff]
    %v1816 = vld [vmem:[%s234 + $0x8] sm:$0xff]
    %v1817 = vld [vmem:[%s234 + $0x10] sm:$0xff]
    %1818 = vrot.lane.b32.xlu0 %v1325, 92
    %v1819 = vpop.permute.xlu0 %1818
    %1820 = vrot.lane.b32.xlu0 %v1329, 92
    %v1821 = vpop.permute.xlu0 %1820
    %1822 = vrot.lane.b32.xlu0 %v1333, 92
    %v1823 = vpop.permute.xlu0 %1822
    %v1824 = vsel %vm932, %v1819, %v1821
    %v1825 = vsel %vm932, %v1821, %v1823
    %v1829 = vmul.f32 %v1815, %v1824
    %v1830 = vmul.f32 %v1816, %v1825
    %v1831 = vmul.f32 %v1817, %v1823
    %v1832 = vadd.f32 %v1812, %v1829
    %v1833 = vadd.f32 %v1813, %v1830
    %v1834 = vadd.f32 %v1814, %v1831
    %v1835 = vld [vmem:[%s242] sm:$0xff]
    %v1836 = vld [vmem:[%s242 + $0x8] sm:$0xff]
    %v1837 = vld [vmem:[%s242 + $0x10] sm:$0xff]
    %1838 = vrot.lane.b32.xlu0 %v1346, 92
    %v1839 = vpop.permute.xlu0 %1838
    %1840 = vrot.lane.b32.xlu0 %v1350, 92
    %v1841 = vpop.permute.xlu0 %1840
    %1842 = vrot.lane.b32.xlu0 %v1354, 92
    %v1843 = vpop.permute.xlu0 %1842
    %v1844 = vsel %vm932, %v1839, %v1841
    %v1845 = vsel %vm932, %v1841, %v1843
    %v1849 = vmul.f32 %v1835, %v1844
    %v1850 = vmul.f32 %v1836, %v1845
    %v1851 = vmul.f32 %v1837, %v1843
    %v1852 = vadd.f32 %v1832, %v1849
    %v1853 = vadd.f32 %v1833, %v1850
    %v1854 = vadd.f32 %v1834, %v1851
    %v1855 = vld [vmem:[%s250] sm:$0xff]
    %v1856 = vld [vmem:[%s250 + $0x8] sm:$0xff]
    %v1857 = vld [vmem:[%s250 + $0x10] sm:$0xff]
    %1858 = vrot.lane.b32.xlu0 %v1367, 92
    %v1859 = vpop.permute.xlu0 %1858
    %1860 = vrot.lane.b32.xlu0 %v1371, 92
    %v1861 = vpop.permute.xlu0 %1860
    %1862 = vrot.lane.b32.xlu0 %v1375, 92
    %v1863 = vpop.permute.xlu0 %1862
    %v1864 = vsel %vm932, %v1859, %v1861
    %v1865 = vsel %vm932, %v1861, %v1863
    %v1869 = vmul.f32 %v1855, %v1864
    %v1870 = vmul.f32 %v1856, %v1865
    %v1871 = vmul.f32 %v1857, %v1863
    %v1872 = vadd.f32 %v1852, %v1869
    %v1873 = vadd.f32 %v1853, %v1870
    %v1874 = vadd.f32 %v1854, %v1871
    %v1875 = vld [vmem:[%s258] sm:$0xff]
    %v1876 = vld [vmem:[%s258 + $0x8] sm:$0xff]
    %v1877 = vld [vmem:[%s258 + $0x10] sm:$0xff]
    %1878 = vrot.lane.b32.xlu0 %v1388, 92
    %v1879 = vpop.permute.xlu0 %1878
    %1880 = vrot.lane.b32.xlu0 %v1392, 92
    %v1881 = vpop.permute.xlu0 %1880
    %1882 = vrot.lane.b32.xlu0 %v1396, 92
    %v1883 = vpop.permute.xlu0 %1882
    %v1884 = vsel %vm932, %v1879, %v1881
    %v1885 = vsel %vm932, %v1881, %v1883
    %v1889 = vmul.f32 %v1875, %v1884
    %v1890 = vmul.f32 %v1876, %v1885
    %v1891 = vmul.f32 %v1877, %v1883
    %v1892 = vadd.f32 %v1872, %v1889
    %v1893 = vadd.f32 %v1873, %v1890
    %v1894 = vadd.f32 %v1874, %v1891
    %v1895 = vld [vmem:[%s266] sm:$0xff]
    %v1896 = vld [vmem:[%s266 + $0x8] sm:$0xff]
    %v1897 = vld [vmem:[%s266 + $0x10] sm:$0xff]
    %1898 = vrot.lane.b32.xlu0 %v1325, 91
    %v1899 = vpop.permute.xlu0 %1898
    %1900 = vrot.lane.b32.xlu0 %v1329, 91
    %v1901 = vpop.permute.xlu0 %1900
    %1902 = vrot.lane.b32.xlu0 %v1333, 91
    %v1903 = vpop.permute.xlu0 %1902
    %v1904 = vsel %vm1013, %v1899, %v1901
    %v1905 = vsel %vm1013, %v1901, %v1903
    %v1909 = vmul.f32 %v1895, %v1904
    %v1910 = vmul.f32 %v1896, %v1905
    %v1911 = vmul.f32 %v1897, %v1903
    %v1912 = vadd.f32 %v1892, %v1909
    %v1913 = vadd.f32 %v1893, %v1910
    %v1914 = vadd.f32 %v1894, %v1911
    %v1915 = vld [vmem:[%s274] sm:$0xff]
    %v1916 = vld [vmem:[%s274 + $0x8] sm:$0xff]
    %v1917 = vld [vmem:[%s274 + $0x10] sm:$0xff]
    %1918 = vrot.lane.b32.xlu0 %v1346, 91
    %v1919 = vpop.permute.xlu0 %1918
    %1920 = vrot.lane.b32.xlu0 %v1350, 91
    %v1921 = vpop.permute.xlu0 %1920
    %1922 = vrot.lane.b32.xlu0 %v1354, 91
    %v1923 = vpop.permute.xlu0 %1922
    %v1924 = vsel %vm1013, %v1919, %v1921
    %v1925 = vsel %vm1013, %v1921, %v1923
    %v1929 = vmul.f32 %v1915, %v1924
    %v1930 = vmul.f32 %v1916, %v1925
    %v1931 = vmul.f32 %v1917, %v1923
    %v1932 = vadd.f32 %v1912, %v1929
    %v1933 = vadd.f32 %v1913, %v1930
    %v1934 = vadd.f32 %v1914, %v1931
    %v1935 = vld [vmem:[%s282] sm:$0xff]
    %v1936 = vld [vmem:[%s282 + $0x8] sm:$0xff]
    %v1937 = vld [vmem:[%s282 + $0x10] sm:$0xff]
    %1938 = vrot.lane.b32.xlu0 %v1367, 91
    %v1939 = vpop.permute.xlu0 %1938
    %1940 = vrot.lane.b32.xlu0 %v1371, 91
    %v1941 = vpop.permute.xlu0 %1940
    %1942 = vrot.lane.b32.xlu0 %v1375, 91
    %v1943 = vpop.permute.xlu0 %1942
    %v1944 = vsel %vm1013, %v1939, %v1941
    %v1945 = vsel %vm1013, %v1941, %v1943
    %v1949 = vmul.f32 %v1935, %v1944
    %v1950 = vmul.f32 %v1936, %v1945
    %v1951 = vmul.f32 %v1937, %v1943
    %v1952 = vadd.f32 %v1932, %v1949
    %v1953 = vadd.f32 %v1933, %v1950
    %v1954 = vadd.f32 %v1934, %v1951
    %v1955 = vld [vmem:[%s290] sm:$0xff]
    %v1956 = vld [vmem:[%s290 + $0x8] sm:$0xff]
    %v1957 = vld [vmem:[%s290 + $0x10] sm:$0xff]
    %1958 = vrot.lane.b32.xlu0 %v1388, 91
    %v1959 = vpop.permute.xlu0 %1958
    %1960 = vrot.lane.b32.xlu0 %v1392, 91
    %v1961 = vpop.permute.xlu0 %1960
    %1962 = vrot.lane.b32.xlu0 %v1396, 91
    %v1963 = vpop.permute.xlu0 %1962
    %v1964 = vsel %vm1013, %v1959, %v1961
    %v1965 = vsel %vm1013, %v1961, %v1963
    %v1969 = vmul.f32 %v1955, %v1964
    %v1970 = vmul.f32 %v1956, %v1965
    %v1971 = vmul.f32 %v1957, %v1963
    %v1972 = vadd.f32 %v1952, %v1969
    %v1973 = vadd.f32 %v1953, %v1970
    %v1974 = vadd.f32 %v1954, %v1971
    %v1975 = vld [vmem:[%s298] sm:$0xff]
    %v1976 = vld [vmem:[%s298 + $0x8] sm:$0xff]
    %v1977 = vld [vmem:[%s298 + $0x10] sm:$0xff]
    %1978 = vrot.lane.b32.xlu0 %v1325, 90
    %v1979 = vpop.permute.xlu0 %1978
    %1980 = vrot.lane.b32.xlu0 %v1329, 90
    %v1981 = vpop.permute.xlu0 %1980
    %1982 = vrot.lane.b32.xlu0 %v1333, 90
    %v1983 = vpop.permute.xlu0 %1982
    %v1984 = vsel %vm1094, %v1979, %v1981
    %v1985 = vsel %vm1094, %v1981, %v1983
    %v1989 = vmul.f32 %v1975, %v1984
    %v1990 = vmul.f32 %v1976, %v1985
    %v1991 = vmul.f32 %v1977, %v1983
    %v1992 = vadd.f32 %v1972, %v1989
    %v1993 = vadd.f32 %v1973, %v1990
    %v1994 = vadd.f32 %v1974, %v1991
    %v1995 = vld [vmem:[%s306] sm:$0xff]
    %v1996 = vld [vmem:[%s306 + $0x8] sm:$0xff]
    %v1997 = vld [vmem:[%s306 + $0x10] sm:$0xff]
    %1998 = vrot.lane.b32.xlu0 %v1346, 90
    %v1999 = vpop.permute.xlu0 %1998
    %2000 = vrot.lane.b32.xlu0 %v1350, 90
    %v2001 = vpop.permute.xlu0 %2000
    %2002 = vrot.lane.b32.xlu0 %v1354, 90
    %v2003 = vpop.permute.xlu0 %2002
    %v2004 = vsel %vm1094, %v1999, %v2001
    %v2005 = vsel %vm1094, %v2001, %v2003
    %v2009 = vmul.f32 %v1995, %v2004
    %v2010 = vmul.f32 %v1996, %v2005
    %v2011 = vmul.f32 %v1997, %v2003
    %v2012 = vadd.f32 %v1992, %v2009
    %v2013 = vadd.f32 %v1993, %v2010
    %v2014 = vadd.f32 %v1994, %v2011
    %v2015 = vld [vmem:[%s314] sm:$0xff]
    %v2016 = vld [vmem:[%s314 + $0x8] sm:$0xff]
    %v2017 = vld [vmem:[%s314 + $0x10] sm:$0xff]
    %2018 = vrot.lane.b32.xlu0 %v1367, 90
    %v2019 = vpop.permute.xlu0 %2018
    %2020 = vrot.lane.b32.xlu0 %v1371, 90
    %v2021 = vpop.permute.xlu0 %2020
    %2022 = vrot.lane.b32.xlu0 %v1375, 90
    %v2023 = vpop.permute.xlu0 %2022
    %v2024 = vsel %vm1094, %v2019, %v2021
    %v2025 = vsel %vm1094, %v2021, %v2023
    %v2029 = vmul.f32 %v2015, %v2024
    %v2030 = vmul.f32 %v2016, %v2025
    %v2031 = vmul.f32 %v2017, %v2023
    %v2032 = vadd.f32 %v2012, %v2029
    %v2033 = vadd.f32 %v2013, %v2030
    %v2034 = vadd.f32 %v2014, %v2031
    %v2035 = vld [vmem:[%s322] sm:$0xff]
    %v2036 = vld [vmem:[%s322 + $0x8] sm:$0xff]
    %v2037 = vld [vmem:[%s322 + $0x10] sm:$0xff]
    %2038 = vrot.lane.b32.xlu0 %v1388, 90
    %v2039 = vpop.permute.xlu0 %2038
    %2040 = vrot.lane.b32.xlu0 %v1392, 90
    %v2041 = vpop.permute.xlu0 %2040
    %2042 = vrot.lane.b32.xlu0 %v1396, 90
    %v2043 = vpop.permute.xlu0 %2042
    %v2044 = vsel %vm1094, %v2039, %v2041
    %v2045 = vsel %vm1094, %v2041, %v2043
    %v2049 = vmul.f32 %v2035, %v2044
    %v2050 = vmul.f32 %v2036, %v2045
    %v2051 = vmul.f32 %v2037, %v2043
    %v2052 = vadd.f32 %v2032, %v2049
    %v2053 = vadd.f32 %v2033, %v2050
    %v2054 = vadd.f32 %v2034, %v2051
    %s2055 = scalar_lea.vmem %s3, 16
    %2056 = vst.msk [vmem:[%s2055] sm:$0xff] %vm1166, %v2052
    %2058 = vrot.lane.b32.xlu0 %v2052, 126
    %v2059 = vpop.permute.xlu0 %2058
    %2061 = vst.msk [vmem:[%s2055] sm:$0xff] %vm1172, %v2059
    %2062 = vrot.lane.b32.xlu0 %v2052, 124
    %v2063 = vpop.permute.xlu0 %2062
    %2065 = vst.msk [vmem:[%s2055] sm:$0xff] %vm1177, %v2063
    %2066 = vrot.lane.b32.xlu0 %v2052, 122
    %v2067 = vpop.permute.xlu0 %2066
    %2069 = vst.msk [vmem:[%s2055] sm:$0xff] %vm1182, %v2067
    %2070 = vrot.lane.b32.xlu0 %v2052, 120
    %v2071 = vpop.permute.xlu0 %2070
    %2073 = vst.msk [vmem:[%s2055] sm:$0xff] %vm1187, %v2071
    %2074 = vrot.lane.b32.xlu0 %v2052, 118
    %v2075 = vpop.permute.xlu0 %2074
    %2077 = vst.msk [vmem:[%s2055] sm:$0xff] %vm1192, %v2075
    %2078 = vrot.lane.b32.xlu0 %v2052, 116
    %v2079 = vpop.permute.xlu0 %2078
    %2081 = vst.msk [vmem:[%s2055] sm:$0xff] %vm1197, %v2079
    %2083 = vrot.lane.b32.xlu0 %v2052, 114
    %v2084 = vpop.permute.xlu0 %2083
    %2085 = vrot.lane.b32.xlu0 %v2053, 114
    %v2086 = vpop.permute.xlu0 %2085
    %v2087 = vsel %vm1204, %v2084, %v2086
    %2089 = vst.msk [vmem:[%s2055] sm:$0xff] %vm1207, %v2087
    %2090 = vrot.lane.b32.xlu0 %v2053, 112
    %v2091 = vpop.permute.xlu0 %2090
    %2093 = vst.msk [vmem:[%s2055 + $0x8] sm:$0xff] %vm1166, %v2091
    %2094 = vrot.lane.b32.xlu0 %v2053, 110
    %v2095 = vpop.permute.xlu0 %2094
    %2097 = vst.msk [vmem:[%s2055 + $0x8] sm:$0xff] %vm1172, %v2095
    %2098 = vrot.lane.b32.xlu0 %v2053, 108
    %v2099 = vpop.permute.xlu0 %2098
    %2101 = vst.msk [vmem:[%s2055 + $0x8] sm:$0xff] %vm1177, %v2099
    %2102 = vrot.lane.b32.xlu0 %v2053, 106
    %v2103 = vpop.permute.xlu0 %2102
    %2105 = vst.msk [vmem:[%s2055 + $0x8] sm:$0xff] %vm1182, %v2103
    %2106 = vrot.lane.b32.xlu0 %v2053, 104
    %v2107 = vpop.permute.xlu0 %2106
    %2109 = vst.msk [vmem:[%s2055 + $0x8] sm:$0xff] %vm1187, %v2107
    %2110 = vrot.lane.b32.xlu0 %v2053, 102
    %v2111 = vpop.permute.xlu0 %2110
    %2113 = vst.msk [vmem:[%s2055 + $0x8] sm:$0xff] %vm1192, %v2111
    %2115 = vrot.lane.b32.xlu0 %v2053, 100
    %v2116 = vpop.permute.xlu0 %2115
    %2117 = vrot.lane.b32.xlu0 %v2054, 100
    %v2118 = vpop.permute.xlu0 %2117
    %v2119 = vsel %vm1238, %v2116, %v2118
    %2121 = vst.msk [vmem:[%s2055 + $0x8] sm:$0xff] %vm1197, %v2119
    %2122 = vrot.lane.b32.xlu0 %v2054, 98
    %v2123 = vpop.permute.xlu0 %2122
    %2125 = vst.msk [vmem:[%s2055 + $0x8] sm:$0xff] %vm1207, %v2123
    // Predicated region
    $region18: #{_zero_conv2d_pallas.1} parent=1 // pred_check
      _
    $region19: #{_zero_conv2d_pallas.1} parent=1 // pred_check_branch
      %2127 = sbr.rel (0) target = $region21
    $region20: #{_zero_conv2d_pallas.1} parent=1 // pred_region
      _
    $region21: #{_zero_conv2d_pallas.1} parent=1 // pred_fallthru
      _
    // Predicated region
    $region22: #{_zero_conv2d_pallas.1} parent=1 // pred_check
      _
    $region23: #{_zero_conv2d_pallas.1} parent=1 // pred_check_branch
      %2129 = sbr.rel (0) target = $region25
    $region24: #{_zero_conv2d_pallas.1} parent=1 // pred_region
      _
    $region25: #{_zero_conv2d_pallas.1} parent=1 // pred_fallthru
      _
    %2130 = vsyncpa [#allocation5], 1

</llo_original>
